<compile_context>
chip_gen: v5e
topology: v5e:2x2
jax: 0.10.0
libtpu: 0.0.40
codegen_flags: <defaults>
</compile_context>

<pallas_src>
import functools

import jax
import jax.numpy as jnp
from jax.experimental import pallas as pl
from jax.experimental.pallas import tpu as pltpu


def _round_up(x, m):
    return ((x + m - 1) // m) * m


# ---------------------------------------------------------------------------
# Fused kernel: Linear -> ReLU -> Linear -> Tanh -> sinc FIR (epilogue)
# ---------------------------------------------------------------------------

def _fused_mlp_sinc_kernel(x_ref, w1_ref, b1_ref, w2t_ref, b2_ref, taps_ref,
                           o_ref, *, valid_rows, pad):
    """One grid axis over batch tiles; output slab is VMEM-resident across it.

    x_ref   : (tile_b, feat)            VMEM, pipelined per grid step
    w1_ref  : (feat, hidden)            VMEM, resident (constant index_map)
    b1_ref  : (1, hidden)               VMEM, resident
    w2t_ref : (out_size, hidden)        VMEM, resident (2nd-layer weights, row-major)
    b2_ref  : (out_size,)               SMEM scalars
    taps_ref: (2M+1,)                   SMEM scalars
    o_ref   : (out_size, pad+b_pad+pad) VMEM, resident channel-major slab w/ halos
    """
    i = pl.program_id(0)
    tile_b = x_ref.shape[0]
    out_size, width = o_ref.shape
    b_pad = width - 2 * pad
    n_taps = taps_ref.shape[0]
    m = (n_taps - 1) // 2

    # --- init: zero the resident slab once (halos + not-yet-written columns) ----
    @pl.when(i == 0)
    def _init():
        o_ref[...] = jnp.zeros_like(o_ref)

    # --- Linear -> ReLU (MXU matmul, f32 accumulation; ReLU on the VPU) ---------
    h = jnp.dot(x_ref[...], w1_ref[...], preferred_element_type=jnp.float32)
    h = jnp.maximum(h + b1_ref[...], 0.0)                       # (tile_b, hidden)

    # --- Linear(hidden -> out) + Tanh, stored lane-dense & channel-major --------
    # out_size is tiny, so the second layer is a VPU multiply + lane reduction per
    # channel instead of a <1%-utilization MXU matmul; each row store is a full
    # (1, tile_b) lane-dense aligned store into the resident slab.
    col0 = pl.multiple_of(pad + i * tile_b, 128)
    for c in range(out_size):                                   # static unroll
        yc = jnp.sum(h * w2t_ref[pl.ds(c, 1), :], axis=-1) + b2_ref[c]   # (tile_b,)
        o_ref[pl.ds(c, 1), pl.ds(col0, tile_b)] = (
            jnp.tanh(yc)[None, :].astype(o_ref.dtype))

    # --- FIR epilogue: runs once, after every tile has been written -------------
    @pl.when(i == pl.num_programs(0) - 1)
    def _fir():
        # Zero the padded garbage tail (rows >= valid_rows hold tanh(b2) != 0);
        # the left halo / right halo are already zero from the init step.
        t = jax.lax.broadcasted_iota(jnp.int32, (out_size, width), 1)
        sig = jnp.where(t < pad + valid_rows, o_ref[...], 0.0)
        # Zero-padded 'same' convolution: out[t] = sum_k taps[k] * sig[t + k - M].
        acc = taps_ref[0] * sig[:, pad - m:pad - m + b_pad]
        for k in range(1, n_taps):                               # static unroll
            acc = acc + taps_ref[k] * sig[:, pad - m + k:pad - m + k + b_pad]
        o_ref[:, pad:pad + b_pad] = acc.astype(o_ref.dtype)     # aligned unmasked store


def lin_lin_tanh_sinc_channel_major(x, w1, b1, w2, b2, taps, *, tile_b=None):
    """sinc_fir(tanh(relu(x @ w1 + b1) @ w2 + b2)), returned channel-major (out, B)."""
    B, feat = x.shape
    hidden = w1.shape[1]
    out_size = w2.shape[1]
    n_taps = int(taps.shape[0])
    m = (n_taps - 1) // 2

    if tile_b is None:
        # Collapse the grid to a single step whenever the batch fits one tile.
        tile_b = min(2048, _round_up(B, 128))
    nb = pl.cdiv(B, tile_b)
    b_pad = nb * tile_b
    if b_pad != B:
        x = jnp.pad(x, ((0, b_pad - B), (0, 0)))

    pad = _round_up(max(m, 1), 128)              # zero halo on each side (>= M, aligned)
    width = b_pad + 2 * pad

    kernel = functools.partial(_fused_mlp_sinc_kernel, valid_rows=B, pad=pad)

    cost = pl.CostEstimate(
        flops=int(2 * b_pad * (feat * hidden + hidden * out_size)
                  + 2 * out_size * b_pad * n_taps),
        transcendentals=int(b_pad * out_size),
        bytes_accessed=int(4 * (b_pad * feat + feat * hidden + hidden
                                + hidden * out_size + out_size + n_taps
                                + width * out_size)),
    )

    y_cm = pl.pallas_call(
        kernel,
        out_shape=jax.ShapeDtypeStruct((out_size, width), jnp.float32),
        grid=(nb,),
        in_specs=[
            pl.BlockSpec((tile_b, feat), lambda i: (i, 0)),        # x tile (pipelined)
            pl.BlockSpec((feat, hidden), lambda i: (0, 0)),        # w1 resident
            pl.BlockSpec((1, hidden), lambda i: (0, 0)),           # b1 resident
            pl.BlockSpec((out_size, hidden), lambda i: (0, 0)),    # w2^T resident
            pl.BlockSpec(memory_space=pltpu.MemorySpace.SMEM),     # b2 scalars
            pl.BlockSpec(memory_space=pltpu.MemorySpace.SMEM),     # FIR taps
        ],
        # Resident, channel-major, lane-dense output slab (constant index_map).
        out_specs=pl.BlockSpec((out_size, width), lambda i: (0, 0)),
        compiler_params=pltpu.CompilerParams(
            dimension_semantics=("arbitrary",)),                   # resident accumulator
        cost_estimate=cost,
    )(x, w1, b1, w2.T, b2.reshape(out_size), taps)

    return y_cm[:, pad:pad + B]


# ---------------------------------------------------------------------------
# Sinc low-pass taps (Hamming-windowed, unity DC gain)
# ---------------------------------------------------------------------------

def make_sinc_lowpass_taps(fc, fs, M):
    n = jnp.arange(-M, M + 1, dtype=jnp.float32)
    h = (2.0 * fc / fs) * jnp.sinc(2.0 * fc / fs * n)
    w = 0.54 + 0.46 * jnp.cos(jnp.pi * n / M)
    taps = h * w
    s = jnp.sum(taps)
    # Guard: skip unity-DC normalization if the gain is numerically tiny.
    return jnp.where(jnp.abs(s) > 1e-6, taps / s, taps)


# ---------------------------------------------------------------------------
# Full forward: myLinLinTanhSinc
# ---------------------------------------------------------------------------

@functools.partial(jax.jit, static_argnames=("fs", "M", "tile_b"))
def my_lin_lin_tanh_sinc(x, w1, b1, w2, b2, fc, *, fs=100, M=10, tile_b=None):
    """x: [B, featSize] -> [B, outputSize]. B is the time axis the sinc filter smooths."""
    taps = make_sinc_lowpass_taps(fc, fs, M)
    y_cm = lin_lin_tanh_sinc_channel_major(x, w1, b1, w2, b2, taps, tile_b=tile_b)
    return y_cm.T                                                  # (B, outputSize)


def init_params(key, feat_size, hidden_size, output_size):
    """Deterministic init mimicking nn.Linear's uniform(-1/sqrt(fan_in), 1/sqrt(fan_in))."""
    k1, k2, k3, k4 = jax.random.split(key, 4)
    lim1 = 1.0 / jnp.sqrt(feat_size)
    lim2 = 1.0 / jnp.sqrt(hidden_size)
    w1 = jax.random.uniform(k1, (feat_size, hidden_size), jnp.float32, -lim1, lim1)
    b1 = jax.random.uniform(k2, (1, hidden_size), jnp.float32, -lim1, lim1)
    w2 = jax.random.uniform(k3, (hidden_size, output_size), jnp.float32, -lim2, lim2)
    b2 = jax.random.uniform(k4, (output_size,), jnp.float32, -lim2, lim2)
    return w1, b1, w2, b2


if __name__ == "__main__":
    feat_size, hidden_size, output_size = 32, 128, 1
    fs, M = 100, 10
    batch = 1000          # time steps; deliberately not a multiple of 128

    key = jax.random.PRNGKey(0)
    k_x, k_p = jax.random.split(key)
    x = jax.random.normal(k_x, (batch, feat_size), jnp.float32)
    w1, b1, w2, b2 = init_params(k_p, feat_size, hidden_size, output_size)
    fc = jnp.float32(2.0)  # sinc low-pass cutoff (Hz); learnable in the PyTorch module

    out = my_lin_lin_tanh_sinc(x, w1, b1, w2, b2, fc, fs=fs, M=M)
    out = jax.block_until_ready(out)
    assert out.shape == (batch, output_size)

    # Pure-JAX reference of the same forward pass.
    y_ref = jnp.tanh(jnp.maximum(x @ w1 + b1, 0.0) @ w2 + b2)          # (B, out)
    taps = make_sinc_lowpass_taps(fc, fs, M)
    y_pad = jnp.pad(y_ref.T, ((0, 0), (M, M)))                         # (out, B+2M)
    ref_cm = sum(taps[k] * y_pad[:, k:k + batch] for k in range(2 * M + 1))
    ref = ref_cm.T
    err = float(jnp.max(jnp.abs(out - ref)))
    assert jnp.allclose(out, ref, atol=2e-5, rtol=2e-5), err

    print("KERNEL_OK")
</pallas_src>

<mosaic_0001>
module attributes {stable_mosaic.version = 11 : i64} {
  func.func @_fused_mlp_sinc_kernel(%arg0: i32, %arg1: memref<1024x32xf32, #tpu.memory_space<vmem>>, %arg2: memref<32x128xf32, #tpu.memory_space<vmem>>, %arg3: memref<1x128xf32, #tpu.memory_space<vmem>>, %arg4: memref<1x128xf32, #tpu.memory_space<vmem>>, %arg5: memref<1xf32, #tpu.memory_space<smem>>, %arg6: memref<21xf32, #tpu.memory_space<smem>>, %arg7: memref<1x1280xf32, #tpu.memory_space<vmem>>) attributes {dimension_semantics = [#tpu.dimension_semantics<arbitrary>], iteration_bounds = array<i64: 1>, scalar_prefetch = 0 : i64, scratch_operands = 0 : i64, tpu.core_type = #tpu.core_type<tc>, window_params = [{transform_indices = @transform_0, window_bounds = array<i64: 1024, 32>}, {pipeline_mode = #tpu.pipeline_mode<synchronous>, transform_indices = @transform_1, window_bounds = array<i64: 32, 128>}, {pipeline_mode = #tpu.pipeline_mode<synchronous>, transform_indices = @transform_2, window_bounds = array<i64: 1, 128>}, {pipeline_mode = #tpu.pipeline_mode<synchronous>, transform_indices = @transform_3, window_bounds = array<i64: 1, 128>}, {transform_indices = @transform_4, window_bounds = array<i64: 1>}, {transform_indices = @transform_5, window_bounds = array<i64: 21>}, {pipeline_mode = #tpu.pipeline_mode<synchronous>, transform_indices = @transform_6, window_bounds = array<i64: 1, 1280>}]} {
    %c0_i32 = arith.constant 0 : i32
    %0 = arith.cmpi eq, %arg0, %c0_i32 : i32
    %1 = arith.extui %0 : i1 to i32
    %c0_i32_0 = arith.constant 0 : i32
    %2 = arith.cmpi ne, %1, %c0_i32_0 : i32
    scf.if %2 {
      %cst_14 = arith.constant 0.000000e+00 : f32
      %28 = vector.broadcast %cst_14 : f32 to vector<1x1280xf32>
      %c0_15 = arith.constant 0 : index
      %c0_16 = arith.constant 0 : index
      %29 = vector.load %arg7[%c0_15, %c0_16] : memref<1x1280xf32, #tpu.memory_space<vmem>>, vector<1x1280xf32>
      tpu.vector_store %arg7[%c0_15, %c0_16], %28 {strides = array<i32>} : memref<1x1280xf32, #tpu.memory_space<vmem>>, vector<1x1280xf32>,
    } else {
    }
    %c0 = arith.constant 0 : index
    %c0_1 = arith.constant 0 : index
    %3 = vector.load %arg1[%c0, %c0_1] : memref<1024x32xf32, #tpu.memory_space<vmem>>, vector<1024x32xf32>
    %c0_2 = arith.constant 0 : index
    %c0_3 = arith.constant 0 : index
    %4 = vector.load %arg2[%c0_2, %c0_3] : memref<32x128xf32, #tpu.memory_space<vmem>>, vector<32x128xf32>
    %cst = arith.constant dense<0.000000e+00> : vector<1024x128xf32>
    %5 = tpu.matmul %3, %4, %cst {dimension_numbers = #tpu.dot_dimension_numbers<[1], [0], [0], [1], [0, 0, 1, 1], [], []>} : vector<1024x32xf32>, vector<32x128xf32>, vector<1024x128xf32> -> vector<1024x128xf32>
    %c0_4 = arith.constant 0 : index
    %c0_5 = arith.constant 0 : index
    %6 = vector.load %arg3[%c0_4, %c0_5] : memref<1x128xf32, #tpu.memory_space<vmem>>, vector<1x128xf32>
    %7 = vector.broadcast %6 : vector<1x128xf32> to vector<1024x128xf32>
    %8 = arith.addf %5, %7 : vector<1024x128xf32>
    %cst_6 = arith.constant 0.000000e+00 : f32
    %9 = vector.broadcast %cst_6 : f32 to vector<1024x128xf32>
    %10 = arith.maximumf %8, %9 : vector<1024x128xf32>
    %c1024_i32 = arith.constant 1024 : i32
    %11 = arith.muli %arg0, %c1024_i32 : i32
    %c128_i32 = arith.constant 128 : i32
    %12 = arith.addi %c128_i32, %11 : i32
    %13 = tpu.assume_multiple %12, 128 : i32
    %c0_7 = arith.constant 0 : index
    %c0_8 = arith.constant 0 : index
    %14 = vector.load %arg4[%c0_7, %c0_8] : memref<1x128xf32, #tpu.memory_space<vmem>>, vector<1x128xf32>
    %15 = vector.broadcast %14 : vector<1x128xf32> to vector<1024x128xf32>
    %16 = arith.mulf %10, %15 : vector<1024x128xf32>
    %cst_9 = arith.constant dense<0.000000e+00> : vector<1024xf32>
    %17 = vector.multi_reduction <add>, %16, %cst_9 [1] : vector<1024x128xf32> to vector<1024xf32>
    %c0_10 = arith.constant 0 : index
    %18 = memref.load %arg5[%c0_10] : memref<1xf32, #tpu.memory_space<smem>>
    %19 = vector.broadcast %18 : f32 to vector<1024xf32>
    %20 = arith.addf %17, %19 : vector<1024xf32>
    %21 = math.tanh %20 : vector<1024xf32>
    %22 = vector.shape_cast %21 : vector<1024xf32> to vector<1x1024xf32>
    %c0_11 = arith.constant 0 : index
    %23 = arith.index_cast %13 : i32 to index
    %24 = vector.load %arg7[%c0_11, %23] : memref<1x1280xf32, #tpu.memory_space<vmem>>, vector<1x1024xf32>
    tpu.vector_store %arg7[%c0_11, %23], %22 {strides = array<i32>} : memref<1x1280xf32, #tpu.memory_space<vmem>>, vector<1x1024xf32>,
    %c0_i32_12 = arith.constant 0 : i32
    %25 = arith.cmpi eq, %arg0, %c0_i32_12 : i32
    %26 = arith.extui %25 : i1 to i32
    %c0_i32_13 = arith.constant 0 : i32
    %27 = arith.cmpi ne, %26, %c0_i32_13 : i32
    scf.if %27 {
      %28 = tpu.iota {dimensions = array<i32: 1>} : vector<1x1280xi32>
      %c1128_i32 = arith.constant 1128 : i32
      %29 = vector.broadcast %c1128_i32 : i32 to vector<1x1280xi32>
      %30 = arith.cmpi slt, %28, %29 : vector<1x1280xi32>
      %c0_14 = arith.constant 0 : index
      %c0_15 = arith.constant 0 : index
      %31 = vector.load %arg7[%c0_14, %c0_15] : memref<1x1280xf32, #tpu.memory_space<vmem>>, vector<1x1280xf32>
      %cst_16 = arith.constant 0.000000e+00 : f32
      %32 = vector.broadcast %cst_16 : f32 to vector<1x1280xf32>
      %33 = arith.select %30, %31, %32 : vector<1x1280xi1>, vector<1x1280xf32>
      %c0_17 = arith.constant 0 : index
      %34 = memref.load %arg6[%c0_17] : memref<21xf32, #tpu.memory_space<smem>>
      %35 = vector.extract_strided_slice %33 {offsets = [0, 118], sizes = [1, 1024], strides = [1, 1]} : vector<1x1280xf32> to vector<1x1024xf32>
      %36 = vector.broadcast %34 : f32 to vector<1x1024xf32>
      %37 = arith.mulf %36, %35 : vector<1x1024xf32>
      %c1 = arith.constant 1 : index
      %38 = memref.load %arg6[%c1] : memref<21xf32, #tpu.memory_space<smem>>
      %39 = vector.extract_strided_slice %33 {offsets = [0, 119], sizes = [1, 1024], strides = [1, 1]} : vector<1x1280xf32> to vector<1x1024xf32>
      %40 = vector.broadcast %38 : f32 to vector<1x1024xf32>
      %41 = arith.mulf %40, %39 : vector<1x1024xf32>
      %42 = arith.addf %37, %41 : vector<1x1024xf32>
      %c2 = arith.constant 2 : index
      %43 = memref.load %arg6[%c2] : memref<21xf32, #tpu.memory_space<smem>>
      %44 = vector.extract_strided_slice %33 {offsets = [0, 120], sizes = [1, 1024], strides = [1, 1]} : vector<1x1280xf32> to vector<1x1024xf32>
      %45 = vector.broadcast %43 : f32 to vector<1x1024xf32>
      %46 = arith.mulf %45, %44 : vector<1x1024xf32>
      %47 = arith.addf %42, %46 : vector<1x1024xf32>
      %c3 = arith.constant 3 : index
      %48 = memref.load %arg6[%c3] : memref<21xf32, #tpu.memory_space<smem>>
      %49 = vector.extract_strided_slice %33 {offsets = [0, 121], sizes = [1, 1024], strides = [1, 1]} : vector<1x1280xf32> to vector<1x1024xf32>
      %50 = vector.broadcast %48 : f32 to vector<1x1024xf32>
      %51 = arith.mulf %50, %49 : vector<1x1024xf32>
      %52 = arith.addf %47, %51 : vector<1x1024xf32>
      %c4 = arith.constant 4 : index
      %53 = memref.load %arg6[%c4] : memref<21xf32, #tpu.memory_space<smem>>
      %54 = vector.extract_strided_slice %33 {offsets = [0, 122], sizes = [1, 1024], strides = [1, 1]} : vector<1x1280xf32> to vector<1x1024xf32>
      %55 = vector.broadcast %53 : f32 to vector<1x1024xf32>
      %56 = arith.mulf %55, %54 : vector<1x1024xf32>
      %57 = arith.addf %52, %56 : vector<1x1024xf32>
      %c5 = arith.constant 5 : index
      %58 = memref.load %arg6[%c5] : memref<21xf32, #tpu.memory_space<smem>>
      %59 = vector.extract_strided_slice %33 {offsets = [0, 123], sizes = [1, 1024], strides = [1, 1]} : vector<1x1280xf32> to vector<1x1024xf32>
      %60 = vector.broadcast %58 : f32 to vector<1x1024xf32>
      %61 = arith.mulf %60, %59 : vector<1x1024xf32>
      %62 = arith.addf %57, %61 : vector<1x1024xf32>
      %c6 = arith.constant 6 : index
      %63 = memref.load %arg6[%c6] : memref<21xf32, #tpu.memory_space<smem>>
      %64 = vector.extract_strided_slice %33 {offsets = [0, 124], sizes = [1, 1024], strides = [1, 1]} : vector<1x1280xf32> to vector<1x1024xf32>
      %65 = vector.broadcast %63 : f32 to vector<1x1024xf32>
      %66 = arith.mulf %65, %64 : vector<1x1024xf32>
      %67 = arith.addf %62, %66 : vector<1x1024xf32>
      %c7 = arith.constant 7 : index
      %68 = memref.load %arg6[%c7] : memref<21xf32, #tpu.memory_space<smem>>
      %69 = vector.extract_strided_slice %33 {offsets = [0, 125], sizes = [1, 1024], strides = [1, 1]} : vector<1x1280xf32> to vector<1x1024xf32>
      %70 = vector.broadcast %68 : f32 to vector<1x1024xf32>
      %71 = arith.mulf %70, %69 : vector<1x1024xf32>
      %72 = arith.addf %67, %71 : vector<1x1024xf32>
      %c8 = arith.constant 8 : index
      %73 = memref.load %arg6[%c8] : memref<21xf32, #tpu.memory_space<smem>>
      %74 = vector.extract_strided_slice %33 {offsets = [0, 126], sizes = [1, 1024], strides = [1, 1]} : vector<1x1280xf32> to vector<1x1024xf32>
      %75 = vector.broadcast %73 : f32 to vector<1x1024xf32>
      %76 = arith.mulf %75, %74 : vector<1x1024xf32>
      %77 = arith.addf %72, %76 : vector<1x1024xf32>
      %c9 = arith.constant 9 : index
      %78 = memref.load %arg6[%c9] : memref<21xf32, #tpu.memory_space<smem>>
      %79 = vector.extract_strided_slice %33 {offsets = [0, 127], sizes = [1, 1024], strides = [1, 1]} : vector<1x1280xf32> to vector<1x1024xf32>
      %80 = vector.broadcast %78 : f32 to vector<1x1024xf32>
      %81 = arith.mulf %80, %79 : vector<1x1024xf32>
      %82 = arith.addf %77, %81 : vector<1x1024xf32>
      %c10 = arith.constant 10 : index
      %83 = memref.load %arg6[%c10] : memref<21xf32, #tpu.memory_space<smem>>
      %84 = vector.extract_strided_slice %33 {offsets = [0, 128], sizes = [1, 1024], strides = [1, 1]} : vector<1x1280xf32> to vector<1x1024xf32>
      %85 = vector.broadcast %83 : f32 to vector<1x1024xf32>
      %86 = arith.mulf %85, %84 : vector<1x1024xf32>
      %87 = arith.addf %82, %86 : vector<1x1024xf32>
      %c11 = arith.constant 11 : index
      %88 = memref.load %arg6[%c11] : memref<21xf32, #tpu.memory_space<smem>>
      %89 = vector.extract_strided_slice %33 {offsets = [0, 129], sizes = [1, 1024], strides = [1, 1]} : vector<1x1280xf32> to vector<1x1024xf32>
      %90 = vector.broadcast %88 : f32 to vector<1x1024xf32>
      %91 = arith.mulf %90, %89 : vector<1x1024xf32>
      %92 = arith.addf %87, %91 : vector<1x1024xf32>
      %c12 = arith.constant 12 : index
      %93 = memref.load %arg6[%c12] : memref<21xf32, #tpu.memory_space<smem>>
      %94 = vector.extract_strided_slice %33 {offsets = [0, 130], sizes = [1, 1024], strides = [1, 1]} : vector<1x1280xf32> to vector<1x1024xf32>
      %95 = vector.broadcast %93 : f32 to vector<1x1024xf32>
      %96 = arith.mulf %95, %94 : vector<1x1024xf32>
      %97 = arith.addf %92, %96 : vector<1x1024xf32>
      %c13 = arith.constant 13 : index
      %98 = memref.load %arg6[%c13] : memref<21xf32, #tpu.memory_space<smem>>
      %99 = vector.extract_strided_slice %33 {offsets = [0, 131], sizes = [1, 1024], strides = [1, 1]} : vector<1x1280xf32> to vector<1x1024xf32>
      %100 = vector.broadcast %98 : f32 to vector<1x1024xf32>
      %101 = arith.mulf %100, %99 : vector<1x1024xf32>
      %102 = arith.addf %97, %101 : vector<1x1024xf32>
      %c14 = arith.constant 14 : index
      %103 = memref.load %arg6[%c14] : memref<21xf32, #tpu.memory_space<smem>>
      %104 = vector.extract_strided_slice %33 {offsets = [0, 132], sizes = [1, 1024], strides = [1, 1]} : vector<1x1280xf32> to vector<1x1024xf32>
      %105 = vector.broadcast %103 : f32 to vector<1x1024xf32>
      %106 = arith.mulf %105, %104 : vector<1x1024xf32>
      %107 = arith.addf %102, %106 : vector<1x1024xf32>
      %c15 = arith.constant 15 : index
      %108 = memref.load %arg6[%c15] : memref<21xf32, #tpu.memory_space<smem>>
      %109 = vector.extract_strided_slice %33 {offsets = [0, 133], sizes = [1, 1024], strides = [1, 1]} : vector<1x1280xf32> to vector<1x1024xf32>
      %110 = vector.broadcast %108 : f32 to vector<1x1024xf32>
      %111 = arith.mulf %110, %109 : vector<1x1024xf32>
      %112 = arith.addf %107, %111 : vector<1x1024xf32>
      %c16 = arith.constant 16 : index
      %113 = memref.load %arg6[%c16] : memref<21xf32, #tpu.memory_space<smem>>
      %114 = vector.extract_strided_slice %33 {offsets = [0, 134], sizes = [1, 1024], strides = [1, 1]} : vector<1x1280xf32> to vector<1x1024xf32>
      %115 = vector.broadcast %113 : f32 to vector<1x1024xf32>
      %116 = arith.mulf %115, %114 : vector<1x1024xf32>
      %117 = arith.addf %112, %116 : vector<1x1024xf32>
      %c17 = arith.constant 17 : index
      %118 = memref.load %arg6[%c17] : memref<21xf32, #tpu.memory_space<smem>>
      %119 = vector.extract_strided_slice %33 {offsets = [0, 135], sizes = [1, 1024], strides = [1, 1]} : vector<1x1280xf32> to vector<1x1024xf32>
      %120 = vector.broadcast %118 : f32 to vector<1x1024xf32>
      %121 = arith.mulf %120, %119 : vector<1x1024xf32>
      %122 = arith.addf %117, %121 : vector<1x1024xf32>
      %c18 = arith.constant 18 : index
      %123 = memref.load %arg6[%c18] : memref<21xf32, #tpu.memory_space<smem>>
      %124 = vector.extract_strided_slice %33 {offsets = [0, 136], sizes = [1, 1024], strides = [1, 1]} : vector<1x1280xf32> to vector<1x1024xf32>
      %125 = vector.broadcast %123 : f32 to vector<1x1024xf32>
      %126 = arith.mulf %125, %124 : vector<1x1024xf32>
      %127 = arith.addf %122, %126 : vector<1x1024xf32>
      %c19 = arith.constant 19 : index
      %128 = memref.load %arg6[%c19] : memref<21xf32, #tpu.memory_space<smem>>
      %129 = vector.extract_strided_slice %33 {offsets = [0, 137], sizes = [1, 1024], strides = [1, 1]} : vector<1x1280xf32> to vector<1x1024xf32>
      %130 = vector.broadcast %128 : f32 to vector<1x1024xf32>
      %131 = arith.mulf %130, %129 : vector<1x1024xf32>
      %132 = arith.addf %127, %131 : vector<1x1024xf32>
      %c20 = arith.constant 20 : index
      %133 = memref.load %arg6[%c20] : memref<21xf32, #tpu.memory_space<smem>>
      %134 = vector.extract_strided_slice %33 {offsets = [0, 138], sizes = [1, 1024], strides = [1, 1]} : vector<1x1280xf32> to vector<1x1024xf32>
      %135 = vector.broadcast %133 : f32 to vector<1x1024xf32>
      %136 = arith.mulf %135, %134 : vector<1x1024xf32>
      %137 = arith.addf %132, %136 : vector<1x1024xf32>
      %c0_18 = arith.constant 0 : index
      %c128 = arith.constant 128 : index
      %138 = vector.load %arg7[%c0_18, %c128] : memref<1x1280xf32, #tpu.memory_space<vmem>>, vector<1x1024xf32>
      tpu.vector_store %arg7[%c0_18, %c128], %137 {strides = array<i32>} : memref<1x1280xf32, #tpu.memory_space<vmem>>, vector<1x1024xf32>,
    } else {
    }
    return
  }
  func.func @transform_0(%arg0: i32) -> (i32, i32) {
    %c0_i32 = arith.constant 0 : i32
    %c0_i32_0 = arith.constant 0 : i32
    return %arg0, %c0_i32 : i32, i32
  }
  func.func @transform_1(%arg0: i32) -> (i32, i32) {
    %c0_i32 = arith.constant 0 : i32
    %c0_i32_0 = arith.constant 0 : i32
    %c0_i32_1 = arith.constant 0 : i32
    return %c0_i32, %c0_i32_0 : i32, i32
  }
  func.func @transform_2(%arg0: i32) -> (i32, i32) {
    %c0_i32 = arith.constant 0 : i32
    %c0_i32_0 = arith.constant 0 : i32
    %c0_i32_1 = arith.constant 0 : i32
    return %c0_i32, %c0_i32_0 : i32, i32
  }
  func.func @transform_3(%arg0: i32) -> (i32, i32) {
    %c0_i32 = arith.constant 0 : i32
    %c0_i32_0 = arith.constant 0 : i32
    %c0_i32_1 = arith.constant 0 : i32
    return %c0_i32, %c0_i32_0 : i32, i32
  }
  func.func @transform_4(%arg0: i32) -> i32 {
    %c0_i32 = arith.constant 0 : i32
    %c0_i32_0 = arith.constant 0 : i32
    return %c0_i32 : i32
  }
  func.func @transform_5(%arg0: i32) -> i32 {
    %c0_i32 = arith.constant 0 : i32
    %c0_i32_0 = arith.constant 0 : i32
    return %c0_i32 : i32
  }
  func.func @transform_6(%arg0: i32) -> (i32, i32) {
    %c0_i32 = arith.constant 0 : i32
    %c0_i32_0 = arith.constant 0 : i32
    %c0_i32_1 = arith.constant 0 : i32
    return %c0_i32, %c0_i32_0 : i32, i32
  }
}

</mosaic_0001>

<llo_original>
// kernel: my_lin_lin_tanh_sinc.1
$region0: #{my_lin_lin_tanh_sinc.1}
  #allocation0 [shape = 'u32[]', space=smem, size = 0x4, offset = 0x4, fixed_abs, tag = 'smem constant byte address 0x4 - core index']
  #allocation1 [shape = 'u32[72,128]{1,0:T(1,128)}', space=vmem, size = 0x9000, scoped, tag = 'internal scratch']
  #allocation2 [shape = 'f32[1]{0:T(128)S(6)}', space=smem, size = 0x200, scoped, tag = 'scoped memory for my_lin_lin_tanh_sinc.1']
  %s0 = inlined_call_operand.vmem [shape: f32[1024,32], index: 0, kind: input, shape index: {}]
  %s1 = inlined_call_operand.vmem [shape: f32[32,128], index: 1, kind: input, shape index: {}]
  %s2 = inlined_call_operand.vmem [shape: f32[1,128], index: 2, kind: input, shape index: {}]
  %s3 = inlined_call_operand.vmem [shape: f32[1,128], index: 3, kind: input, shape index: {}]
  %s4 = inlined_call_operand.<no memory space> [shape: f32[1], index: 4, kind: input, shape index: {}]
  %s5 = inlined_call_operand.vmem [shape: f32[21], index: 5, kind: input, shape index: {}]
  %s6 = inlined_call_operand.vmem [shape: f32[1,1280], index: 6, kind: output, shape index: {}]
  %s7 = sld [smem:[#allocation0]]
  $region46: #{my_lin_lin_tanh_sinc.1} parent=0
    _
  %s9 = ssub.s32 1, %s7
  %s10 = scalar_select 0, %s9, %s7
  %11 = sst [smem:[#allocation2]] %s4
  $region1: #{my_lin_lin_tanh_sinc.1} parent=0
    #allocation3 [shape = 'u8[512]{0}', space=smem, size = 0x200, scoped, tag = 'input window, operand 5, single buffered']
    #allocation4 [shape = 's32[1]{0}', space=sflag, size = 0x4, scoped, tag = 'scoped memory for my_lin_lin_tanh_sinc.1']
    %12 = vsyncpa [#allocation4], 0
    // Predicated region
    $region2: #{my_lin_lin_tanh_sinc.1} parent=1 // pred_check
      _
    $region3: #{my_lin_lin_tanh_sinc.1} parent=1 // pred_check_branch
      %14 = sbr.rel (0) target = $region5
    $region4: #{my_lin_lin_tanh_sinc.1} parent=1 // pred_region
      _
    $region5: #{my_lin_lin_tanh_sinc.1} parent=1 // pred_fallthru
      _
    // Predicated region
    $region6: #{my_lin_lin_tanh_sinc.1} parent=1 // pred_check
      _
    $region7: #{my_lin_lin_tanh_sinc.1} parent=1 // pred_check_branch
      %16 = sbr.rel (0) target = $region9
    $region8: #{my_lin_lin_tanh_sinc.1} parent=1 // pred_region
      _
    $region9: #{my_lin_lin_tanh_sinc.1} parent=1 // pred_fallthru
      _
    // Predicated region
    $region10: #{my_lin_lin_tanh_sinc.1} parent=1 // pred_check
      _
    $region11: #{my_lin_lin_tanh_sinc.1} parent=1 // pred_check_branch
      %18 = sbr.rel (0) target = $region13
    $region12: #{my_lin_lin_tanh_sinc.1} parent=1 // pred_region
      _
    $region13: #{my_lin_lin_tanh_sinc.1} parent=1 // pred_fallthru
      _
    // Predicated region
    $region14: #{my_lin_lin_tanh_sinc.1} parent=1 // pred_check
      _
    $region15: #{my_lin_lin_tanh_sinc.1} parent=1 // pred_check_branch
      %20 = sbr.rel (0) target = $region17
    $region16: #{my_lin_lin_tanh_sinc.1} parent=1 // pred_region
      _
    $region17: #{my_lin_lin_tanh_sinc.1} parent=1 // pred_fallthru
      _
    // Predicated region
    $region18: #{my_lin_lin_tanh_sinc.1} parent=1 // pred_check
      _
    $region19: #{my_lin_lin_tanh_sinc.1} parent=1 // pred_check_branch
      %22 = sbr.rel (0) target = $region21
    $region20: #{my_lin_lin_tanh_sinc.1} parent=1 // pred_region
      _
    $region21: #{my_lin_lin_tanh_sinc.1} parent=1 // pred_fallthru
      _
    // Predicated region
    $region22: #{my_lin_lin_tanh_sinc.1} parent=1 // pred_check
      _
    $region23: #{my_lin_lin_tanh_sinc.1} parent=1 // pred_check_branch
      %24 = sbr.rel (0) target = $region25
    $region24: #{my_lin_lin_tanh_sinc.1} parent=1 // pred_region
      %26 = vsyncadd [#allocation4], 0
      %s28 = sshll.u32 %s5, 4
      %s29 = int_to_ptr.vmem [resolvable:$true] %s28
      %31 = dma.vmem_to_smem %s29, 16, [#allocation3], [#allocation4]
    $region25: #{my_lin_lin_tanh_sinc.1} parent=1 // pred_fallthru
      _
    // Predicated region
    $region26: #{my_lin_lin_tanh_sinc.1} parent=1 // pred_check
      _
    $region27: #{my_lin_lin_tanh_sinc.1} parent=1 // pred_check_branch
      %33 = sbr.rel (0) target = $region29
    $region28: #{my_lin_lin_tanh_sinc.1} parent=1 // pred_region
      %35 = dma.done [#allocation4], 16
    $region29: #{my_lin_lin_tanh_sinc.1} parent=1 // pred_fallthru
      _
    %36 = sfence
    %p37 = scmp.eq.s32.totalorder 0, 0
    // Predicated region
    $region30: #{my_lin_lin_tanh_sinc.1} parent=1 // pred_check
      %p38 = pneg %p37
    $region31: #{my_lin_lin_tanh_sinc.1} parent=1 // pred_check_branch
      %40 = sbr.rel (%p38) target = $region33
    $region32: #{my_lin_lin_tanh_sinc.1} parent=1 // pred_region
      %41 = vst [vmem:[%s6] sm:$0xff] 0.0
      %v42 = vlaneseq
      %vm43 = vcmp.ge.s32.totalorder %v42, 0
      %vm44 = vcmp.lt.s32.totalorder %v42, 256
      %vm45 = vmand %vm43, %vm44
      %46 = vst.msk [vmem:[%s6 + $0x8] sm:$0x3] %vm45, 0.0
    $region33: #{my_lin_lin_tanh_sinc.1} parent=1 // pred_fallthru
      _
    %v47 = vld [vmem:[%s0] sm:$0xff]
    %v48 = vld [vmem:[%s0 + $0x8] sm:$0xff]
    %v49 = vld [vmem:[%s0 + $0x10] sm:$0xff]
    %v50 = vld [vmem:[%s0 + $0x18] sm:$0xff]
    %v51 = vld [vmem:[%s0 + $0x20] sm:$0xff]
    %v52 = vld [vmem:[%s0 + $0x28] sm:$0xff]
    %v53 = vld [vmem:[%s0 + $0x30] sm:$0xff]
    %v54 = vld [vmem:[%s0 + $0x38] sm:$0xff]
    %v55 = vld [vmem:[%s0 + $0x40] sm:$0xff]
    %v56 = vld [vmem:[%s0 + $0x48] sm:$0xff]
    %v57 = vld [vmem:[%s0 + $0x50] sm:$0xff]
    %v58 = vld [vmem:[%s0 + $0x58] sm:$0xff]
    %v59 = vld [vmem:[%s0 + $0x60] sm:$0xff]
    %v60 = vld [vmem:[%s0 + $0x68] sm:$0xff]
    %v61 = vld [vmem:[%s0 + $0x70] sm:$0xff]
    %v62 = vld [vmem:[%s0 + $0x78] sm:$0xff]
    %v63 = vld [vmem:[%s0 + $0x80] sm:$0xff]
    %v64 = vld [vmem:[%s0 + $0x88] sm:$0xff]
    %v65 = vld [vmem:[%s0 + $0x90] sm:$0xff]
    %v66 = vld [vmem:[%s0 + $0x98] sm:$0xff]
    %v67 = vld [vmem:[%s0 + $0xa0] sm:$0xff]
    %v68 = vld [vmem:[%s0 + $0xa8] sm:$0xff]
    %v69 = vld [vmem:[%s0 + $0xb0] sm:$0xff]
    %v70 = vld [vmem:[%s0 + $0xb8] sm:$0xff]
    %v71 = vld [vmem:[%s0 + $0xc0] sm:$0xff]
    %v72 = vld [vmem:[%s0 + $0xc8] sm:$0xff]
    %v73 = vld [vmem:[%s0 + $0xd0] sm:$0xff]
    %v74 = vld [vmem:[%s0 + $0xd8] sm:$0xff]
    %v75 = vld [vmem:[%s0 + $0xe0] sm:$0xff]
    %v76 = vld [vmem:[%s0 + $0xe8] sm:$0xff]
    %v77 = vld [vmem:[%s0 + $0xf0] sm:$0xff]
    %v78 = vld [vmem:[%s0 + $0xf8] sm:$0xff]
    %v79 = vld [vmem:[%s0 + $0x100] sm:$0xff]
    %v80 = vld [vmem:[%s0 + $0x108] sm:$0xff]
    %v81 = vld [vmem:[%s0 + $0x110] sm:$0xff]
    %v82 = vld [vmem:[%s0 + $0x118] sm:$0xff]
    %v83 = vld [vmem:[%s0 + $0x120] sm:$0xff]
    %v84 = vld [vmem:[%s0 + $0x128] sm:$0xff]
    %v85 = vld [vmem:[%s0 + $0x130] sm:$0xff]
    %v86 = vld [vmem:[%s0 + $0x138] sm:$0xff]
    %v87 = vld [vmem:[%s0 + $0x140] sm:$0xff]
    %v88 = vld [vmem:[%s0 + $0x148] sm:$0xff]
    %v89 = vld [vmem:[%s0 + $0x150] sm:$0xff]
    %v90 = vld [vmem:[%s0 + $0x158] sm:$0xff]
    %v91 = vld [vmem:[%s0 + $0x160] sm:$0xff]
    %v92 = vld [vmem:[%s0 + $0x168] sm:$0xff]
    %v93 = vld [vmem:[%s0 + $0x170] sm:$0xff]
    %v94 = vld [vmem:[%s0 + $0x178] sm:$0xff]
    %v95 = vld [vmem:[%s0 + $0x180] sm:$0xff]
    %v96 = vld [vmem:[%s0 + $0x188] sm:$0xff]
    %v97 = vld [vmem:[%s0 + $0x190] sm:$0xff]
    %v98 = vld [vmem:[%s0 + $0x198] sm:$0xff]
    %v99 = vld [vmem:[%s0 + $0x1a0] sm:$0xff]
    %v100 = vld [vmem:[%s0 + $0x1a8] sm:$0xff]
    %v101 = vld [vmem:[%s0 + $0x1b0] sm:$0xff]
    %v102 = vld [vmem:[%s0 + $0x1b8] sm:$0xff]
    %v103 = vld [vmem:[%s0 + $0x1c0] sm:$0xff]
    %v104 = vld [vmem:[%s0 + $0x1c8] sm:$0xff]
    %v105 = vld [vmem:[%s0 + $0x1d0] sm:$0xff]
    %v106 = vld [vmem:[%s0 + $0x1d8] sm:$0xff]
    %v107 = vld [vmem:[%s0 + $0x1e0] sm:$0xff]
    %v108 = vld [vmem:[%s0 + $0x1e8] sm:$0xff]
    %v109 = vld [vmem:[%s0 + $0x1f0] sm:$0xff]
    %v110 = vld [vmem:[%s0 + $0x1f8] sm:$0xff]
    %v111 = vld [vmem:[%s0 + $0x200] sm:$0xff]
    %v112 = vld [vmem:[%s0 + $0x208] sm:$0xff]
    %v113 = vld [vmem:[%s0 + $0x210] sm:$0xff]
    %v114 = vld [vmem:[%s0 + $0x218] sm:$0xff]
    %v115 = vld [vmem:[%s0 + $0x220] sm:$0xff]
    %v116 = vld [vmem:[%s0 + $0x228] sm:$0xff]
    %v117 = vld [vmem:[%s0 + $0x230] sm:$0xff]
    %v118 = vld [vmem:[%s0 + $0x238] sm:$0xff]
    %v119 = vld [vmem:[%s0 + $0x240] sm:$0xff]
    %v120 = vld [vmem:[%s0 + $0x248] sm:$0xff]
    %v121 = vld [vmem:[%s0 + $0x250] sm:$0xff]
    %v122 = vld [vmem:[%s0 + $0x258] sm:$0xff]
    %v123 = vld [vmem:[%s0 + $0x260] sm:$0xff]
    %v124 = vld [vmem:[%s0 + $0x268] sm:$0xff]
    %v125 = vld [vmem:[%s0 + $0x270] sm:$0xff]
    %v126 = vld [vmem:[%s0 + $0x278] sm:$0xff]
    %v127 = vld [vmem:[%s0 + $0x280] sm:$0xff]
    %v128 = vld [vmem:[%s0 + $0x288] sm:$0xff]
    %v129 = vld [vmem:[%s0 + $0x290] sm:$0xff]
    %v130 = vld [vmem:[%s0 + $0x298] sm:$0xff]
    %v131 = vld [vmem:[%s0 + $0x2a0] sm:$0xff]
    %v132 = vld [vmem:[%s0 + $0x2a8] sm:$0xff]
    %v133 = vld [vmem:[%s0 + $0x2b0] sm:$0xff]
    %v134 = vld [vmem:[%s0 + $0x2b8] sm:$0xff]
    %v135 = vld [vmem:[%s0 + $0x2c0] sm:$0xff]
    %v136 = vld [vmem:[%s0 + $0x2c8] sm:$0xff]
    %v137 = vld [vmem:[%s0 + $0x2d0] sm:$0xff]
    %v138 = vld [vmem:[%s0 + $0x2d8] sm:$0xff]
    %v139 = vld [vmem:[%s0 + $0x2e0] sm:$0xff]
    %v140 = vld [vmem:[%s0 + $0x2e8] sm:$0xff]
    %v141 = vld [vmem:[%s0 + $0x2f0] sm:$0xff]
    %v142 = vld [vmem:[%s0 + $0x2f8] sm:$0xff]
    %v143 = vld [vmem:[%s0 + $0x300] sm:$0xff]
    %v144 = vld [vmem:[%s0 + $0x308] sm:$0xff]
    %v145 = vld [vmem:[%s0 + $0x310] sm:$0xff]
    %v146 = vld [vmem:[%s0 + $0x318] sm:$0xff]
    %v147 = vld [vmem:[%s0 + $0x320] sm:$0xff]
    %v148 = vld [vmem:[%s0 + $0x328] sm:$0xff]
    %v149 = vld [vmem:[%s0 + $0x330] sm:$0xff]
    %v150 = vld [vmem:[%s0 + $0x338] sm:$0xff]
    %v151 = vld [vmem:[%s0 + $0x340] sm:$0xff]
    %v152 = vld [vmem:[%s0 + $0x348] sm:$0xff]
    %v153 = vld [vmem:[%s0 + $0x350] sm:$0xff]
    %v154 = vld [vmem:[%s0 + $0x358] sm:$0xff]
    %v155 = vld [vmem:[%s0 + $0x360] sm:$0xff]
    %v156 = vld [vmem:[%s0 + $0x368] sm:$0xff]
    %v157 = vld [vmem:[%s0 + $0x370] sm:$0xff]
    %v158 = vld [vmem:[%s0 + $0x378] sm:$0xff]
    %v159 = vld [vmem:[%s0 + $0x380] sm:$0xff]
    %v160 = vld [vmem:[%s0 + $0x388] sm:$0xff]
    %v161 = vld [vmem:[%s0 + $0x390] sm:$0xff]
    %v162 = vld [vmem:[%s0 + $0x398] sm:$0xff]
    %v163 = vld [vmem:[%s0 + $0x3a0] sm:$0xff]
    %v164 = vld [vmem:[%s0 + $0x3a8] sm:$0xff]
    %v165 = vld [vmem:[%s0 + $0x3b0] sm:$0xff]
    %v166 = vld [vmem:[%s0 + $0x3b8] sm:$0xff]
    %v167 = vld [vmem:[%s0 + $0x3c0] sm:$0xff]
    %v168 = vld [vmem:[%s0 + $0x3c8] sm:$0xff]
    %v169 = vld [vmem:[%s0 + $0x3d0] sm:$0xff]
    %v170 = vld [vmem:[%s0 + $0x3d8] sm:$0xff]
    %v171 = vld [vmem:[%s0 + $0x3e0] sm:$0xff]
    %v172 = vld [vmem:[%s0 + $0x3e8] sm:$0xff]
    %v173 = vld [vmem:[%s0 + $0x3f0] sm:$0xff]
    %v174 = vld [vmem:[%s0 + $0x3f8] sm:$0xff]
    %v175 = vld [vmem:[%s1] sm:$0xff]
    %v176 = vld [vmem:[%s1 + $0x8] sm:$0xff]
    %v177 = vld [vmem:[%s1 + $0x10] sm:$0xff]
    %v178 = vld [vmem:[%s1 + $0x18] sm:$0xff]
    %v179 = vld [vmem:[%s2] sm:$0x1]
    %v181 = vperm.slane %v179, 0
    %vm183 = vcmask 261120
    %v185 = vsel %vm183, %v47, 0
    %v188 = vsel %vm183, %v48, 0
    %v191 = vsel %vm183, %v49, 0
    %v194 = vsel %vm183, %v50, 0
    %v197 = vsel %vm183, %v51, 0
    %v200 = vsel %vm183, %v52, 0
    %v203 = vsel %vm183, %v53, 0
    %v206 = vsel %vm183, %v54, 0
    %v209 = vsel %vm183, %v55, 0
    %v212 = vsel %vm183, %v56, 0
    %v215 = vsel %vm183, %v57, 0
    %v218 = vsel %vm183, %v58, 0
    %v221 = vsel %vm183, %v59, 0
    %v224 = vsel %vm183, %v60, 0
    %v227 = vsel %vm183, %v61, 0
    %v230 = vsel %vm183, %v62, 0
    %v233 = vsel %vm183, %v63, 0
    %v236 = vsel %vm183, %v64, 0
    %v239 = vsel %vm183, %v65, 0
    %v242 = vsel %vm183, %v66, 0
    %v245 = vsel %vm183, %v67, 0
    %v248 = vsel %vm183, %v68, 0
    %v251 = vsel %vm183, %v69, 0
    %v254 = vsel %vm183, %v70, 0
    %v257 = vsel %vm183, %v71, 0
    %v260 = vsel %vm183, %v72, 0
    %v263 = vsel %vm183, %v73, 0
    %v266 = vsel %vm183, %v74, 0
    %v269 = vsel %vm183, %v75, 0
    %v272 = vsel %vm183, %v76, 0
    %v275 = vsel %vm183, %v77, 0
    %v278 = vsel %vm183, %v78, 0
    %v281 = vsel %vm183, %v79, 0
    %v284 = vsel %vm183, %v80, 0
    %v287 = vsel %vm183, %v81, 0
    %v290 = vsel %vm183, %v82, 0
    %v293 = vsel %vm183, %v83, 0
    %v296 = vsel %vm183, %v84, 0
    %v299 = vsel %vm183, %v85, 0
    %v302 = vsel %vm183, %v86, 0
    %v305 = vsel %vm183, %v87, 0
    %v308 = vsel %vm183, %v88, 0
    %v311 = vsel %vm183, %v89, 0
    %v314 = vsel %vm183, %v90, 0
    %v317 = vsel %vm183, %v91, 0
    %v320 = vsel %vm183, %v92, 0
    %v323 = vsel %vm183, %v93, 0
    %v326 = vsel %vm183, %v94, 0
    %v329 = vsel %vm183, %v95, 0
    %v332 = vsel %vm183, %v96, 0
    %v335 = vsel %vm183, %v97, 0
    %v338 = vsel %vm183, %v98, 0
    %v341 = vsel %vm183, %v99, 0
    %v344 = vsel %vm183, %v100, 0
    %v347 = vsel %vm183, %v101, 0
    %v350 = vsel %vm183, %v102, 0
    %v353 = vsel %vm183, %v103, 0
    %v356 = vsel %vm183, %v104, 0
    %v359 = vsel %vm183, %v105, 0
    %v362 = vsel %vm183, %v106, 0
    %v365 = vsel %vm183, %v107, 0
    %v368 = vsel %vm183, %v108, 0
    %v371 = vsel %vm183, %v109, 0
    %v374 = vsel %vm183, %v110, 0
    %v377 = vsel %vm183, %v111, 0
    %v380 = vsel %vm183, %v112, 0
    %v383 = vsel %vm183, %v113, 0
    %v386 = vsel %vm183, %v114, 0
    %v389 = vsel %vm183, %v115, 0
    %v392 = vsel %vm183, %v116, 0
    %v395 = vsel %vm183, %v117, 0
    %v398 = vsel %vm183, %v118, 0
    %v401 = vsel %vm183, %v119, 0
    %v404 = vsel %vm183, %v120, 0
    %v407 = vsel %vm183, %v121, 0
    %v410 = vsel %vm183, %v122, 0
    %v413 = vsel %vm183, %v123, 0
    %v416 = vsel %vm183, %v124, 0
    %v419 = vsel %vm183, %v125, 0
    %v422 = vsel %vm183, %v126, 0
    %v425 = vsel %vm183, %v127, 0
    %v428 = vsel %vm183, %v128, 0
    %v431 = vsel %vm183, %v129, 0
    %v434 = vsel %vm183, %v130, 0
    %v437 = vsel %vm183, %v131, 0
    %v440 = vsel %vm183, %v132, 0
    %v443 = vsel %vm183, %v133, 0
    %v446 = vsel %vm183, %v134, 0
    %v449 = vsel %vm183, %v135, 0
    %v452 = vsel %vm183, %v136, 0
    %v455 = vsel %vm183, %v137, 0
    %v458 = vsel %vm183, %v138, 0
    %v461 = vsel %vm183, %v139, 0
    %v464 = vsel %vm183, %v140, 0
    %v467 = vsel %vm183, %v141, 0
    %v470 = vsel %vm183, %v142, 0
    %v473 = vsel %vm183, %v143, 0
    %v476 = vsel %vm183, %v144, 0
    %v479 = vsel %vm183, %v145, 0
    %v482 = vsel %vm183, %v146, 0
    %v485 = vsel %vm183, %v147, 0
    %v488 = vsel %vm183, %v148, 0
    %v491 = vsel %vm183, %v149, 0
    %v494 = vsel %vm183, %v150, 0
    %v497 = vsel %vm183, %v151, 0
    %v500 = vsel %vm183, %v152, 0
    %v503 = vsel %vm183, %v153, 0
    %v506 = vsel %vm183, %v154, 0
    %v509 = vsel %vm183, %v155, 0
    %v512 = vsel %vm183, %v156, 0
    %v515 = vsel %vm183, %v157, 0
    %v518 = vsel %vm183, %v158, 0
    %v521 = vsel %vm183, %v159, 0
    %v524 = vsel %vm183, %v160, 0
    %v527 = vsel %vm183, %v161, 0
    %v530 = vsel %vm183, %v162, 0
    %v533 = vsel %vm183, %v163, 0
    %v536 = vsel %vm183, %v164, 0
    %v539 = vsel %vm183, %v165, 0
    %v542 = vsel %vm183, %v166, 0
    %v545 = vsel %vm183, %v167, 0
    %v548 = vsel %vm183, %v168, 0
    %v551 = vsel %vm183, %v169, 0
    %v554 = vsel %vm183, %v170, 0
    %v557 = vsel %vm183, %v171, 0
    %v560 = vsel %vm183, %v172, 0
    %v563 = vsel %vm183, %v173, 0
    %v566 = vsel %vm183, %v174, 0
    %568 = vmatpush.msra.mxu0 0.0
    %569 = vmatpush.msra.mxu0 0.0
    %570 = vmatpush.msra.mxu0 0.0
    %571 = vmatpush.msra.mxu0 0.0
    %572 = vmatpush.msra.mxu0 0.0
    %573 = vmatpush.msra.mxu0 0.0
    %574 = vmatpush.msra.mxu0 0.0
    %575 = vmatpush.msra.mxu0 0.0
    %576 = vmatpush.msra.mxu0 0.0
    %577 = vmatpush.msra.mxu0 0.0
    %578 = vmatpush.msra.mxu0 0.0
    %579 = vmatpush.msra.mxu0 0.0
    %580 = vmatpush.msra.mxu0 %v178
    %581 = vmatpush.msra.mxu0 %v177
    %582 = vmatpush.msra.mxu0 %v176
    %583 = vmatpush.msra.mxu0 %v175
    %584 = vmatmul.f32.gmra.mxu0 %v185
    %v585 = vpop.f32.mrf.mxu0
    %v586 = vadd.f32 %v181, %v585
    %587 = vmatmul.f32.gmra.mxu0 %v188
    %v588 = vpop.f32.mrf.mxu0
    %v589 = vadd.f32 %v181, %v588
    %590 = vmatmul.f32.gmra.mxu0 %v191
    %v591 = vpop.f32.mrf.mxu0
    %v592 = vadd.f32 %v181, %v591
    %593 = vmatmul.f32.gmra.mxu0 %v194
    %v594 = vpop.f32.mrf.mxu0
    %v595 = vadd.f32 %v181, %v594
    %596 = vmatmul.f32.gmra.mxu0 %v197
    %v597 = vpop.f32.mrf.mxu0
    %v598 = vadd.f32 %v181, %v597
    %599 = vmatmul.f32.gmra.mxu0 %v200
    %v600 = vpop.f32.mrf.mxu0
    %v601 = vadd.f32 %v181, %v600
    %602 = vmatmul.f32.gmra.mxu0 %v203
    %v603 = vpop.f32.mrf.mxu0
    %v604 = vadd.f32 %v181, %v603
    %605 = vmatmul.f32.gmra.mxu0 %v206
    %v606 = vpop.f32.mrf.mxu0
    %v607 = vadd.f32 %v181, %v606
    %608 = vmatmul.f32.gmra.mxu0 %v209
    %v609 = vpop.f32.mrf.mxu0
    %v610 = vadd.f32 %v181, %v609
    %611 = vmatmul.f32.gmra.mxu0 %v212
    %v612 = vpop.f32.mrf.mxu0
    %v613 = vadd.f32 %v181, %v612
    %614 = vmatmul.f32.gmra.mxu0 %v215
    %v615 = vpop.f32.mrf.mxu0
    %v616 = vadd.f32 %v181, %v615
    %617 = vmatmul.f32.gmra.mxu0 %v218
    %v618 = vpop.f32.mrf.mxu0
    %v619 = vadd.f32 %v181, %v618
    %620 = vmatmul.f32.gmra.mxu0 %v221
    %v621 = vpop.f32.mrf.mxu0
    %v622 = vadd.f32 %v181, %v621
    %623 = vmatmul.f32.gmra.mxu0 %v224
    %v624 = vpop.f32.mrf.mxu0
    %v625 = vadd.f32 %v181, %v624
    %626 = vmatmul.f32.gmra.mxu0 %v227
    %v627 = vpop.f32.mrf.mxu0
    %v628 = vadd.f32 %v181, %v627
    %629 = vmatmul.f32.gmra.mxu0 %v230
    %v630 = vpop.f32.mrf.mxu0
    %v631 = vadd.f32 %v181, %v630
    %632 = vmatmul.f32.gmra.mxu0 %v233
    %v633 = vpop.f32.mrf.mxu0
    %v634 = vadd.f32 %v181, %v633
    %635 = vmatmul.f32.gmra.mxu0 %v236
    %v636 = vpop.f32.mrf.mxu0
    %v637 = vadd.f32 %v181, %v636
    %638 = vmatmul.f32.gmra.mxu0 %v239
    %v639 = vpop.f32.mrf.mxu0
    %v640 = vadd.f32 %v181, %v639
    %641 = vmatmul.f32.gmra.mxu0 %v242
    %v642 = vpop.f32.mrf.mxu0
    %v643 = vadd.f32 %v181, %v642
    %644 = vmatmul.f32.gmra.mxu0 %v245
    %v645 = vpop.f32.mrf.mxu0
    %v646 = vadd.f32 %v181, %v645
    %647 = vmatmul.f32.gmra.mxu0 %v248
    %v648 = vpop.f32.mrf.mxu0
    %v649 = vadd.f32 %v181, %v648
    %650 = vmatmul.f32.gmra.mxu0 %v251
    %v651 = vpop.f32.mrf.mxu0
    %v652 = vadd.f32 %v181, %v651
    %653 = vmatmul.f32.gmra.mxu0 %v254
    %v654 = vpop.f32.mrf.mxu0
    %v655 = vadd.f32 %v181, %v654
    %656 = vmatmul.f32.gmra.mxu0 %v257
    %v657 = vpop.f32.mrf.mxu0
    %v658 = vadd.f32 %v181, %v657
    %659 = vmatmul.f32.gmra.mxu0 %v260
    %v660 = vpop.f32.mrf.mxu0
    %v661 = vadd.f32 %v181, %v660
    %662 = vmatmul.f32.gmra.mxu0 %v263
    %v663 = vpop.f32.mrf.mxu0
    %v664 = vadd.f32 %v181, %v663
    %665 = vmatmul.f32.gmra.mxu0 %v266
    %v666 = vpop.f32.mrf.mxu0
    %v667 = vadd.f32 %v181, %v666
    %668 = vmatmul.f32.gmra.mxu0 %v269
    %v669 = vpop.f32.mrf.mxu0
    %v670 = vadd.f32 %v181, %v669
    %671 = vmatmul.f32.gmra.mxu0 %v272
    %v672 = vpop.f32.mrf.mxu0
    %v673 = vadd.f32 %v181, %v672
    %674 = vmatmul.f32.gmra.mxu0 %v275
    %v675 = vpop.f32.mrf.mxu0
    %v676 = vadd.f32 %v181, %v675
    %677 = vmatmul.f32.gmra.mxu0 %v278
    %v678 = vpop.f32.mrf.mxu0
    %v679 = vadd.f32 %v181, %v678
    %680 = vmatmul.f32.gmra.mxu0 %v281
    %v681 = vpop.f32.mrf.mxu0
    %v682 = vadd.f32 %v181, %v681
    %683 = vmatmul.f32.gmra.mxu0 %v284
    %v684 = vpop.f32.mrf.mxu0
    %v685 = vadd.f32 %v181, %v684
    %686 = vmatmul.f32.gmra.mxu0 %v287
    %v687 = vpop.f32.mrf.mxu0
    %v688 = vadd.f32 %v181, %v687
    %689 = vmatmul.f32.gmra.mxu0 %v290
    %v690 = vpop.f32.mrf.mxu0
    %v691 = vadd.f32 %v181, %v690
    %692 = vmatmul.f32.gmra.mxu0 %v293
    %v693 = vpop.f32.mrf.mxu0
    %v694 = vadd.f32 %v181, %v693
    %695 = vmatmul.f32.gmra.mxu0 %v296
    %v696 = vpop.f32.mrf.mxu0
    %v697 = vadd.f32 %v181, %v696
    %698 = vmatmul.f32.gmra.mxu0 %v299
    %v699 = vpop.f32.mrf.mxu0
    %v700 = vadd.f32 %v181, %v699
    %701 = vmatmul.f32.gmra.mxu0 %v302
    %v702 = vpop.f32.mrf.mxu0
    %v703 = vadd.f32 %v181, %v702
    %704 = vmatmul.f32.gmra.mxu0 %v305
    %v705 = vpop.f32.mrf.mxu0
    %v706 = vadd.f32 %v181, %v705
    %707 = vmatmul.f32.gmra.mxu0 %v308
    %v708 = vpop.f32.mrf.mxu0
    %v709 = vadd.f32 %v181, %v708
    %710 = vmatmul.f32.gmra.mxu0 %v311
    %v711 = vpop.f32.mrf.mxu0
    %v712 = vadd.f32 %v181, %v711
    %713 = vmatmul.f32.gmra.mxu0 %v314
    %v714 = vpop.f32.mrf.mxu0
    %v715 = vadd.f32 %v181, %v714
    %716 = vmatmul.f32.gmra.mxu0 %v317
    %v717 = vpop.f32.mrf.mxu0
    %v718 = vadd.f32 %v181, %v717
    %719 = vmatmul.f32.gmra.mxu0 %v320
    %v720 = vpop.f32.mrf.mxu0
    %v721 = vadd.f32 %v181, %v720
    %722 = vmatmul.f32.gmra.mxu0 %v323
    %v723 = vpop.f32.mrf.mxu0
    %v724 = vadd.f32 %v181, %v723
    %725 = vmatmul.f32.gmra.mxu0 %v326
    %v726 = vpop.f32.mrf.mxu0
    %v727 = vadd.f32 %v181, %v726
    %728 = vmatmul.f32.gmra.mxu0 %v329
    %v729 = vpop.f32.mrf.mxu0
    %v730 = vadd.f32 %v181, %v729
    %731 = vmatmul.f32.gmra.mxu0 %v332
    %v732 = vpop.f32.mrf.mxu0
    %v733 = vadd.f32 %v181, %v732
    %734 = vmatmul.f32.gmra.mxu0 %v335
    %v735 = vpop.f32.mrf.mxu0
    %v736 = vadd.f32 %v181, %v735
    %737 = vmatmul.f32.gmra.mxu0 %v338
    %v738 = vpop.f32.mrf.mxu0
    %v739 = vadd.f32 %v181, %v738
    %740 = vmatmul.f32.gmra.mxu0 %v341
    %v741 = vpop.f32.mrf.mxu0
    %v742 = vadd.f32 %v181, %v741
    %743 = vmatmul.f32.gmra.mxu0 %v344
    %v744 = vpop.f32.mrf.mxu0
    %v745 = vadd.f32 %v181, %v744
    %746 = vmatmul.f32.gmra.mxu0 %v347
    %v747 = vpop.f32.mrf.mxu0
    %v748 = vadd.f32 %v181, %v747
    %749 = vmatmul.f32.gmra.mxu0 %v350
    %v750 = vpop.f32.mrf.mxu0
    %v751 = vadd.f32 %v181, %v750
    %752 = vmatmul.f32.gmra.mxu0 %v353
    %v753 = vpop.f32.mrf.mxu0
    %v754 = vadd.f32 %v181, %v753
    %755 = vmatmul.f32.gmra.mxu0 %v356
    %v756 = vpop.f32.mrf.mxu0
    %v757 = vadd.f32 %v181, %v756
    %758 = vmatmul.f32.gmra.mxu0 %v359
    %v759 = vpop.f32.mrf.mxu0
    %v760 = vadd.f32 %v181, %v759
    %761 = vmatmul.f32.gmra.mxu0 %v362
    %v762 = vpop.f32.mrf.mxu0
    %v763 = vadd.f32 %v181, %v762
    %764 = vmatmul.f32.gmra.mxu0 %v365
    %v765 = vpop.f32.mrf.mxu0
    %v766 = vadd.f32 %v181, %v765
    %767 = vmatmul.f32.gmra.mxu0 %v368
    %v768 = vpop.f32.mrf.mxu0
    %v769 = vadd.f32 %v181, %v768
    %770 = vmatmul.f32.gmra.mxu0 %v371
    %v771 = vpop.f32.mrf.mxu0
    %v772 = vadd.f32 %v181, %v771
    %773 = vmatmul.f32.gmra.mxu0 %v374
    %v774 = vpop.f32.mrf.mxu0
    %v775 = vadd.f32 %v181, %v774
    %776 = vmatmul.f32.gmra.mxu0 %v377
    %v777 = vpop.f32.mrf.mxu0
    %v778 = vadd.f32 %v181, %v777
    %779 = vmatmul.f32.gmra.mxu0 %v380
    %v780 = vpop.f32.mrf.mxu0
    %v781 = vadd.f32 %v181, %v780
    %782 = vmatmul.f32.gmra.mxu0 %v383
    %v783 = vpop.f32.mrf.mxu0
    %v784 = vadd.f32 %v181, %v783
    %785 = vmatmul.f32.gmra.mxu0 %v386
    %v786 = vpop.f32.mrf.mxu0
    %v787 = vadd.f32 %v181, %v786
    %788 = vmatmul.f32.gmra.mxu0 %v389
    %v789 = vpop.f32.mrf.mxu0
    %v790 = vadd.f32 %v181, %v789
    %791 = vmatmul.f32.gmra.mxu0 %v392
    %v792 = vpop.f32.mrf.mxu0
    %v793 = vadd.f32 %v181, %v792
    %794 = vmatmul.f32.gmra.mxu0 %v395
    %v795 = vpop.f32.mrf.mxu0
    %v796 = vadd.f32 %v181, %v795
    %797 = vmatmul.f32.gmra.mxu0 %v398
    %v798 = vpop.f32.mrf.mxu0
    %v799 = vadd.f32 %v181, %v798
    %800 = vmatmul.f32.gmra.mxu0 %v401
    %v801 = vpop.f32.mrf.mxu0
    %v802 = vadd.f32 %v181, %v801
    %803 = vmatmul.f32.gmra.mxu0 %v404
    %v804 = vpop.f32.mrf.mxu0
    %v805 = vadd.f32 %v181, %v804
    %806 = vmatmul.f32.gmra.mxu0 %v407
    %v807 = vpop.f32.mrf.mxu0
    %v808 = vadd.f32 %v181, %v807
    %809 = vmatmul.f32.gmra.mxu0 %v410
    %v810 = vpop.f32.mrf.mxu0
    %v811 = vadd.f32 %v181, %v810
    %812 = vmatmul.f32.gmra.mxu0 %v413
    %v813 = vpop.f32.mrf.mxu0
    %v814 = vadd.f32 %v181, %v813
    %815 = vmatmul.f32.gmra.mxu0 %v416
    %v816 = vpop.f32.mrf.mxu0
    %v817 = vadd.f32 %v181, %v816
    %818 = vmatmul.f32.gmra.mxu0 %v419
    %v819 = vpop.f32.mrf.mxu0
    %v820 = vadd.f32 %v181, %v819
    %821 = vmatmul.f32.gmra.mxu0 %v422
    %v822 = vpop.f32.mrf.mxu0
    %v823 = vadd.f32 %v181, %v822
    %824 = vmatmul.f32.gmra.mxu0 %v425
    %v825 = vpop.f32.mrf.mxu0
    %v826 = vadd.f32 %v181, %v825
    %827 = vmatmul.f32.gmra.mxu0 %v428
    %v828 = vpop.f32.mrf.mxu0
    %v829 = vadd.f32 %v181, %v828
    %830 = vmatmul.f32.gmra.mxu0 %v431
    %v831 = vpop.f32.mrf.mxu0
    %v832 = vadd.f32 %v181, %v831
    %833 = vmatmul.f32.gmra.mxu0 %v434
    %v834 = vpop.f32.mrf.mxu0
    %v835 = vadd.f32 %v181, %v834
    %836 = vmatmul.f32.gmra.mxu0 %v437
    %v837 = vpop.f32.mrf.mxu0
    %v838 = vadd.f32 %v181, %v837
    %839 = vmatmul.f32.gmra.mxu0 %v440
    %v840 = vpop.f32.mrf.mxu0
    %v841 = vadd.f32 %v181, %v840
    %842 = vmatmul.f32.gmra.mxu0 %v443
    %v843 = vpop.f32.mrf.mxu0
    %v844 = vadd.f32 %v181, %v843
    %845 = vmatmul.f32.gmra.mxu0 %v446
    %v846 = vpop.f32.mrf.mxu0
    %v847 = vadd.f32 %v181, %v846
    %848 = vmatmul.f32.gmra.mxu0 %v449
    %v849 = vpop.f32.mrf.mxu0
    %v850 = vadd.f32 %v181, %v849
    %851 = vmatmul.f32.gmra.mxu0 %v452
    %v852 = vpop.f32.mrf.mxu0
    %v853 = vadd.f32 %v181, %v852
    %854 = vmatmul.f32.gmra.mxu0 %v455
    %v855 = vpop.f32.mrf.mxu0
    %v856 = vadd.f32 %v181, %v855
    %857 = vmatmul.f32.gmra.mxu0 %v458
    %v858 = vpop.f32.mrf.mxu0
    %v859 = vadd.f32 %v181, %v858
    %860 = vmatmul.f32.gmra.mxu0 %v461
    %v861 = vpop.f32.mrf.mxu0
    %v862 = vadd.f32 %v181, %v861
    %863 = vmatmul.f32.gmra.mxu0 %v464
    %v864 = vpop.f32.mrf.mxu0
    %v865 = vadd.f32 %v181, %v864
    %866 = vmatmul.f32.gmra.mxu0 %v467
    %v867 = vpop.f32.mrf.mxu0
    %v868 = vadd.f32 %v181, %v867
    %869 = vmatmul.f32.gmra.mxu0 %v470
    %v870 = vpop.f32.mrf.mxu0
    %v871 = vadd.f32 %v181, %v870
    %872 = vmatmul.f32.gmra.mxu0 %v473
    %v873 = vpop.f32.mrf.mxu0
    %v874 = vadd.f32 %v181, %v873
    %875 = vmatmul.f32.gmra.mxu0 %v476
    %v876 = vpop.f32.mrf.mxu0
    %v877 = vadd.f32 %v181, %v876
    %878 = vmatmul.f32.gmra.mxu0 %v479
    %v879 = vpop.f32.mrf.mxu0
    %v880 = vadd.f32 %v181, %v879
    %881 = vmatmul.f32.gmra.mxu0 %v482
    %v882 = vpop.f32.mrf.mxu0
    %v883 = vadd.f32 %v181, %v882
    %884 = vmatmul.f32.gmra.mxu0 %v485
    %v885 = vpop.f32.mrf.mxu0
    %v886 = vadd.f32 %v181, %v885
    %887 = vmatmul.f32.gmra.mxu0 %v488
    %v888 = vpop.f32.mrf.mxu0
    %v889 = vadd.f32 %v181, %v888
    %890 = vmatmul.f32.gmra.mxu0 %v491
    %v891 = vpop.f32.mrf.mxu0
    %v892 = vadd.f32 %v181, %v891
    %893 = vmatmul.f32.gmra.mxu0 %v494
    %v894 = vpop.f32.mrf.mxu0
    %v895 = vadd.f32 %v181, %v894
    %896 = vmatmul.f32.gmra.mxu0 %v497
    %v897 = vpop.f32.mrf.mxu0
    %v898 = vadd.f32 %v181, %v897
    %899 = vmatmul.f32.gmra.mxu0 %v500
    %v900 = vpop.f32.mrf.mxu0
    %v901 = vadd.f32 %v181, %v900
    %902 = vmatmul.f32.gmra.mxu0 %v503
    %v903 = vpop.f32.mrf.mxu0
    %v904 = vadd.f32 %v181, %v903
    %905 = vmatmul.f32.gmra.mxu0 %v506
    %v906 = vpop.f32.mrf.mxu0
    %v907 = vadd.f32 %v181, %v906
    %908 = vmatmul.f32.gmra.mxu0 %v509
    %v909 = vpop.f32.mrf.mxu0
    %v910 = vadd.f32 %v181, %v909
    %911 = vmatmul.f32.gmra.mxu0 %v512
    %v912 = vpop.f32.mrf.mxu0
    %v913 = vadd.f32 %v181, %v912
    %914 = vmatmul.f32.gmra.mxu0 %v515
    %v915 = vpop.f32.mrf.mxu0
    %v916 = vadd.f32 %v181, %v915
    %917 = vmatmul.f32.gmra.mxu0 %v518
    %v918 = vpop.f32.mrf.mxu0
    %v919 = vadd.f32 %v181, %v918
    %920 = vmatmul.f32.gmra.mxu0 %v521
    %v921 = vpop.f32.mrf.mxu0
    %v922 = vadd.f32 %v181, %v921
    %923 = vmatmul.f32.gmra.mxu0 %v524
    %v924 = vpop.f32.mrf.mxu0
    %v925 = vadd.f32 %v181, %v924
    %926 = vmatmul.f32.gmra.mxu0 %v527
    %v927 = vpop.f32.mrf.mxu0
    %v928 = vadd.f32 %v181, %v927
    %929 = vmatmul.f32.gmra.mxu0 %v530
    %v930 = vpop.f32.mrf.mxu0
    %v931 = vadd.f32 %v181, %v930
    %932 = vmatmul.f32.gmra.mxu0 %v533
    %v933 = vpop.f32.mrf.mxu0
    %v934 = vadd.f32 %v181, %v933
    %935 = vmatmul.f32.gmra.mxu0 %v536
    %v936 = vpop.f32.mrf.mxu0
    %v937 = vadd.f32 %v181, %v936
    %938 = vmatmul.f32.gmra.mxu0 %v539
    %v939 = vpop.f32.mrf.mxu0
    %v940 = vadd.f32 %v181, %v939
    %941 = vmatmul.f32.gmra.mxu0 %v542
    %v942 = vpop.f32.mrf.mxu0
    %v943 = vadd.f32 %v181, %v942
    %944 = vmatmul.f32.gmra.mxu0 %v545
    %v945 = vpop.f32.mrf.mxu0
    %v946 = vadd.f32 %v181, %v945
    %947 = vmatmul.f32.gmra.mxu0 %v548
    %v948 = vpop.f32.mrf.mxu0
    %v949 = vadd.f32 %v181, %v948
    %950 = vmatmul.f32.gmra.mxu0 %v551
    %v951 = vpop.f32.mrf.mxu0
    %v952 = vadd.f32 %v181, %v951
    %953 = vmatmul.f32.gmra.mxu0 %v554
    %v954 = vpop.f32.mrf.mxu0
    %v955 = vadd.f32 %v181, %v954
    %956 = vmatmul.f32.gmra.mxu0 %v557
    %v957 = vpop.f32.mrf.mxu0
    %v958 = vadd.f32 %v181, %v957
    %959 = vmatmul.f32.gmra.mxu0 %v560
    %v960 = vpop.f32.mrf.mxu0
    %v961 = vadd.f32 %v181, %v960
    %962 = vmatmul.f32.gmra.mxu0 %v563
    %v963 = vpop.f32.mrf.mxu0
    %v964 = vadd.f32 %v181, %v963
    %965 = vmatmul.f32.gmra.mxu0 %v566
    %v966 = vpop.f32.mrf.mxu0
    %v967 = vadd.f32 %v181, %v966
    %968 = vdwg.mxu0
    %v969 = vmax.f32 %v586, 0.0
    %v970 = vmax.f32 %v589, 0.0
    %v971 = vmax.f32 %v592, 0.0
    %v972 = vmax.f32 %v595, 0.0
    %v973 = vmax.f32 %v598, 0.0
    %v974 = vmax.f32 %v601, 0.0
    %v975 = vmax.f32 %v604, 0.0
    %v976 = vmax.f32 %v607, 0.0
    %v977 = vmax.f32 %v610, 0.0
    %v978 = vmax.f32 %v613, 0.0
    %v979 = vmax.f32 %v616, 0.0
    %v980 = vmax.f32 %v619, 0.0
    %v981 = vmax.f32 %v622, 0.0
    %v982 = vmax.f32 %v625, 0.0
    %v983 = vmax.f32 %v628, 0.0
    %v984 = vmax.f32 %v631, 0.0
    %v985 = vmax.f32 %v634, 0.0
    %v986 = vmax.f32 %v637, 0.0
    %v987 = vmax.f32 %v640, 0.0
    %v988 = vmax.f32 %v643, 0.0
    %v989 = vmax.f32 %v646, 0.0
    %v990 = vmax.f32 %v649, 0.0
    %v991 = vmax.f32 %v652, 0.0
    %v992 = vmax.f32 %v655, 0.0
    %v993 = vmax.f32 %v658, 0.0
    %v994 = vmax.f32 %v661, 0.0
    %v995 = vmax.f32 %v664, 0.0
    %v996 = vmax.f32 %v667, 0.0
    %v997 = vmax.f32 %v670, 0.0
    %v998 = vmax.f32 %v673, 0.0
    %v999 = vmax.f32 %v676, 0.0
    %v1000 = vmax.f32 %v679, 0.0
    %v1001 = vmax.f32 %v682, 0.0
    %v1002 = vmax.f32 %v685, 0.0
    %v1003 = vmax.f32 %v688, 0.0
    %v1004 = vmax.f32 %v691, 0.0
    %v1005 = vmax.f32 %v694, 0.0
    %v1006 = vmax.f32 %v697, 0.0
    %v1007 = vmax.f32 %v700, 0.0
    %v1008 = vmax.f32 %v703, 0.0
    %v1009 = vmax.f32 %v706, 0.0
    %v1010 = vmax.f32 %v709, 0.0
    %v1011 = vmax.f32 %v712, 0.0
    %v1012 = vmax.f32 %v715, 0.0
    %v1013 = vmax.f32 %v718, 0.0
    %v1014 = vmax.f32 %v721, 0.0
    %v1015 = vmax.f32 %v724, 0.0
    %v1016 = vmax.f32 %v727, 0.0
    %v1017 = vmax.f32 %v730, 0.0
    %v1018 = vmax.f32 %v733, 0.0
    %v1019 = vmax.f32 %v736, 0.0
    %v1020 = vmax.f32 %v739, 0.0
    %v1021 = vmax.f32 %v742, 0.0
    %v1022 = vmax.f32 %v745, 0.0
    %v1023 = vmax.f32 %v748, 0.0
    %v1024 = vmax.f32 %v751, 0.0
    %v1025 = vmax.f32 %v754, 0.0
    %v1026 = vmax.f32 %v757, 0.0
    %v1027 = vmax.f32 %v760, 0.0
    %v1028 = vmax.f32 %v763, 0.0
    %v1029 = vmax.f32 %v766, 0.0
    %v1030 = vmax.f32 %v769, 0.0
    %v1031 = vmax.f32 %v772, 0.0
    %v1032 = vmax.f32 %v775, 0.0
    %v1033 = vmax.f32 %v778, 0.0
    %v1034 = vmax.f32 %v781, 0.0
    %v1035 = vmax.f32 %v784, 0.0
    %v1036 = vmax.f32 %v787, 0.0
    %v1037 = vmax.f32 %v790, 0.0
    %v1038 = vmax.f32 %v793, 0.0
    %v1039 = vmax.f32 %v796, 0.0
    %v1040 = vmax.f32 %v799, 0.0
    %v1041 = vmax.f32 %v802, 0.0
    %v1042 = vmax.f32 %v805, 0.0
    %v1043 = vmax.f32 %v808, 0.0
    %v1044 = vmax.f32 %v811, 0.0
    %v1045 = vmax.f32 %v814, 0.0
    %v1046 = vmax.f32 %v817, 0.0
    %v1047 = vmax.f32 %v820, 0.0
    %v1048 = vmax.f32 %v823, 0.0
    %v1049 = vmax.f32 %v826, 0.0
    %v1050 = vmax.f32 %v829, 0.0
    %v1051 = vmax.f32 %v832, 0.0
    %v1052 = vmax.f32 %v835, 0.0
    %v1053 = vmax.f32 %v838, 0.0
    %v1054 = vmax.f32 %v841, 0.0
    %v1055 = vmax.f32 %v844, 0.0
    %v1056 = vmax.f32 %v847, 0.0
    %v1057 = vmax.f32 %v850, 0.0
    %v1058 = vmax.f32 %v853, 0.0
    %v1059 = vmax.f32 %v856, 0.0
    %v1060 = vmax.f32 %v859, 0.0
    %v1061 = vmax.f32 %v862, 0.0
    %v1062 = vmax.f32 %v865, 0.0
    %v1063 = vmax.f32 %v868, 0.0
    %v1064 = vmax.f32 %v871, 0.0
    %v1065 = vmax.f32 %v874, 0.0
    %v1066 = vmax.f32 %v877, 0.0
    %v1067 = vmax.f32 %v880, 0.0
    %v1068 = vmax.f32 %v883, 0.0
    %v1069 = vmax.f32 %v886, 0.0
    %v1070 = vmax.f32 %v889, 0.0
    %v1071 = vmax.f32 %v892, 0.0
    %v1072 = vmax.f32 %v895, 0.0
    %v1073 = vmax.f32 %v898, 0.0
    %v1074 = vmax.f32 %v901, 0.0
    %v1075 = vmax.f32 %v904, 0.0
    %v1076 = vmax.f32 %v907, 0.0
    %v1077 = vmax.f32 %v910, 0.0
    %v1078 = vmax.f32 %v913, 0.0
    %v1079 = vmax.f32 %v916, 0.0
    %v1080 = vmax.f32 %v919, 0.0
    %v1081 = vmax.f32 %v922, 0.0
    %v1082 = vmax.f32 %v925, 0.0
    %v1083 = vmax.f32 %v928, 0.0
    %v1084 = vmax.f32 %v931, 0.0
    %v1085 = vmax.f32 %v934, 0.0
    %v1086 = vmax.f32 %v937, 0.0
    %v1087 = vmax.f32 %v940, 0.0
    %v1088 = vmax.f32 %v943, 0.0
    %v1089 = vmax.f32 %v946, 0.0
    %v1090 = vmax.f32 %v949, 0.0
    %v1091 = vmax.f32 %v952, 0.0
    %v1092 = vmax.f32 %v955, 0.0
    %v1093 = vmax.f32 %v958, 0.0
    %v1094 = vmax.f32 %v961, 0.0
    %v1095 = vmax.f32 %v964, 0.0
    %v1096 = vmax.f32 %v967, 0.0
    %s1097 = smul.u32 0, 1024
    %s1098 = sadd.s32 %s1097, 128
    %v1099 = vld [vmem:[%s3] sm:$0x1]
    %v1101 = vperm.slane %v1099, 0
    %v1103 = vmul.f32 %v969, %v1101
    %v1104 = vmul.f32 %v970, %v1101
    %v1105 = vmul.f32 %v971, %v1101
    %v1106 = vmul.f32 %v972, %v1101
    %v1107 = vmul.f32 %v973, %v1101
    %v1108 = vmul.f32 %v974, %v1101
    %v1109 = vmul.f32 %v975, %v1101
    %v1110 = vmul.f32 %v976, %v1101
    %v1111 = vmul.f32 %v977, %v1101
    %v1112 = vmul.f32 %v978, %v1101
    %v1113 = vmul.f32 %v979, %v1101
    %v1114 = vmul.f32 %v980, %v1101
    %v1115 = vmul.f32 %v981, %v1101
    %v1116 = vmul.f32 %v982, %v1101
    %v1117 = vmul.f32 %v983, %v1101
    %v1118 = vmul.f32 %v984, %v1101
    %v1119 = vmul.f32 %v985, %v1101
    %v1120 = vmul.f32 %v986, %v1101
    %v1121 = vmul.f32 %v987, %v1101
    %v1122 = vmul.f32 %v988, %v1101
    %v1123 = vmul.f32 %v989, %v1101
    %v1124 = vmul.f32 %v990, %v1101
    %v1125 = vmul.f32 %v991, %v1101
    %v1126 = vmul.f32 %v992, %v1101
    %v1127 = vmul.f32 %v993, %v1101
    %v1128 = vmul.f32 %v994, %v1101
    %v1129 = vmul.f32 %v995, %v1101
    %v1130 = vmul.f32 %v996, %v1101
    %v1131 = vmul.f32 %v997, %v1101
    %v1132 = vmul.f32 %v998, %v1101
    %v1133 = vmul.f32 %v999, %v1101
    %v1134 = vmul.f32 %v1000, %v1101
    %v1135 = vmul.f32 %v1001, %v1101
    %v1136 = vmul.f32 %v1002, %v1101
    %v1137 = vmul.f32 %v1003, %v1101
    %v1138 = vmul.f32 %v1004, %v1101
    %v1139 = vmul.f32 %v1005, %v1101
    %v1140 = vmul.f32 %v1006, %v1101
    %v1141 = vmul.f32 %v1007, %v1101
    %v1142 = vmul.f32 %v1008, %v1101
    %v1143 = vmul.f32 %v1009, %v1101
    %v1144 = vmul.f32 %v1010, %v1101
    %v1145 = vmul.f32 %v1011, %v1101
    %v1146 = vmul.f32 %v1012, %v1101
    %v1147 = vmul.f32 %v1013, %v1101
    %v1148 = vmul.f32 %v1014, %v1101
    %v1149 = vmul.f32 %v1015, %v1101
    %v1150 = vmul.f32 %v1016, %v1101
    %v1151 = vmul.f32 %v1017, %v1101
    %v1152 = vmul.f32 %v1018, %v1101
    %v1153 = vmul.f32 %v1019, %v1101
    %v1154 = vmul.f32 %v1020, %v1101
    %v1155 = vmul.f32 %v1021, %v1101
    %v1156 = vmul.f32 %v1022, %v1101
    %v1157 = vmul.f32 %v1023, %v1101
    %v1158 = vmul.f32 %v1024, %v1101
    %v1159 = vmul.f32 %v1025, %v1101
    %v1160 = vmul.f32 %v1026, %v1101
    %v1161 = vmul.f32 %v1027, %v1101
    %v1162 = vmul.f32 %v1028, %v1101
    %v1163 = vmul.f32 %v1029, %v1101
    %v1164 = vmul.f32 %v1030, %v1101
    %v1165 = vmul.f32 %v1031, %v1101
    %v1166 = vmul.f32 %v1032, %v1101
    %v1167 = vmul.f32 %v1033, %v1101
    %v1168 = vmul.f32 %v1034, %v1101
    %v1169 = vmul.f32 %v1035, %v1101
    %v1170 = vmul.f32 %v1036, %v1101
    %v1171 = vmul.f32 %v1037, %v1101
    %v1172 = vmul.f32 %v1038, %v1101
    %v1173 = vmul.f32 %v1039, %v1101
    %v1174 = vmul.f32 %v1040, %v1101
    %v1175 = vmul.f32 %v1041, %v1101
    %v1176 = vmul.f32 %v1042, %v1101
    %v1177 = vmul.f32 %v1043, %v1101
    %v1178 = vmul.f32 %v1044, %v1101
    %v1179 = vmul.f32 %v1045, %v1101
    %v1180 = vmul.f32 %v1046, %v1101
    %v1181 = vmul.f32 %v1047, %v1101
    %v1182 = vmul.f32 %v1048, %v1101
    %v1183 = vmul.f32 %v1049, %v1101
    %v1184 = vmul.f32 %v1050, %v1101
    %v1185 = vmul.f32 %v1051, %v1101
    %v1186 = vmul.f32 %v1052, %v1101
    %v1187 = vmul.f32 %v1053, %v1101
    %v1188 = vmul.f32 %v1054, %v1101
    %v1189 = vmul.f32 %v1055, %v1101
    %v1190 = vmul.f32 %v1056, %v1101
    %v1191 = vmul.f32 %v1057, %v1101
    %v1192 = vmul.f32 %v1058, %v1101
    %v1193 = vmul.f32 %v1059, %v1101
    %v1194 = vmul.f32 %v1060, %v1101
    %v1195 = vmul.f32 %v1061, %v1101
    %v1196 = vmul.f32 %v1062, %v1101
    %v1197 = vmul.f32 %v1063, %v1101
    %v1198 = vmul.f32 %v1064, %v1101
    %v1199 = vmul.f32 %v1065, %v1101
    %v1200 = vmul.f32 %v1066, %v1101
    %v1201 = vmul.f32 %v1067, %v1101
    %v1202 = vmul.f32 %v1068, %v1101
    %v1203 = vmul.f32 %v1069, %v1101
    %v1204 = vmul.f32 %v1070, %v1101
    %v1205 = vmul.f32 %v1071, %v1101
    %v1206 = vmul.f32 %v1072, %v1101
    %v1207 = vmul.f32 %v1073, %v1101
    %v1208 = vmul.f32 %v1074, %v1101
    %v1209 = vmul.f32 %v1075, %v1101
    %v1210 = vmul.f32 %v1076, %v1101
    %v1211 = vmul.f32 %v1077, %v1101
    %v1212 = vmul.f32 %v1078, %v1101
    %v1213 = vmul.f32 %v1079, %v1101
    %v1214 = vmul.f32 %v1080, %v1101
    %v1215 = vmul.f32 %v1081, %v1101
    %v1216 = vmul.f32 %v1082, %v1101
    %v1217 = vmul.f32 %v1083, %v1101
    %v1218 = vmul.f32 %v1084, %v1101
    %v1219 = vmul.f32 %v1085, %v1101
    %v1220 = vmul.f32 %v1086, %v1101
    %v1221 = vmul.f32 %v1087, %v1101
    %v1222 = vmul.f32 %v1088, %v1101
    %v1223 = vmul.f32 %v1089, %v1101
    %v1224 = vmul.f32 %v1090, %v1101
    %v1225 = vmul.f32 %v1091, %v1101
    %v1226 = vmul.f32 %v1092, %v1101
    %v1227 = vmul.f32 %v1093, %v1101
    %v1228 = vmul.f32 %v1094, %v1101
    %v1229 = vmul.f32 %v1095, %v1101
    %v1230 = vmul.f32 %v1096, %v1101
    %1231 = vadd.xlane.f32.xlu0 %v1103
    %v1232 = vpop.xlane.xlu0 %1231
    %1233 = vadd.xlane.f32.xlu0 %v1104
    %v1234 = vpop.xlane.xlu0 %1233
    %1235 = vadd.xlane.f32.xlu0 %v1105
    %v1236 = vpop.xlane.xlu0 %1235
    %1237 = vadd.xlane.f32.xlu0 %v1106
    %v1238 = vpop.xlane.xlu0 %1237
    %1239 = vadd.xlane.f32.xlu0 %v1107
    %v1240 = vpop.xlane.xlu0 %1239
    %1241 = vadd.xlane.f32.xlu0 %v1108
    %v1242 = vpop.xlane.xlu0 %1241
    %1243 = vadd.xlane.f32.xlu0 %v1109
    %v1244 = vpop.xlane.xlu0 %1243
    %1245 = vadd.xlane.f32.xlu0 %v1110
    %v1246 = vpop.xlane.xlu0 %1245
    %1247 = vadd.xlane.f32.xlu0 %v1111
    %v1248 = vpop.xlane.xlu0 %1247
    %1249 = vadd.xlane.f32.xlu0 %v1112
    %v1250 = vpop.xlane.xlu0 %1249
    %1251 = vadd.xlane.f32.xlu0 %v1113
    %v1252 = vpop.xlane.xlu0 %1251
    %1253 = vadd.xlane.f32.xlu0 %v1114
    %v1254 = vpop.xlane.xlu0 %1253
    %1255 = vadd.xlane.f32.xlu0 %v1115
    %v1256 = vpop.xlane.xlu0 %1255
    %1257 = vadd.xlane.f32.xlu0 %v1116
    %v1258 = vpop.xlane.xlu0 %1257
    %1259 = vadd.xlane.f32.xlu0 %v1117
    %v1260 = vpop.xlane.xlu0 %1259
    %1261 = vadd.xlane.f32.xlu0 %v1118
    %v1262 = vpop.xlane.xlu0 %1261
    %1263 = vadd.xlane.f32.xlu0 %v1119
    %v1264 = vpop.xlane.xlu0 %1263
    %1265 = vadd.xlane.f32.xlu0 %v1120
    %v1266 = vpop.xlane.xlu0 %1265
    %1267 = vadd.xlane.f32.xlu0 %v1121
    %v1268 = vpop.xlane.xlu0 %1267
    %1269 = vadd.xlane.f32.xlu0 %v1122
    %v1270 = vpop.xlane.xlu0 %1269
    %1271 = vadd.xlane.f32.xlu0 %v1123
    %v1272 = vpop.xlane.xlu0 %1271
    %1273 = vadd.xlane.f32.xlu0 %v1124
    %v1274 = vpop.xlane.xlu0 %1273
    %1275 = vadd.xlane.f32.xlu0 %v1125
    %v1276 = vpop.xlane.xlu0 %1275
    %1277 = vadd.xlane.f32.xlu0 %v1126
    %v1278 = vpop.xlane.xlu0 %1277
    %1279 = vadd.xlane.f32.xlu0 %v1127
    %v1280 = vpop.xlane.xlu0 %1279
    %1281 = vadd.xlane.f32.xlu0 %v1128
    %v1282 = vpop.xlane.xlu0 %1281
    %1283 = vadd.xlane.f32.xlu0 %v1129
    %v1284 = vpop.xlane.xlu0 %1283
    %1285 = vadd.xlane.f32.xlu0 %v1130
    %v1286 = vpop.xlane.xlu0 %1285
    %1287 = vadd.xlane.f32.xlu0 %v1131
    %v1288 = vpop.xlane.xlu0 %1287
    %1289 = vadd.xlane.f32.xlu0 %v1132
    %v1290 = vpop.xlane.xlu0 %1289
    %1291 = vadd.xlane.f32.xlu0 %v1133
    %v1292 = vpop.xlane.xlu0 %1291
    %1293 = vadd.xlane.f32.xlu0 %v1134
    %v1294 = vpop.xlane.xlu0 %1293
    %1295 = vadd.xlane.f32.xlu0 %v1135
    %v1296 = vpop.xlane.xlu0 %1295
    %1297 = vadd.xlane.f32.xlu0 %v1136
    %v1298 = vpop.xlane.xlu0 %1297
    %1299 = vadd.xlane.f32.xlu0 %v1137
    %v1300 = vpop.xlane.xlu0 %1299
    %1301 = vadd.xlane.f32.xlu0 %v1138
    %v1302 = vpop.xlane.xlu0 %1301
    %1303 = vadd.xlane.f32.xlu0 %v1139
    %v1304 = vpop.xlane.xlu0 %1303
    %1305 = vadd.xlane.f32.xlu0 %v1140
    %v1306 = vpop.xlane.xlu0 %1305
    %1307 = vadd.xlane.f32.xlu0 %v1141
    %v1308 = vpop.xlane.xlu0 %1307
    %1309 = vadd.xlane.f32.xlu0 %v1142
    %v1310 = vpop.xlane.xlu0 %1309
    %1311 = vadd.xlane.f32.xlu0 %v1143
    %v1312 = vpop.xlane.xlu0 %1311
    %1313 = vadd.xlane.f32.xlu0 %v1144
    %v1314 = vpop.xlane.xlu0 %1313
    %1315 = vadd.xlane.f32.xlu0 %v1145
    %v1316 = vpop.xlane.xlu0 %1315
    %1317 = vadd.xlane.f32.xlu0 %v1146
    %v1318 = vpop.xlane.xlu0 %1317
    %1319 = vadd.xlane.f32.xlu0 %v1147
    %v1320 = vpop.xlane.xlu0 %1319
    %1321 = vadd.xlane.f32.xlu0 %v1148
    %v1322 = vpop.xlane.xlu0 %1321
    %1323 = vadd.xlane.f32.xlu0 %v1149
    %v1324 = vpop.xlane.xlu0 %1323
    %1325 = vadd.xlane.f32.xlu0 %v1150
    %v1326 = vpop.xlane.xlu0 %1325
    %1327 = vadd.xlane.f32.xlu0 %v1151
    %v1328 = vpop.xlane.xlu0 %1327
    %1329 = vadd.xlane.f32.xlu0 %v1152
    %v1330 = vpop.xlane.xlu0 %1329
    %1331 = vadd.xlane.f32.xlu0 %v1153
    %v1332 = vpop.xlane.xlu0 %1331
    %1333 = vadd.xlane.f32.xlu0 %v1154
    %v1334 = vpop.xlane.xlu0 %1333
    %1335 = vadd.xlane.f32.xlu0 %v1155
    %v1336 = vpop.xlane.xlu0 %1335
    %1337 = vadd.xlane.f32.xlu0 %v1156
    %v1338 = vpop.xlane.xlu0 %1337
    %1339 = vadd.xlane.f32.xlu0 %v1157
    %v1340 = vpop.xlane.xlu0 %1339
    %1341 = vadd.xlane.f32.xlu0 %v1158
    %v1342 = vpop.xlane.xlu0 %1341
    %1343 = vadd.xlane.f32.xlu0 %v1159
    %v1344 = vpop.xlane.xlu0 %1343
    %1345 = vadd.xlane.f32.xlu0 %v1160
    %v1346 = vpop.xlane.xlu0 %1345
    %1347 = vadd.xlane.f32.xlu0 %v1161
    %v1348 = vpop.xlane.xlu0 %1347
    %1349 = vadd.xlane.f32.xlu0 %v1162
    %v1350 = vpop.xlane.xlu0 %1349
    %1351 = vadd.xlane.f32.xlu0 %v1163
    %v1352 = vpop.xlane.xlu0 %1351
    %1353 = vadd.xlane.f32.xlu0 %v1164
    %v1354 = vpop.xlane.xlu0 %1353
    %1355 = vadd.xlane.f32.xlu0 %v1165
    %v1356 = vpop.xlane.xlu0 %1355
    %1357 = vadd.xlane.f32.xlu0 %v1166
    %v1358 = vpop.xlane.xlu0 %1357
    %1359 = vadd.xlane.f32.xlu0 %v1167
    %v1360 = vpop.xlane.xlu0 %1359
    %1361 = vadd.xlane.f32.xlu0 %v1168
    %v1362 = vpop.xlane.xlu0 %1361
    %1363 = vadd.xlane.f32.xlu0 %v1169
    %v1364 = vpop.xlane.xlu0 %1363
    %1365 = vadd.xlane.f32.xlu0 %v1170
    %v1366 = vpop.xlane.xlu0 %1365
    %1367 = vadd.xlane.f32.xlu0 %v1171
    %v1368 = vpop.xlane.xlu0 %1367
    %1369 = vadd.xlane.f32.xlu0 %v1172
    %v1370 = vpop.xlane.xlu0 %1369
    %1371 = vadd.xlane.f32.xlu0 %v1173
    %v1372 = vpop.xlane.xlu0 %1371
    %1373 = vadd.xlane.f32.xlu0 %v1174
    %v1374 = vpop.xlane.xlu0 %1373
    %1375 = vadd.xlane.f32.xlu0 %v1175
    %v1376 = vpop.xlane.xlu0 %1375
    %1377 = vadd.xlane.f32.xlu0 %v1176
    %v1378 = vpop.xlane.xlu0 %1377
    %1379 = vadd.xlane.f32.xlu0 %v1177
    %v1380 = vpop.xlane.xlu0 %1379
    %1381 = vadd.xlane.f32.xlu0 %v1178
    %v1382 = vpop.xlane.xlu0 %1381
    %1383 = vadd.xlane.f32.xlu0 %v1179
    %v1384 = vpop.xlane.xlu0 %1383
    %1385 = vadd.xlane.f32.xlu0 %v1180
    %v1386 = vpop.xlane.xlu0 %1385
    %1387 = vadd.xlane.f32.xlu0 %v1181
    %v1388 = vpop.xlane.xlu0 %1387
    %1389 = vadd.xlane.f32.xlu0 %v1182
    %v1390 = vpop.xlane.xlu0 %1389
    %1391 = vadd.xlane.f32.xlu0 %v1183
    %v1392 = vpop.xlane.xlu0 %1391
    %1393 = vadd.xlane.f32.xlu0 %v1184
    %v1394 = vpop.xlane.xlu0 %1393
    %1395 = vadd.xlane.f32.xlu0 %v1185
    %v1396 = vpop.xlane.xlu0 %1395
    %1397 = vadd.xlane.f32.xlu0 %v1186
    %v1398 = vpop.xlane.xlu0 %1397
    %1399 = vadd.xlane.f32.xlu0 %v1187
    %v1400 = vpop.xlane.xlu0 %1399
    %1401 = vadd.xlane.f32.xlu0 %v1188
    %v1402 = vpop.xlane.xlu0 %1401
    %1403 = vadd.xlane.f32.xlu0 %v1189
    %v1404 = vpop.xlane.xlu0 %1403
    %1405 = vadd.xlane.f32.xlu0 %v1190
    %v1406 = vpop.xlane.xlu0 %1405
    %1407 = vadd.xlane.f32.xlu0 %v1191
    %v1408 = vpop.xlane.xlu0 %1407
    %1409 = vadd.xlane.f32.xlu0 %v1192
    %v1410 = vpop.xlane.xlu0 %1409
    %1411 = vadd.xlane.f32.xlu0 %v1193
    %v1412 = vpop.xlane.xlu0 %1411
    %1413 = vadd.xlane.f32.xlu0 %v1194
    %v1414 = vpop.xlane.xlu0 %1413
    %1415 = vadd.xlane.f32.xlu0 %v1195
    %v1416 = vpop.xlane.xlu0 %1415
    %1417 = vadd.xlane.f32.xlu0 %v1196
    %v1418 = vpop.xlane.xlu0 %1417
    %1419 = vadd.xlane.f32.xlu0 %v1197
    %v1420 = vpop.xlane.xlu0 %1419
    %1421 = vadd.xlane.f32.xlu0 %v1198
    %v1422 = vpop.xlane.xlu0 %1421
    %1423 = vadd.xlane.f32.xlu0 %v1199
    %v1424 = vpop.xlane.xlu0 %1423
    %1425 = vadd.xlane.f32.xlu0 %v1200
    %v1426 = vpop.xlane.xlu0 %1425
    %1427 = vadd.xlane.f32.xlu0 %v1201
    %v1428 = vpop.xlane.xlu0 %1427
    %1429 = vadd.xlane.f32.xlu0 %v1202
    %v1430 = vpop.xlane.xlu0 %1429
    %1431 = vadd.xlane.f32.xlu0 %v1203
    %v1432 = vpop.xlane.xlu0 %1431
    %1433 = vadd.xlane.f32.xlu0 %v1204
    %v1434 = vpop.xlane.xlu0 %1433
    %1435 = vadd.xlane.f32.xlu0 %v1205
    %v1436 = vpop.xlane.xlu0 %1435
    %1437 = vadd.xlane.f32.xlu0 %v1206
    %v1438 = vpop.xlane.xlu0 %1437
    %1439 = vadd.xlane.f32.xlu0 %v1207
    %v1440 = vpop.xlane.xlu0 %1439
    %1441 = vadd.xlane.f32.xlu0 %v1208
    %v1442 = vpop.xlane.xlu0 %1441
    %1443 = vadd.xlane.f32.xlu0 %v1209
    %v1444 = vpop.xlane.xlu0 %1443
    %1445 = vadd.xlane.f32.xlu0 %v1210
    %v1446 = vpop.xlane.xlu0 %1445
    %1447 = vadd.xlane.f32.xlu0 %v1211
    %v1448 = vpop.xlane.xlu0 %1447
    %1449 = vadd.xlane.f32.xlu0 %v1212
    %v1450 = vpop.xlane.xlu0 %1449
    %1451 = vadd.xlane.f32.xlu0 %v1213
    %v1452 = vpop.xlane.xlu0 %1451
    %1453 = vadd.xlane.f32.xlu0 %v1214
    %v1454 = vpop.xlane.xlu0 %1453
    %1455 = vadd.xlane.f32.xlu0 %v1215
    %v1456 = vpop.xlane.xlu0 %1455
    %1457 = vadd.xlane.f32.xlu0 %v1216
    %v1458 = vpop.xlane.xlu0 %1457
    %1459 = vadd.xlane.f32.xlu0 %v1217
    %v1460 = vpop.xlane.xlu0 %1459
    %1461 = vadd.xlane.f32.xlu0 %v1218
    %v1462 = vpop.xlane.xlu0 %1461
    %1463 = vadd.xlane.f32.xlu0 %v1219
    %v1464 = vpop.xlane.xlu0 %1463
    %1465 = vadd.xlane.f32.xlu0 %v1220
    %v1466 = vpop.xlane.xlu0 %1465
    %1467 = vadd.xlane.f32.xlu0 %v1221
    %v1468 = vpop.xlane.xlu0 %1467
    %1469 = vadd.xlane.f32.xlu0 %v1222
    %v1470 = vpop.xlane.xlu0 %1469
    %1471 = vadd.xlane.f32.xlu0 %v1223
    %v1472 = vpop.xlane.xlu0 %1471
    %1473 = vadd.xlane.f32.xlu0 %v1224
    %v1474 = vpop.xlane.xlu0 %1473
    %1475 = vadd.xlane.f32.xlu0 %v1225
    %v1476 = vpop.xlane.xlu0 %1475
    %1477 = vadd.xlane.f32.xlu0 %v1226
    %v1478 = vpop.xlane.xlu0 %1477
    %1479 = vadd.xlane.f32.xlu0 %v1227
    %v1480 = vpop.xlane.xlu0 %1479
    %1481 = vadd.xlane.f32.xlu0 %v1228
    %v1482 = vpop.xlane.xlu0 %1481
    %1483 = vadd.xlane.f32.xlu0 %v1229
    %v1484 = vpop.xlane.xlu0 %1483
    %1485 = vadd.xlane.f32.xlu0 %v1230
    %v1486 = vpop.xlane.xlu0 %1485
    %s1487 = sld [smem:[#allocation2]]
    %v1488 = vstv %s1487
    %v1489 = vadd.f32 %v1232, %v1488
    %v1490 = vadd.f32 %v1234, %v1488
    %v1491 = vadd.f32 %v1236, %v1488
    %v1492 = vadd.f32 %v1238, %v1488
    %v1493 = vadd.f32 %v1240, %v1488
    %v1494 = vadd.f32 %v1242, %v1488
    %v1495 = vadd.f32 %v1244, %v1488
    %v1496 = vadd.f32 %v1246, %v1488
    %v1497 = vadd.f32 %v1248, %v1488
    %v1498 = vadd.f32 %v1250, %v1488
    %v1499 = vadd.f32 %v1252, %v1488
    %v1500 = vadd.f32 %v1254, %v1488
    %v1501 = vadd.f32 %v1256, %v1488
    %v1502 = vadd.f32 %v1258, %v1488
    %v1503 = vadd.f32 %v1260, %v1488
    %v1504 = vadd.f32 %v1262, %v1488
    %v1505 = vadd.f32 %v1264, %v1488
    %v1506 = vadd.f32 %v1266, %v1488
    %v1507 = vadd.f32 %v1268, %v1488
    %v1508 = vadd.f32 %v1270, %v1488
    %v1509 = vadd.f32 %v1272, %v1488
    %v1510 = vadd.f32 %v1274, %v1488
    %v1511 = vadd.f32 %v1276, %v1488
    %v1512 = vadd.f32 %v1278, %v1488
    %v1513 = vadd.f32 %v1280, %v1488
    %v1514 = vadd.f32 %v1282, %v1488
    %v1515 = vadd.f32 %v1284, %v1488
    %v1516 = vadd.f32 %v1286, %v1488
    %v1517 = vadd.f32 %v1288, %v1488
    %v1518 = vadd.f32 %v1290, %v1488
    %v1519 = vadd.f32 %v1292, %v1488
    %v1520 = vadd.f32 %v1294, %v1488
    %v1521 = vadd.f32 %v1296, %v1488
    %v1522 = vadd.f32 %v1298, %v1488
    %v1523 = vadd.f32 %v1300, %v1488
    %v1524 = vadd.f32 %v1302, %v1488
    %v1525 = vadd.f32 %v1304, %v1488
    %v1526 = vadd.f32 %v1306, %v1488
    %v1527 = vadd.f32 %v1308, %v1488
    %v1528 = vadd.f32 %v1310, %v1488
    %v1529 = vadd.f32 %v1312, %v1488
    %v1530 = vadd.f32 %v1314, %v1488
    %v1531 = vadd.f32 %v1316, %v1488
    %v1532 = vadd.f32 %v1318, %v1488
    %v1533 = vadd.f32 %v1320, %v1488
    %v1534 = vadd.f32 %v1322, %v1488
    %v1535 = vadd.f32 %v1324, %v1488
    %v1536 = vadd.f32 %v1326, %v1488
    %v1537 = vadd.f32 %v1328, %v1488
    %v1538 = vadd.f32 %v1330, %v1488
    %v1539 = vadd.f32 %v1332, %v1488
    %v1540 = vadd.f32 %v1334, %v1488
    %v1541 = vadd.f32 %v1336, %v1488
    %v1542 = vadd.f32 %v1338, %v1488
    %v1543 = vadd.f32 %v1340, %v1488
    %v1544 = vadd.f32 %v1342, %v1488
    %v1545 = vadd.f32 %v1344, %v1488
    %v1546 = vadd.f32 %v1346, %v1488
    %v1547 = vadd.f32 %v1348, %v1488
    %v1548 = vadd.f32 %v1350, %v1488
    %v1549 = vadd.f32 %v1352, %v1488
    %v1550 = vadd.f32 %v1354, %v1488
    %v1551 = vadd.f32 %v1356, %v1488
    %v1552 = vadd.f32 %v1358, %v1488
    %v1553 = vadd.f32 %v1360, %v1488
    %v1554 = vadd.f32 %v1362, %v1488
    %v1555 = vadd.f32 %v1364, %v1488
    %v1556 = vadd.f32 %v1366, %v1488
    %v1557 = vadd.f32 %v1368, %v1488
    %v1558 = vadd.f32 %v1370, %v1488
    %v1559 = vadd.f32 %v1372, %v1488
    %v1560 = vadd.f32 %v1374, %v1488
    %v1561 = vadd.f32 %v1376, %v1488
    %v1562 = vadd.f32 %v1378, %v1488
    %v1563 = vadd.f32 %v1380, %v1488
    %v1564 = vadd.f32 %v1382, %v1488
    %v1565 = vadd.f32 %v1384, %v1488
    %v1566 = vadd.f32 %v1386, %v1488
    %v1567 = vadd.f32 %v1388, %v1488
    %v1568 = vadd.f32 %v1390, %v1488
    %v1569 = vadd.f32 %v1392, %v1488
    %v1570 = vadd.f32 %v1394, %v1488
    %v1571 = vadd.f32 %v1396, %v1488
    %v1572 = vadd.f32 %v1398, %v1488
    %v1573 = vadd.f32 %v1400, %v1488
    %v1574 = vadd.f32 %v1402, %v1488
    %v1575 = vadd.f32 %v1404, %v1488
    %v1576 = vadd.f32 %v1406, %v1488
    %v1577 = vadd.f32 %v1408, %v1488
    %v1578 = vadd.f32 %v1410, %v1488
    %v1579 = vadd.f32 %v1412, %v1488
    %v1580 = vadd.f32 %v1414, %v1488
    %v1581 = vadd.f32 %v1416, %v1488
    %v1582 = vadd.f32 %v1418, %v1488
    %v1583 = vadd.f32 %v1420, %v1488
    %v1584 = vadd.f32 %v1422, %v1488
    %v1585 = vadd.f32 %v1424, %v1488
    %v1586 = vadd.f32 %v1426, %v1488
    %v1587 = vadd.f32 %v1428, %v1488
    %v1588 = vadd.f32 %v1430, %v1488
    %v1589 = vadd.f32 %v1432, %v1488
    %v1590 = vadd.f32 %v1434, %v1488
    %v1591 = vadd.f32 %v1436, %v1488
    %v1592 = vadd.f32 %v1438, %v1488
    %v1593 = vadd.f32 %v1440, %v1488
    %v1594 = vadd.f32 %v1442, %v1488
    %v1595 = vadd.f32 %v1444, %v1488
    %v1596 = vadd.f32 %v1446, %v1488
    %v1597 = vadd.f32 %v1448, %v1488
    %v1598 = vadd.f32 %v1450, %v1488
    %v1599 = vadd.f32 %v1452, %v1488
    %v1600 = vadd.f32 %v1454, %v1488
    %v1601 = vadd.f32 %v1456, %v1488
    %v1602 = vadd.f32 %v1458, %v1488
    %v1603 = vadd.f32 %v1460, %v1488
    %v1604 = vadd.f32 %v1462, %v1488
    %v1605 = vadd.f32 %v1464, %v1488
    %v1606 = vadd.f32 %v1466, %v1488
    %v1607 = vadd.f32 %v1468, %v1488
    %v1608 = vadd.f32 %v1470, %v1488
    %v1609 = vadd.f32 %v1472, %v1488
    %v1610 = vadd.f32 %v1474, %v1488
    %v1611 = vadd.f32 %v1476, %v1488
    %v1612 = vadd.f32 %v1478, %v1488
    %v1613 = vadd.f32 %v1480, %v1488
    %v1614 = vadd.f32 %v1482, %v1488
    %v1615 = vadd.f32 %v1484, %v1488
    %v1616 = vadd.f32 %v1486, %v1488
    %v1617 = vtanh.pop %v1489
    %v1618 = vtanh.pop %v1490
    %v1619 = vtanh.pop %v1491
    %v1620 = vtanh.pop %v1492
    %v1621 = vtanh.pop %v1493
    %v1622 = vtanh.pop %v1494
    %v1623 = vtanh.pop %v1495
    %v1624 = vtanh.pop %v1496
    %v1625 = vtanh.pop %v1497
    %v1626 = vtanh.pop %v1498
    %v1627 = vtanh.pop %v1499
    %v1628 = vtanh.pop %v1500
    %v1629 = vtanh.pop %v1501
    %v1630 = vtanh.pop %v1502
    %v1631 = vtanh.pop %v1503
    %v1632 = vtanh.pop %v1504
    %v1633 = vtanh.pop %v1505
    %v1634 = vtanh.pop %v1506
    %v1635 = vtanh.pop %v1507
    %v1636 = vtanh.pop %v1508
    %v1637 = vtanh.pop %v1509
    %v1638 = vtanh.pop %v1510
    %v1639 = vtanh.pop %v1511
    %v1640 = vtanh.pop %v1512
    %v1641 = vtanh.pop %v1513
    %v1642 = vtanh.pop %v1514
    %v1643 = vtanh.pop %v1515
    %v1644 = vtanh.pop %v1516
    %v1645 = vtanh.pop %v1517
    %v1646 = vtanh.pop %v1518
    %v1647 = vtanh.pop %v1519
    %v1648 = vtanh.pop %v1520
    %v1649 = vtanh.pop %v1521
    %v1650 = vtanh.pop %v1522
    %v1651 = vtanh.pop %v1523
    %v1652 = vtanh.pop %v1524
    %v1653 = vtanh.pop %v1525
    %v1654 = vtanh.pop %v1526
    %v1655 = vtanh.pop %v1527
    %v1656 = vtanh.pop %v1528
    %v1657 = vtanh.pop %v1529
    %v1658 = vtanh.pop %v1530
    %v1659 = vtanh.pop %v1531
    %v1660 = vtanh.pop %v1532
    %v1661 = vtanh.pop %v1533
    %v1662 = vtanh.pop %v1534
    %v1663 = vtanh.pop %v1535
    %v1664 = vtanh.pop %v1536
    %v1665 = vtanh.pop %v1537
    %v1666 = vtanh.pop %v1538
    %v1667 = vtanh.pop %v1539
    %v1668 = vtanh.pop %v1540
    %v1669 = vtanh.pop %v1541
    %v1670 = vtanh.pop %v1542
    %v1671 = vtanh.pop %v1543
    %v1672 = vtanh.pop %v1544
    %v1673 = vtanh.pop %v1545
    %v1674 = vtanh.pop %v1546
    %v1675 = vtanh.pop %v1547
    %v1676 = vtanh.pop %v1548
    %v1677 = vtanh.pop %v1549
    %v1678 = vtanh.pop %v1550
    %v1679 = vtanh.pop %v1551
    %v1680 = vtanh.pop %v1552
    %v1681 = vtanh.pop %v1553
    %v1682 = vtanh.pop %v1554
    %v1683 = vtanh.pop %v1555
    %v1684 = vtanh.pop %v1556
    %v1685 = vtanh.pop %v1557
    %v1686 = vtanh.pop %v1558
    %v1687 = vtanh.pop %v1559
    %v1688 = vtanh.pop %v1560
    %v1689 = vtanh.pop %v1561
    %v1690 = vtanh.pop %v1562
    %v1691 = vtanh.pop %v1563
    %v1692 = vtanh.pop %v1564
    %v1693 = vtanh.pop %v1565
    %v1694 = vtanh.pop %v1566
    %v1695 = vtanh.pop %v1567
    %v1696 = vtanh.pop %v1568
    %v1697 = vtanh.pop %v1569
    %v1698 = vtanh.pop %v1570
    %v1699 = vtanh.pop %v1571
    %v1700 = vtanh.pop %v1572
    %v1701 = vtanh.pop %v1573
    %v1702 = vtanh.pop %v1574
    %v1703 = vtanh.pop %v1575
    %v1704 = vtanh.pop %v1576
    %v1705 = vtanh.pop %v1577
    %v1706 = vtanh.pop %v1578
    %v1707 = vtanh.pop %v1579
    %v1708 = vtanh.pop %v1580
    %v1709 = vtanh.pop %v1581
    %v1710 = vtanh.pop %v1582
    %v1711 = vtanh.pop %v1583
    %v1712 = vtanh.pop %v1584
    %v1713 = vtanh.pop %v1585
    %v1714 = vtanh.pop %v1586
    %v1715 = vtanh.pop %v1587
    %v1716 = vtanh.pop %v1588
    %v1717 = vtanh.pop %v1589
    %v1718 = vtanh.pop %v1590
    %v1719 = vtanh.pop %v1591
    %v1720 = vtanh.pop %v1592
    %v1721 = vtanh.pop %v1593
    %v1722 = vtanh.pop %v1594
    %v1723 = vtanh.pop %v1595
    %v1724 = vtanh.pop %v1596
    %v1725 = vtanh.pop %v1597
    %v1726 = vtanh.pop %v1598
    %v1727 = vtanh.pop %v1599
    %v1728 = vtanh.pop %v1600
    %v1729 = vtanh.pop %v1601
    %v1730 = vtanh.pop %v1602
    %v1731 = vtanh.pop %v1603
    %v1732 = vtanh.pop %v1604
    %v1733 = vtanh.pop %v1605
    %v1734 = vtanh.pop %v1606
    %v1735 = vtanh.pop %v1607
    %v1736 = vtanh.pop %v1608
    %v1737 = vtanh.pop %v1609
    %v1738 = vtanh.pop %v1610
    %v1739 = vtanh.pop %v1611
    %v1740 = vtanh.pop %v1612
    %v1741 = vtanh.pop %v1613
    %v1742 = vtanh.pop %v1614
    %v1743 = vtanh.pop %v1615
    %v1744 = vtanh.pop %v1616
    %v1873 = vperm.slane %v1617, 0
    %v1874 = vperm.slane %v1617, 1
    %v1875 = vperm.slane %v1617, 2
    %v1876 = vperm.slane %v1617, 3
    %v1877 = vperm.slane %v1617, 4
    %v1878 = vperm.slane %v1617, 5
    %v1879 = vperm.slane %v1617, 6
    %v1880 = vperm.slane %v1617, 7
    %v1881 = vperm.slane %v1618, 0
    %v1882 = vperm.slane %v1618, 1
    %v1883 = vperm.slane %v1618, 2
    %v1884 = vperm.slane %v1618, 3
    %v1885 = vperm.slane %v1618, 4
    %v1886 = vperm.slane %v1618, 5
    %v1887 = vperm.slane %v1618, 6
    %v1888 = vperm.slane %v1618, 7
    %v1889 = vperm.slane %v1619, 0
    %v1890 = vperm.slane %v1619, 1
    %v1891 = vperm.slane %v1619, 2
    %v1892 = vperm.slane %v1619, 3
    %v1893 = vperm.slane %v1619, 4
    %v1894 = vperm.slane %v1619, 5
    %v1895 = vperm.slane %v1619, 6
    %v1896 = vperm.slane %v1619, 7
    %v1897 = vperm.slane %v1620, 0
    %v1898 = vperm.slane %v1620, 1
    %v1899 = vperm.slane %v1620, 2
    %v1900 = vperm.slane %v1620, 3
    %v1901 = vperm.slane %v1620, 4
    %v1902 = vperm.slane %v1620, 5
    %v1903 = vperm.slane %v1620, 6
    %v1904 = vperm.slane %v1620, 7
    %v1905 = vperm.slane %v1621, 0
    %v1906 = vperm.slane %v1621, 1
    %v1907 = vperm.slane %v1621, 2
    %v1908 = vperm.slane %v1621, 3
    %v1909 = vperm.slane %v1621, 4
    %v1910 = vperm.slane %v1621, 5
    %v1911 = vperm.slane %v1621, 6
    %v1912 = vperm.slane %v1621, 7
    %v1913 = vperm.slane %v1622, 0
    %v1914 = vperm.slane %v1622, 1
    %v1915 = vperm.slane %v1622, 2
    %v1916 = vperm.slane %v1622, 3
    %v1917 = vperm.slane %v1622, 4
    %v1918 = vperm.slane %v1622, 5
    %v1919 = vperm.slane %v1622, 6
    %v1920 = vperm.slane %v1622, 7
    %v1921 = vperm.slane %v1623, 0
    %v1922 = vperm.slane %v1623, 1
    %v1923 = vperm.slane %v1623, 2
    %v1924 = vperm.slane %v1623, 3
    %v1925 = vperm.slane %v1623, 4
    %v1926 = vperm.slane %v1623, 5
    %v1927 = vperm.slane %v1623, 6
    %v1928 = vperm.slane %v1623, 7
    %v1929 = vperm.slane %v1624, 0
    %v1930 = vperm.slane %v1624, 1
    %v1931 = vperm.slane %v1624, 2
    %v1932 = vperm.slane %v1624, 3
    %v1933 = vperm.slane %v1624, 4
    %v1934 = vperm.slane %v1624, 5
    %v1935 = vperm.slane %v1624, 6
    %v1936 = vperm.slane %v1624, 7
    %v1937 = vperm.slane %v1625, 0
    %v1938 = vperm.slane %v1625, 1
    %v1939 = vperm.slane %v1625, 2
    %v1940 = vperm.slane %v1625, 3
    %v1941 = vperm.slane %v1625, 4
    %v1942 = vperm.slane %v1625, 5
    %v1943 = vperm.slane %v1625, 6
    %v1944 = vperm.slane %v1625, 7
    %v1945 = vperm.slane %v1626, 0
    %v1946 = vperm.slane %v1626, 1
    %v1947 = vperm.slane %v1626, 2
    %v1948 = vperm.slane %v1626, 3
    %v1949 = vperm.slane %v1626, 4
    %v1950 = vperm.slane %v1626, 5
    %v1951 = vperm.slane %v1626, 6
    %v1952 = vperm.slane %v1626, 7
    %v1953 = vperm.slane %v1627, 0
    %v1954 = vperm.slane %v1627, 1
    %v1955 = vperm.slane %v1627, 2
    %v1956 = vperm.slane %v1627, 3
    %v1957 = vperm.slane %v1627, 4
    %v1958 = vperm.slane %v1627, 5
    %v1959 = vperm.slane %v1627, 6
    %v1960 = vperm.slane %v1627, 7
    %v1961 = vperm.slane %v1628, 0
    %v1962 = vperm.slane %v1628, 1
    %v1963 = vperm.slane %v1628, 2
    %v1964 = vperm.slane %v1628, 3
    %v1965 = vperm.slane %v1628, 4
    %v1966 = vperm.slane %v1628, 5
    %v1967 = vperm.slane %v1628, 6
    %v1968 = vperm.slane %v1628, 7
    %v1969 = vperm.slane %v1629, 0
    %v1970 = vperm.slane %v1629, 1
    %v1971 = vperm.slane %v1629, 2
    %v1972 = vperm.slane %v1629, 3
    %v1973 = vperm.slane %v1629, 4
    %v1974 = vperm.slane %v1629, 5
    %v1975 = vperm.slane %v1629, 6
    %v1976 = vperm.slane %v1629, 7
    %v1977 = vperm.slane %v1630, 0
    %v1978 = vperm.slane %v1630, 1
    %v1979 = vperm.slane %v1630, 2
    %v1980 = vperm.slane %v1630, 3
    %v1981 = vperm.slane %v1630, 4
    %v1982 = vperm.slane %v1630, 5
    %v1983 = vperm.slane %v1630, 6
    %v1984 = vperm.slane %v1630, 7
    %v1985 = vperm.slane %v1631, 0
    %v1986 = vperm.slane %v1631, 1
    %v1987 = vperm.slane %v1631, 2
    %v1988 = vperm.slane %v1631, 3
    %v1989 = vperm.slane %v1631, 4
    %v1990 = vperm.slane %v1631, 5
    %v1991 = vperm.slane %v1631, 6
    %v1992 = vperm.slane %v1631, 7
    %v1993 = vperm.slane %v1632, 0
    %v1994 = vperm.slane %v1632, 1
    %v1995 = vperm.slane %v1632, 2
    %v1996 = vperm.slane %v1632, 3
    %v1997 = vperm.slane %v1632, 4
    %v1998 = vperm.slane %v1632, 5
    %v1999 = vperm.slane %v1632, 6
    %v2000 = vperm.slane %v1632, 7
    %v2001 = vperm.slane %v1633, 0
    %v2002 = vperm.slane %v1633, 1
    %v2003 = vperm.slane %v1633, 2
    %v2004 = vperm.slane %v1633, 3
    %v2005 = vperm.slane %v1633, 4
    %v2006 = vperm.slane %v1633, 5
    %v2007 = vperm.slane %v1633, 6
    %v2008 = vperm.slane %v1633, 7
    %v2009 = vperm.slane %v1634, 0
    %v2010 = vperm.slane %v1634, 1
    %v2011 = vperm.slane %v1634, 2
    %v2012 = vperm.slane %v1634, 3
    %v2013 = vperm.slane %v1634, 4
    %v2014 = vperm.slane %v1634, 5
    %v2015 = vperm.slane %v1634, 6
    %v2016 = vperm.slane %v1634, 7
    %v2017 = vperm.slane %v1635, 0
    %v2018 = vperm.slane %v1635, 1
    %v2019 = vperm.slane %v1635, 2
    %v2020 = vperm.slane %v1635, 3
    %v2021 = vperm.slane %v1635, 4
    %v2022 = vperm.slane %v1635, 5
    %v2023 = vperm.slane %v1635, 6
    %v2024 = vperm.slane %v1635, 7
    %v2025 = vperm.slane %v1636, 0
    %v2026 = vperm.slane %v1636, 1
    %v2027 = vperm.slane %v1636, 2
    %v2028 = vperm.slane %v1636, 3
    %v2029 = vperm.slane %v1636, 4
    %v2030 = vperm.slane %v1636, 5
    %v2031 = vperm.slane %v1636, 6
    %v2032 = vperm.slane %v1636, 7
    %v2033 = vperm.slane %v1637, 0
    %v2034 = vperm.slane %v1637, 1
    %v2035 = vperm.slane %v1637, 2
    %v2036 = vperm.slane %v1637, 3
    %v2037 = vperm.slane %v1637, 4
    %v2038 = vperm.slane %v1637, 5
    %v2039 = vperm.slane %v1637, 6
    %v2040 = vperm.slane %v1637, 7
    %v2041 = vperm.slane %v1638, 0
    %v2042 = vperm.slane %v1638, 1
    %v2043 = vperm.slane %v1638, 2
    %v2044 = vperm.slane %v1638, 3
    %v2045 = vperm.slane %v1638, 4
    %v2046 = vperm.slane %v1638, 5
    %v2047 = vperm.slane %v1638, 6
    %v2048 = vperm.slane %v1638, 7
    %v2049 = vperm.slane %v1639, 0
    %v2050 = vperm.slane %v1639, 1
    %v2051 = vperm.slane %v1639, 2
    %v2052 = vperm.slane %v1639, 3
    %v2053 = vperm.slane %v1639, 4
    %v2054 = vperm.slane %v1639, 5
    %v2055 = vperm.slane %v1639, 6
    %v2056 = vperm.slane %v1639, 7
    %v2057 = vperm.slane %v1640, 0
    %v2058 = vperm.slane %v1640, 1
    %v2059 = vperm.slane %v1640, 2
    %v2060 = vperm.slane %v1640, 3
    %v2061 = vperm.slane %v1640, 4
    %v2062 = vperm.slane %v1640, 5
    %v2063 = vperm.slane %v1640, 6
    %v2064 = vperm.slane %v1640, 7
    %v2065 = vperm.slane %v1641, 0
    %v2066 = vperm.slane %v1641, 1
    %v2067 = vperm.slane %v1641, 2
    %v2068 = vperm.slane %v1641, 3
    %v2069 = vperm.slane %v1641, 4
    %v2070 = vperm.slane %v1641, 5
    %v2071 = vperm.slane %v1641, 6
    %v2072 = vperm.slane %v1641, 7
    %v2073 = vperm.slane %v1642, 0
    %v2074 = vperm.slane %v1642, 1
    %v2075 = vperm.slane %v1642, 2
    %v2076 = vperm.slane %v1642, 3
    %v2077 = vperm.slane %v1642, 4
    %v2078 = vperm.slane %v1642, 5
    %v2079 = vperm.slane %v1642, 6
    %v2080 = vperm.slane %v1642, 7
    %v2081 = vperm.slane %v1643, 0
    %v2082 = vperm.slane %v1643, 1
    %v2083 = vperm.slane %v1643, 2
    %v2084 = vperm.slane %v1643, 3
    %v2085 = vperm.slane %v1643, 4
    %v2086 = vperm.slane %v1643, 5
    %v2087 = vperm.slane %v1643, 6
    %v2088 = vperm.slane %v1643, 7
    %v2089 = vperm.slane %v1644, 0
    %v2090 = vperm.slane %v1644, 1
    %v2091 = vperm.slane %v1644, 2
    %v2092 = vperm.slane %v1644, 3
    %v2093 = vperm.slane %v1644, 4
    %v2094 = vperm.slane %v1644, 5
    %v2095 = vperm.slane %v1644, 6
    %v2096 = vperm.slane %v1644, 7
    %v2097 = vperm.slane %v1645, 0
    %v2098 = vperm.slane %v1645, 1
    %v2099 = vperm.slane %v1645, 2
    %v2100 = vperm.slane %v1645, 3
    %v2101 = vperm.slane %v1645, 4
    %v2102 = vperm.slane %v1645, 5
    %v2103 = vperm.slane %v1645, 6
    %v2104 = vperm.slane %v1645, 7
    %v2105 = vperm.slane %v1646, 0
    %v2106 = vperm.slane %v1646, 1
    %v2107 = vperm.slane %v1646, 2
    %v2108 = vperm.slane %v1646, 3
    %v2109 = vperm.slane %v1646, 4
    %v2110 = vperm.slane %v1646, 5
    %v2111 = vperm.slane %v1646, 6
    %v2112 = vperm.slane %v1646, 7
    %v2113 = vperm.slane %v1647, 0
    %v2114 = vperm.slane %v1647, 1
    %v2115 = vperm.slane %v1647, 2
    %v2116 = vperm.slane %v1647, 3
    %v2117 = vperm.slane %v1647, 4
    %v2118 = vperm.slane %v1647, 5
    %v2119 = vperm.slane %v1647, 6
    %v2120 = vperm.slane %v1647, 7
    %v2121 = vperm.slane %v1648, 0
    %v2122 = vperm.slane %v1648, 1
    %v2123 = vperm.slane %v1648, 2
    %v2124 = vperm.slane %v1648, 3
    %v2125 = vperm.slane %v1648, 4
    %v2126 = vperm.slane %v1648, 5
    %v2127 = vperm.slane %v1648, 6
    %v2128 = vperm.slane %v1648, 7
    %v2129 = vperm.slane %v1649, 0
    %v2130 = vperm.slane %v1649, 1
    %v2131 = vperm.slane %v1649, 2
    %v2132 = vperm.slane %v1649, 3
    %v2133 = vperm.slane %v1649, 4
    %v2134 = vperm.slane %v1649, 5
    %v2135 = vperm.slane %v1649, 6
    %v2136 = vperm.slane %v1649, 7
    %v2137 = vperm.slane %v1650, 0
    %v2138 = vperm.slane %v1650, 1
    %v2139 = vperm.slane %v1650, 2
    %v2140 = vperm.slane %v1650, 3
    %v2141 = vperm.slane %v1650, 4
    %v2142 = vperm.slane %v1650, 5
    %v2143 = vperm.slane %v1650, 6
    %v2144 = vperm.slane %v1650, 7
    %v2145 = vperm.slane %v1651, 0
    %v2146 = vperm.slane %v1651, 1
    %v2147 = vperm.slane %v1651, 2
    %v2148 = vperm.slane %v1651, 3
    %v2149 = vperm.slane %v1651, 4
    %v2150 = vperm.slane %v1651, 5
    %v2151 = vperm.slane %v1651, 6
    %v2152 = vperm.slane %v1651, 7
    %v2153 = vperm.slane %v1652, 0
    %v2154 = vperm.slane %v1652, 1
    %v2155 = vperm.slane %v1652, 2
    %v2156 = vperm.slane %v1652, 3
    %v2157 = vperm.slane %v1652, 4
    %v2158 = vperm.slane %v1652, 5
    %v2159 = vperm.slane %v1652, 6
    %v2160 = vperm.slane %v1652, 7
    %v2161 = vperm.slane %v1653, 0
    %v2162 = vperm.slane %v1653, 1
    %v2163 = vperm.slane %v1653, 2
    %v2164 = vperm.slane %v1653, 3
    %v2165 = vperm.slane %v1653, 4
    %v2166 = vperm.slane %v1653, 5
    %v2167 = vperm.slane %v1653, 6
    %v2168 = vperm.slane %v1653, 7
    %v2169 = vperm.slane %v1654, 0
    %v2170 = vperm.slane %v1654, 1
    %v2171 = vperm.slane %v1654, 2
    %v2172 = vperm.slane %v1654, 3
    %v2173 = vperm.slane %v1654, 4
    %v2174 = vperm.slane %v1654, 5
    %v2175 = vperm.slane %v1654, 6
    %v2176 = vperm.slane %v1654, 7
    %v2177 = vperm.slane %v1655, 0
    %v2178 = vperm.slane %v1655, 1
    %v2179 = vperm.slane %v1655, 2
    %v2180 = vperm.slane %v1655, 3
    %v2181 = vperm.slane %v1655, 4
    %v2182 = vperm.slane %v1655, 5
    %v2183 = vperm.slane %v1655, 6
    %v2184 = vperm.slane %v1655, 7
    %v2185 = vperm.slane %v1656, 0
    %v2186 = vperm.slane %v1656, 1
    %v2187 = vperm.slane %v1656, 2
    %v2188 = vperm.slane %v1656, 3
    %v2189 = vperm.slane %v1656, 4
    %v2190 = vperm.slane %v1656, 5
    %v2191 = vperm.slane %v1656, 6
    %v2192 = vperm.slane %v1656, 7
    %v2193 = vperm.slane %v1657, 0
    %v2194 = vperm.slane %v1657, 1
    %v2195 = vperm.slane %v1657, 2
    %v2196 = vperm.slane %v1657, 3
    %v2197 = vperm.slane %v1657, 4
    %v2198 = vperm.slane %v1657, 5
    %v2199 = vperm.slane %v1657, 6
    %v2200 = vperm.slane %v1657, 7
    %v2201 = vperm.slane %v1658, 0
    %v2202 = vperm.slane %v1658, 1
    %v2203 = vperm.slane %v1658, 2
    %v2204 = vperm.slane %v1658, 3
    %v2205 = vperm.slane %v1658, 4
    %v2206 = vperm.slane %v1658, 5
    %v2207 = vperm.slane %v1658, 6
    %v2208 = vperm.slane %v1658, 7
    %v2209 = vperm.slane %v1659, 0
    %v2210 = vperm.slane %v1659, 1
    %v2211 = vperm.slane %v1659, 2
    %v2212 = vperm.slane %v1659, 3
    %v2213 = vperm.slane %v1659, 4
    %v2214 = vperm.slane %v1659, 5
    %v2215 = vperm.slane %v1659, 6
    %v2216 = vperm.slane %v1659, 7
    %v2217 = vperm.slane %v1660, 0
    %v2218 = vperm.slane %v1660, 1
    %v2219 = vperm.slane %v1660, 2
    %v2220 = vperm.slane %v1660, 3
    %v2221 = vperm.slane %v1660, 4
    %v2222 = vperm.slane %v1660, 5
    %v2223 = vperm.slane %v1660, 6
    %v2224 = vperm.slane %v1660, 7
    %v2225 = vperm.slane %v1661, 0
    %v2226 = vperm.slane %v1661, 1
    %v2227 = vperm.slane %v1661, 2
    %v2228 = vperm.slane %v1661, 3
    %v2229 = vperm.slane %v1661, 4
    %v2230 = vperm.slane %v1661, 5
    %v2231 = vperm.slane %v1661, 6
    %v2232 = vperm.slane %v1661, 7
    %v2233 = vperm.slane %v1662, 0
    %v2234 = vperm.slane %v1662, 1
    %v2235 = vperm.slane %v1662, 2
    %v2236 = vperm.slane %v1662, 3
    %v2237 = vperm.slane %v1662, 4
    %v2238 = vperm.slane %v1662, 5
    %v2239 = vperm.slane %v1662, 6
    %v2240 = vperm.slane %v1662, 7
    %v2241 = vperm.slane %v1663, 0
    %v2242 = vperm.slane %v1663, 1
    %v2243 = vperm.slane %v1663, 2
    %v2244 = vperm.slane %v1663, 3
    %v2245 = vperm.slane %v1663, 4
    %v2246 = vperm.slane %v1663, 5
    %v2247 = vperm.slane %v1663, 6
    %v2248 = vperm.slane %v1663, 7
    %v2249 = vperm.slane %v1664, 0
    %v2250 = vperm.slane %v1664, 1
    %v2251 = vperm.slane %v1664, 2
    %v2252 = vperm.slane %v1664, 3
    %v2253 = vperm.slane %v1664, 4
    %v2254 = vperm.slane %v1664, 5
    %v2255 = vperm.slane %v1664, 6
    %v2256 = vperm.slane %v1664, 7
    %v2257 = vperm.slane %v1665, 0
    %v2258 = vperm.slane %v1665, 1
    %v2259 = vperm.slane %v1665, 2
    %v2260 = vperm.slane %v1665, 3
    %v2261 = vperm.slane %v1665, 4
    %v2262 = vperm.slane %v1665, 5
    %v2263 = vperm.slane %v1665, 6
    %v2264 = vperm.slane %v1665, 7
    %v2265 = vperm.slane %v1666, 0
    %v2266 = vperm.slane %v1666, 1
    %v2267 = vperm.slane %v1666, 2
    %v2268 = vperm.slane %v1666, 3
    %v2269 = vperm.slane %v1666, 4
    %v2270 = vperm.slane %v1666, 5
    %v2271 = vperm.slane %v1666, 6
    %v2272 = vperm.slane %v1666, 7
    %v2273 = vperm.slane %v1667, 0
    %v2274 = vperm.slane %v1667, 1
    %v2275 = vperm.slane %v1667, 2
    %v2276 = vperm.slane %v1667, 3
    %v2277 = vperm.slane %v1667, 4
    %v2278 = vperm.slane %v1667, 5
    %v2279 = vperm.slane %v1667, 6
    %v2280 = vperm.slane %v1667, 7
    %v2281 = vperm.slane %v1668, 0
    %v2282 = vperm.slane %v1668, 1
    %v2283 = vperm.slane %v1668, 2
    %v2284 = vperm.slane %v1668, 3
    %v2285 = vperm.slane %v1668, 4
    %v2286 = vperm.slane %v1668, 5
    %v2287 = vperm.slane %v1668, 6
    %v2288 = vperm.slane %v1668, 7
    %v2289 = vperm.slane %v1669, 0
    %v2290 = vperm.slane %v1669, 1
    %v2291 = vperm.slane %v1669, 2
    %v2292 = vperm.slane %v1669, 3
    %v2293 = vperm.slane %v1669, 4
    %v2294 = vperm.slane %v1669, 5
    %v2295 = vperm.slane %v1669, 6
    %v2296 = vperm.slane %v1669, 7
    %v2297 = vperm.slane %v1670, 0
    %v2298 = vperm.slane %v1670, 1
    %v2299 = vperm.slane %v1670, 2
    %v2300 = vperm.slane %v1670, 3
    %v2301 = vperm.slane %v1670, 4
    %v2302 = vperm.slane %v1670, 5
    %v2303 = vperm.slane %v1670, 6
    %v2304 = vperm.slane %v1670, 7
    %v2305 = vperm.slane %v1671, 0
    %v2306 = vperm.slane %v1671, 1
    %v2307 = vperm.slane %v1671, 2
    %v2308 = vperm.slane %v1671, 3
    %v2309 = vperm.slane %v1671, 4
    %v2310 = vperm.slane %v1671, 5
    %v2311 = vperm.slane %v1671, 6
    %v2312 = vperm.slane %v1671, 7
    %v2313 = vperm.slane %v1672, 0
    %v2314 = vperm.slane %v1672, 1
    %v2315 = vperm.slane %v1672, 2
    %v2316 = vperm.slane %v1672, 3
    %v2317 = vperm.slane %v1672, 4
    %v2318 = vperm.slane %v1672, 5
    %v2319 = vperm.slane %v1672, 6
    %v2320 = vperm.slane %v1672, 7
    %v2321 = vperm.slane %v1673, 0
    %v2322 = vperm.slane %v1673, 1
    %v2323 = vperm.slane %v1673, 2
    %v2324 = vperm.slane %v1673, 3
    %v2325 = vperm.slane %v1673, 4
    %v2326 = vperm.slane %v1673, 5
    %v2327 = vperm.slane %v1673, 6
    %v2328 = vperm.slane %v1673, 7
    %v2329 = vperm.slane %v1674, 0
    %v2330 = vperm.slane %v1674, 1
    %v2331 = vperm.slane %v1674, 2
    %v2332 = vperm.slane %v1674, 3
    %v2333 = vperm.slane %v1674, 4
    %v2334 = vperm.slane %v1674, 5
    %v2335 = vperm.slane %v1674, 6
    %v2336 = vperm.slane %v1674, 7
    %v2337 = vperm.slane %v1675, 0
    %v2338 = vperm.slane %v1675, 1
    %v2339 = vperm.slane %v1675, 2
    %v2340 = vperm.slane %v1675, 3
    %v2341 = vperm.slane %v1675, 4
    %v2342 = vperm.slane %v1675, 5
    %v2343 = vperm.slane %v1675, 6
    %v2344 = vperm.slane %v1675, 7
    %v2345 = vperm.slane %v1676, 0
    %v2346 = vperm.slane %v1676, 1
    %v2347 = vperm.slane %v1676, 2
    %v2348 = vperm.slane %v1676, 3
    %v2349 = vperm.slane %v1676, 4
    %v2350 = vperm.slane %v1676, 5
    %v2351 = vperm.slane %v1676, 6
    %v2352 = vperm.slane %v1676, 7
    %v2353 = vperm.slane %v1677, 0
    %v2354 = vperm.slane %v1677, 1
    %v2355 = vperm.slane %v1677, 2
    %v2356 = vperm.slane %v1677, 3
    %v2357 = vperm.slane %v1677, 4
    %v2358 = vperm.slane %v1677, 5
    %v2359 = vperm.slane %v1677, 6
    %v2360 = vperm.slane %v1677, 7
    %v2361 = vperm.slane %v1678, 0
    %v2362 = vperm.slane %v1678, 1
    %v2363 = vperm.slane %v1678, 2
    %v2364 = vperm.slane %v1678, 3
    %v2365 = vperm.slane %v1678, 4
    %v2366 = vperm.slane %v1678, 5
    %v2367 = vperm.slane %v1678, 6
    %v2368 = vperm.slane %v1678, 7
    %v2369 = vperm.slane %v1679, 0
    %v2370 = vperm.slane %v1679, 1
    %v2371 = vperm.slane %v1679, 2
    %v2372 = vperm.slane %v1679, 3
    %v2373 = vperm.slane %v1679, 4
    %v2374 = vperm.slane %v1679, 5
    %v2375 = vperm.slane %v1679, 6
    %v2376 = vperm.slane %v1679, 7
    %v2377 = vperm.slane %v1680, 0
    %v2378 = vperm.slane %v1680, 1
    %v2379 = vperm.slane %v1680, 2
    %v2380 = vperm.slane %v1680, 3
    %v2381 = vperm.slane %v1680, 4
    %v2382 = vperm.slane %v1680, 5
    %v2383 = vperm.slane %v1680, 6
    %v2384 = vperm.slane %v1680, 7
    %v2385 = vperm.slane %v1681, 0
    %v2386 = vperm.slane %v1681, 1
    %v2387 = vperm.slane %v1681, 2
    %v2388 = vperm.slane %v1681, 3
    %v2389 = vperm.slane %v1681, 4
    %v2390 = vperm.slane %v1681, 5
    %v2391 = vperm.slane %v1681, 6
    %v2392 = vperm.slane %v1681, 7
    %v2393 = vperm.slane %v1682, 0
    %v2394 = vperm.slane %v1682, 1
    %v2395 = vperm.slane %v1682, 2
    %v2396 = vperm.slane %v1682, 3
    %v2397 = vperm.slane %v1682, 4
    %v2398 = vperm.slane %v1682, 5
    %v2399 = vperm.slane %v1682, 6
    %v2400 = vperm.slane %v1682, 7
    %v2401 = vperm.slane %v1683, 0
    %v2402 = vperm.slane %v1683, 1
    %v2403 = vperm.slane %v1683, 2
    %v2404 = vperm.slane %v1683, 3
    %v2405 = vperm.slane %v1683, 4
    %v2406 = vperm.slane %v1683, 5
    %v2407 = vperm.slane %v1683, 6
    %v2408 = vperm.slane %v1683, 7
    %v2409 = vperm.slane %v1684, 0
    %v2410 = vperm.slane %v1684, 1
    %v2411 = vperm.slane %v1684, 2
    %v2412 = vperm.slane %v1684, 3
    %v2413 = vperm.slane %v1684, 4
    %v2414 = vperm.slane %v1684, 5
    %v2415 = vperm.slane %v1684, 6
    %v2416 = vperm.slane %v1684, 7
    %v2417 = vperm.slane %v1685, 0
    %v2418 = vperm.slane %v1685, 1
    %v2419 = vperm.slane %v1685, 2
    %v2420 = vperm.slane %v1685, 3
    %v2421 = vperm.slane %v1685, 4
    %v2422 = vperm.slane %v1685, 5
    %v2423 = vperm.slane %v1685, 6
    %v2424 = vperm.slane %v1685, 7
    %v2425 = vperm.slane %v1686, 0
    %v2426 = vperm.slane %v1686, 1
    %v2427 = vperm.slane %v1686, 2
    %v2428 = vperm.slane %v1686, 3
    %v2429 = vperm.slane %v1686, 4
    %v2430 = vperm.slane %v1686, 5
    %v2431 = vperm.slane %v1686, 6
    %v2432 = vperm.slane %v1686, 7
    %v2433 = vperm.slane %v1687, 0
    %v2434 = vperm.slane %v1687, 1
    %v2435 = vperm.slane %v1687, 2
    %v2436 = vperm.slane %v1687, 3
    %v2437 = vperm.slane %v1687, 4
    %v2438 = vperm.slane %v1687, 5
    %v2439 = vperm.slane %v1687, 6
    %v2440 = vperm.slane %v1687, 7
    %v2441 = vperm.slane %v1688, 0
    %v2442 = vperm.slane %v1688, 1
    %v2443 = vperm.slane %v1688, 2
    %v2444 = vperm.slane %v1688, 3
    %v2445 = vperm.slane %v1688, 4
    %v2446 = vperm.slane %v1688, 5
    %v2447 = vperm.slane %v1688, 6
    %v2448 = vperm.slane %v1688, 7
    %v2449 = vperm.slane %v1689, 0
    %v2450 = vperm.slane %v1689, 1
    %v2451 = vperm.slane %v1689, 2
    %v2452 = vperm.slane %v1689, 3
    %v2453 = vperm.slane %v1689, 4
    %v2454 = vperm.slane %v1689, 5
    %v2455 = vperm.slane %v1689, 6
    %v2456 = vperm.slane %v1689, 7
    %v2457 = vperm.slane %v1690, 0
    %v2458 = vperm.slane %v1690, 1
    %v2459 = vperm.slane %v1690, 2
    %v2460 = vperm.slane %v1690, 3
    %v2461 = vperm.slane %v1690, 4
    %v2462 = vperm.slane %v1690, 5
    %v2463 = vperm.slane %v1690, 6
    %v2464 = vperm.slane %v1690, 7
    %v2465 = vperm.slane %v1691, 0
    %v2466 = vperm.slane %v1691, 1
    %v2467 = vperm.slane %v1691, 2
    %v2468 = vperm.slane %v1691, 3
    %v2469 = vperm.slane %v1691, 4
    %v2470 = vperm.slane %v1691, 5
    %v2471 = vperm.slane %v1691, 6
    %v2472 = vperm.slane %v1691, 7
    %v2473 = vperm.slane %v1692, 0
    %v2474 = vperm.slane %v1692, 1
    %v2475 = vperm.slane %v1692, 2
    %v2476 = vperm.slane %v1692, 3
    %v2477 = vperm.slane %v1692, 4
    %v2478 = vperm.slane %v1692, 5
    %v2479 = vperm.slane %v1692, 6
    %v2480 = vperm.slane %v1692, 7
    %v2481 = vperm.slane %v1693, 0
    %v2482 = vperm.slane %v1693, 1
    %v2483 = vperm.slane %v1693, 2
    %v2484 = vperm.slane %v1693, 3
    %v2485 = vperm.slane %v1693, 4
    %v2486 = vperm.slane %v1693, 5
    %v2487 = vperm.slane %v1693, 6
    %v2488 = vperm.slane %v1693, 7
    %v2489 = vperm.slane %v1694, 0
    %v2490 = vperm.slane %v1694, 1
    %v2491 = vperm.slane %v1694, 2
    %v2492 = vperm.slane %v1694, 3
    %v2493 = vperm.slane %v1694, 4
    %v2494 = vperm.slane %v1694, 5
    %v2495 = vperm.slane %v1694, 6
    %v2496 = vperm.slane %v1694, 7
    %v2497 = vperm.slane %v1695, 0
    %v2498 = vperm.slane %v1695, 1
    %v2499 = vperm.slane %v1695, 2
    %v2500 = vperm.slane %v1695, 3
    %v2501 = vperm.slane %v1695, 4
    %v2502 = vperm.slane %v1695, 5
    %v2503 = vperm.slane %v1695, 6
    %v2504 = vperm.slane %v1695, 7
    %v2505 = vperm.slane %v1696, 0
    %v2506 = vperm.slane %v1696, 1
    %v2507 = vperm.slane %v1696, 2
    %v2508 = vperm.slane %v1696, 3
    %v2509 = vperm.slane %v1696, 4
    %v2510 = vperm.slane %v1696, 5
    %v2511 = vperm.slane %v1696, 6
    %v2512 = vperm.slane %v1696, 7
    %v2513 = vperm.slane %v1697, 0
    %v2514 = vperm.slane %v1697, 1
    %v2515 = vperm.slane %v1697, 2
    %v2516 = vperm.slane %v1697, 3
    %v2517 = vperm.slane %v1697, 4
    %v2518 = vperm.slane %v1697, 5
    %v2519 = vperm.slane %v1697, 6
    %v2520 = vperm.slane %v1697, 7
    %v2521 = vperm.slane %v1698, 0
    %v2522 = vperm.slane %v1698, 1
    %v2523 = vperm.slane %v1698, 2
    %v2524 = vperm.slane %v1698, 3
    %v2525 = vperm.slane %v1698, 4
    %v2526 = vperm.slane %v1698, 5
    %v2527 = vperm.slane %v1698, 6
    %v2528 = vperm.slane %v1698, 7
    %v2529 = vperm.slane %v1699, 0
    %v2530 = vperm.slane %v1699, 1
    %v2531 = vperm.slane %v1699, 2
    %v2532 = vperm.slane %v1699, 3
    %v2533 = vperm.slane %v1699, 4
    %v2534 = vperm.slane %v1699, 5
    %v2535 = vperm.slane %v1699, 6
    %v2536 = vperm.slane %v1699, 7
    %v2537 = vperm.slane %v1700, 0
    %v2538 = vperm.slane %v1700, 1
    %v2539 = vperm.slane %v1700, 2
    %v2540 = vperm.slane %v1700, 3
    %v2541 = vperm.slane %v1700, 4
    %v2542 = vperm.slane %v1700, 5
    %v2543 = vperm.slane %v1700, 6
    %v2544 = vperm.slane %v1700, 7
    %v2545 = vperm.slane %v1701, 0
    %v2546 = vperm.slane %v1701, 1
    %v2547 = vperm.slane %v1701, 2
    %v2548 = vperm.slane %v1701, 3
    %v2549 = vperm.slane %v1701, 4
    %v2550 = vperm.slane %v1701, 5
    %v2551 = vperm.slane %v1701, 6
    %v2552 = vperm.slane %v1701, 7
    %v2553 = vperm.slane %v1702, 0
    %v2554 = vperm.slane %v1702, 1
    %v2555 = vperm.slane %v1702, 2
    %v2556 = vperm.slane %v1702, 3
    %v2557 = vperm.slane %v1702, 4
    %v2558 = vperm.slane %v1702, 5
    %v2559 = vperm.slane %v1702, 6
    %v2560 = vperm.slane %v1702, 7
    %v2561 = vperm.slane %v1703, 0
    %v2562 = vperm.slane %v1703, 1
    %v2563 = vperm.slane %v1703, 2
    %v2564 = vperm.slane %v1703, 3
    %v2565 = vperm.slane %v1703, 4
    %v2566 = vperm.slane %v1703, 5
    %v2567 = vperm.slane %v1703, 6
    %v2568 = vperm.slane %v1703, 7
    %v2569 = vperm.slane %v1704, 0
    %v2570 = vperm.slane %v1704, 1
    %v2571 = vperm.slane %v1704, 2
    %v2572 = vperm.slane %v1704, 3
    %v2573 = vperm.slane %v1704, 4
    %v2574 = vperm.slane %v1704, 5
    %v2575 = vperm.slane %v1704, 6
    %v2576 = vperm.slane %v1704, 7
    %v2577 = vperm.slane %v1705, 0
    %v2578 = vperm.slane %v1705, 1
    %v2579 = vperm.slane %v1705, 2
    %v2580 = vperm.slane %v1705, 3
    %v2581 = vperm.slane %v1705, 4
    %v2582 = vperm.slane %v1705, 5
    %v2583 = vperm.slane %v1705, 6
    %v2584 = vperm.slane %v1705, 7
    %v2585 = vperm.slane %v1706, 0
    %v2586 = vperm.slane %v1706, 1
    %v2587 = vperm.slane %v1706, 2
    %v2588 = vperm.slane %v1706, 3
    %v2589 = vperm.slane %v1706, 4
    %v2590 = vperm.slane %v1706, 5
    %v2591 = vperm.slane %v1706, 6
    %v2592 = vperm.slane %v1706, 7
    %v2593 = vperm.slane %v1707, 0
    %v2594 = vperm.slane %v1707, 1
    %v2595 = vperm.slane %v1707, 2
    %v2596 = vperm.slane %v1707, 3
    %v2597 = vperm.slane %v1707, 4
    %v2598 = vperm.slane %v1707, 5
    %v2599 = vperm.slane %v1707, 6
    %v2600 = vperm.slane %v1707, 7
    %v2601 = vperm.slane %v1708, 0
    %v2602 = vperm.slane %v1708, 1
    %v2603 = vperm.slane %v1708, 2
    %v2604 = vperm.slane %v1708, 3
    %v2605 = vperm.slane %v1708, 4
    %v2606 = vperm.slane %v1708, 5
    %v2607 = vperm.slane %v1708, 6
    %v2608 = vperm.slane %v1708, 7
    %v2609 = vperm.slane %v1709, 0
    %v2610 = vperm.slane %v1709, 1
    %v2611 = vperm.slane %v1709, 2
    %v2612 = vperm.slane %v1709, 3
    %v2613 = vperm.slane %v1709, 4
    %v2614 = vperm.slane %v1709, 5
    %v2615 = vperm.slane %v1709, 6
    %v2616 = vperm.slane %v1709, 7
    %v2617 = vperm.slane %v1710, 0
    %v2618 = vperm.slane %v1710, 1
    %v2619 = vperm.slane %v1710, 2
    %v2620 = vperm.slane %v1710, 3
    %v2621 = vperm.slane %v1710, 4
    %v2622 = vperm.slane %v1710, 5
    %v2623 = vperm.slane %v1710, 6
    %v2624 = vperm.slane %v1710, 7
    %v2625 = vperm.slane %v1711, 0
    %v2626 = vperm.slane %v1711, 1
    %v2627 = vperm.slane %v1711, 2
    %v2628 = vperm.slane %v1711, 3
    %v2629 = vperm.slane %v1711, 4
    %v2630 = vperm.slane %v1711, 5
    %v2631 = vperm.slane %v1711, 6
    %v2632 = vperm.slane %v1711, 7
    %v2633 = vperm.slane %v1712, 0
    %v2634 = vperm.slane %v1712, 1
    %v2635 = vperm.slane %v1712, 2
    %v2636 = vperm.slane %v1712, 3
    %v2637 = vperm.slane %v1712, 4
    %v2638 = vperm.slane %v1712, 5
    %v2639 = vperm.slane %v1712, 6
    %v2640 = vperm.slane %v1712, 7
    %v2641 = vperm.slane %v1713, 0
    %v2642 = vperm.slane %v1713, 1
    %v2643 = vperm.slane %v1713, 2
    %v2644 = vperm.slane %v1713, 3
    %v2645 = vperm.slane %v1713, 4
    %v2646 = vperm.slane %v1713, 5
    %v2647 = vperm.slane %v1713, 6
    %v2648 = vperm.slane %v1713, 7
    %v2649 = vperm.slane %v1714, 0
    %v2650 = vperm.slane %v1714, 1
    %v2651 = vperm.slane %v1714, 2
    %v2652 = vperm.slane %v1714, 3
    %v2653 = vperm.slane %v1714, 4
    %v2654 = vperm.slane %v1714, 5
    %v2655 = vperm.slane %v1714, 6
    %v2656 = vperm.slane %v1714, 7
    %v2657 = vperm.slane %v1715, 0
    %v2658 = vperm.slane %v1715, 1
    %v2659 = vperm.slane %v1715, 2
    %v2660 = vperm.slane %v1715, 3
    %v2661 = vperm.slane %v1715, 4
    %v2662 = vperm.slane %v1715, 5
    %v2663 = vperm.slane %v1715, 6
    %v2664 = vperm.slane %v1715, 7
    %v2665 = vperm.slane %v1716, 0
    %v2666 = vperm.slane %v1716, 1
    %v2667 = vperm.slane %v1716, 2
    %v2668 = vperm.slane %v1716, 3
    %v2669 = vperm.slane %v1716, 4
    %v2670 = vperm.slane %v1716, 5
    %v2671 = vperm.slane %v1716, 6
    %v2672 = vperm.slane %v1716, 7
    %v2673 = vperm.slane %v1717, 0
    %v2674 = vperm.slane %v1717, 1
    %v2675 = vperm.slane %v1717, 2
    %v2676 = vperm.slane %v1717, 3
    %v2677 = vperm.slane %v1717, 4
    %v2678 = vperm.slane %v1717, 5
    %v2679 = vperm.slane %v1717, 6
    %v2680 = vperm.slane %v1717, 7
    %v2681 = vperm.slane %v1718, 0
    %v2682 = vperm.slane %v1718, 1
    %v2683 = vperm.slane %v1718, 2
    %v2684 = vperm.slane %v1718, 3
    %v2685 = vperm.slane %v1718, 4
    %v2686 = vperm.slane %v1718, 5
    %v2687 = vperm.slane %v1718, 6
    %v2688 = vperm.slane %v1718, 7
    %v2689 = vperm.slane %v1719, 0
    %v2690 = vperm.slane %v1719, 1
    %v2691 = vperm.slane %v1719, 2
    %v2692 = vperm.slane %v1719, 3
    %v2693 = vperm.slane %v1719, 4
    %v2694 = vperm.slane %v1719, 5
    %v2695 = vperm.slane %v1719, 6
    %v2696 = vperm.slane %v1719, 7
    %v2697 = vperm.slane %v1720, 0
    %v2698 = vperm.slane %v1720, 1
    %v2699 = vperm.slane %v1720, 2
    %v2700 = vperm.slane %v1720, 3
    %v2701 = vperm.slane %v1720, 4
    %v2702 = vperm.slane %v1720, 5
    %v2703 = vperm.slane %v1720, 6
    %v2704 = vperm.slane %v1720, 7
    %v2705 = vperm.slane %v1721, 0
    %v2706 = vperm.slane %v1721, 1
    %v2707 = vperm.slane %v1721, 2
    %v2708 = vperm.slane %v1721, 3
    %v2709 = vperm.slane %v1721, 4
    %v2710 = vperm.slane %v1721, 5
    %v2711 = vperm.slane %v1721, 6
    %v2712 = vperm.slane %v1721, 7
    %v2713 = vperm.slane %v1722, 0
    %v2714 = vperm.slane %v1722, 1
    %v2715 = vperm.slane %v1722, 2
    %v2716 = vperm.slane %v1722, 3
    %v2717 = vperm.slane %v1722, 4
    %v2718 = vperm.slane %v1722, 5
    %v2719 = vperm.slane %v1722, 6
    %v2720 = vperm.slane %v1722, 7
    %v2721 = vperm.slane %v1723, 0
    %v2722 = vperm.slane %v1723, 1
    %v2723 = vperm.slane %v1723, 2
    %v2724 = vperm.slane %v1723, 3
    %v2725 = vperm.slane %v1723, 4
    %v2726 = vperm.slane %v1723, 5
    %v2727 = vperm.slane %v1723, 6
    %v2728 = vperm.slane %v1723, 7
    %v2729 = vperm.slane %v1724, 0
    %v2730 = vperm.slane %v1724, 1
    %v2731 = vperm.slane %v1724, 2
    %v2732 = vperm.slane %v1724, 3
    %v2733 = vperm.slane %v1724, 4
    %v2734 = vperm.slane %v1724, 5
    %v2735 = vperm.slane %v1724, 6
    %v2736 = vperm.slane %v1724, 7
    %v2737 = vperm.slane %v1725, 0
    %v2738 = vperm.slane %v1725, 1
    %v2739 = vperm.slane %v1725, 2
    %v2740 = vperm.slane %v1725, 3
    %v2741 = vperm.slane %v1725, 4
    %v2742 = vperm.slane %v1725, 5
    %v2743 = vperm.slane %v1725, 6
    %v2744 = vperm.slane %v1725, 7
    %v2745 = vperm.slane %v1726, 0
    %v2746 = vperm.slane %v1726, 1
    %v2747 = vperm.slane %v1726, 2
    %v2748 = vperm.slane %v1726, 3
    %v2749 = vperm.slane %v1726, 4
    %v2750 = vperm.slane %v1726, 5
    %v2751 = vperm.slane %v1726, 6
    %v2752 = vperm.slane %v1726, 7
    %v2753 = vperm.slane %v1727, 0
    %v2754 = vperm.slane %v1727, 1
    %v2755 = vperm.slane %v1727, 2
    %v2756 = vperm.slane %v1727, 3
    %v2757 = vperm.slane %v1727, 4
    %v2758 = vperm.slane %v1727, 5
    %v2759 = vperm.slane %v1727, 6
    %v2760 = vperm.slane %v1727, 7
    %v2761 = vperm.slane %v1728, 0
    %v2762 = vperm.slane %v1728, 1
    %v2763 = vperm.slane %v1728, 2
    %v2764 = vperm.slane %v1728, 3
    %v2765 = vperm.slane %v1728, 4
    %v2766 = vperm.slane %v1728, 5
    %v2767 = vperm.slane %v1728, 6
    %v2768 = vperm.slane %v1728, 7
    %v2769 = vperm.slane %v1729, 0
    %v2770 = vperm.slane %v1729, 1
    %v2771 = vperm.slane %v1729, 2
    %v2772 = vperm.slane %v1729, 3
    %v2773 = vperm.slane %v1729, 4
    %v2774 = vperm.slane %v1729, 5
    %v2775 = vperm.slane %v1729, 6
    %v2776 = vperm.slane %v1729, 7
    %v2777 = vperm.slane %v1730, 0
    %v2778 = vperm.slane %v1730, 1
    %v2779 = vperm.slane %v1730, 2
    %v2780 = vperm.slane %v1730, 3
    %v2781 = vperm.slane %v1730, 4
    %v2782 = vperm.slane %v1730, 5
    %v2783 = vperm.slane %v1730, 6
    %v2784 = vperm.slane %v1730, 7
    %v2785 = vperm.slane %v1731, 0
    %v2786 = vperm.slane %v1731, 1
    %v2787 = vperm.slane %v1731, 2
    %v2788 = vperm.slane %v1731, 3
    %v2789 = vperm.slane %v1731, 4
    %v2790 = vperm.slane %v1731, 5
    %v2791 = vperm.slane %v1731, 6
    %v2792 = vperm.slane %v1731, 7
    %v2793 = vperm.slane %v1732, 0
    %v2794 = vperm.slane %v1732, 1
    %v2795 = vperm.slane %v1732, 2
    %v2796 = vperm.slane %v1732, 3
    %v2797 = vperm.slane %v1732, 4
    %v2798 = vperm.slane %v1732, 5
    %v2799 = vperm.slane %v1732, 6
    %v2800 = vperm.slane %v1732, 7
    %v2801 = vperm.slane %v1733, 0
    %v2802 = vperm.slane %v1733, 1
    %v2803 = vperm.slane %v1733, 2
    %v2804 = vperm.slane %v1733, 3
    %v2805 = vperm.slane %v1733, 4
    %v2806 = vperm.slane %v1733, 5
    %v2807 = vperm.slane %v1733, 6
    %v2808 = vperm.slane %v1733, 7
    %v2809 = vperm.slane %v1734, 0
    %v2810 = vperm.slane %v1734, 1
    %v2811 = vperm.slane %v1734, 2
    %v2812 = vperm.slane %v1734, 3
    %v2813 = vperm.slane %v1734, 4
    %v2814 = vperm.slane %v1734, 5
    %v2815 = vperm.slane %v1734, 6
    %v2816 = vperm.slane %v1734, 7
    %v2817 = vperm.slane %v1735, 0
    %v2818 = vperm.slane %v1735, 1
    %v2819 = vperm.slane %v1735, 2
    %v2820 = vperm.slane %v1735, 3
    %v2821 = vperm.slane %v1735, 4
    %v2822 = vperm.slane %v1735, 5
    %v2823 = vperm.slane %v1735, 6
    %v2824 = vperm.slane %v1735, 7
    %v2825 = vperm.slane %v1736, 0
    %v2826 = vperm.slane %v1736, 1
    %v2827 = vperm.slane %v1736, 2
    %v2828 = vperm.slane %v1736, 3
    %v2829 = vperm.slane %v1736, 4
    %v2830 = vperm.slane %v1736, 5
    %v2831 = vperm.slane %v1736, 6
    %v2832 = vperm.slane %v1736, 7
    %v2833 = vperm.slane %v1737, 0
    %v2834 = vperm.slane %v1737, 1
    %v2835 = vperm.slane %v1737, 2
    %v2836 = vperm.slane %v1737, 3
    %v2837 = vperm.slane %v1737, 4
    %v2838 = vperm.slane %v1737, 5
    %v2839 = vperm.slane %v1737, 6
    %v2840 = vperm.slane %v1737, 7
    %v2841 = vperm.slane %v1738, 0
    %v2842 = vperm.slane %v1738, 1
    %v2843 = vperm.slane %v1738, 2
    %v2844 = vperm.slane %v1738, 3
    %v2845 = vperm.slane %v1738, 4
    %v2846 = vperm.slane %v1738, 5
    %v2847 = vperm.slane %v1738, 6
    %v2848 = vperm.slane %v1738, 7
    %v2849 = vperm.slane %v1739, 0
    %v2850 = vperm.slane %v1739, 1
    %v2851 = vperm.slane %v1739, 2
    %v2852 = vperm.slane %v1739, 3
    %v2853 = vperm.slane %v1739, 4
    %v2854 = vperm.slane %v1739, 5
    %v2855 = vperm.slane %v1739, 6
    %v2856 = vperm.slane %v1739, 7
    %v2857 = vperm.slane %v1740, 0
    %v2858 = vperm.slane %v1740, 1
    %v2859 = vperm.slane %v1740, 2
    %v2860 = vperm.slane %v1740, 3
    %v2861 = vperm.slane %v1740, 4
    %v2862 = vperm.slane %v1740, 5
    %v2863 = vperm.slane %v1740, 6
    %v2864 = vperm.slane %v1740, 7
    %v2865 = vperm.slane %v1741, 0
    %v2866 = vperm.slane %v1741, 1
    %v2867 = vperm.slane %v1741, 2
    %v2868 = vperm.slane %v1741, 3
    %v2869 = vperm.slane %v1741, 4
    %v2870 = vperm.slane %v1741, 5
    %v2871 = vperm.slane %v1741, 6
    %v2872 = vperm.slane %v1741, 7
    %v2873 = vperm.slane %v1742, 0
    %v2874 = vperm.slane %v1742, 1
    %v2875 = vperm.slane %v1742, 2
    %v2876 = vperm.slane %v1742, 3
    %v2877 = vperm.slane %v1742, 4
    %v2878 = vperm.slane %v1742, 5
    %v2879 = vperm.slane %v1742, 6
    %v2880 = vperm.slane %v1742, 7
    %v2881 = vperm.slane %v1743, 0
    %v2882 = vperm.slane %v1743, 1
    %v2883 = vperm.slane %v1743, 2
    %v2884 = vperm.slane %v1743, 3
    %v2885 = vperm.slane %v1743, 4
    %v2886 = vperm.slane %v1743, 5
    %v2887 = vperm.slane %v1743, 6
    %v2888 = vperm.slane %v1743, 7
    %v2889 = vperm.slane %v1744, 0
    %v2890 = vperm.slane %v1744, 1
    %v2891 = vperm.slane %v1744, 2
    %v2892 = vperm.slane %v1744, 3
    %v2893 = vperm.slane %v1744, 4
    %v2894 = vperm.slane %v1744, 5
    %v2895 = vperm.slane %v1744, 6
    %v2896 = vperm.slane %v1744, 7
    %2897 = vst [vmem:[#allocation1] ss:$9 sm:$0xff] %v1873
    %s2898 = scalar_lea.vmem [#allocation1], 1
    %2899 = vst [vmem:[%s2898] ss:$9 sm:$0xff] %v1874
    %s2900 = scalar_lea.vmem [#allocation1], 2
    %2901 = vst [vmem:[%s2900] ss:$9 sm:$0xff] %v1875
    %s2902 = scalar_lea.vmem [#allocation1], 3
    %2903 = vst [vmem:[%s2902] ss:$9 sm:$0xff] %v1876
    %s2904 = scalar_lea.vmem [#allocation1], 4
    %2905 = vst [vmem:[%s2904] ss:$9 sm:$0xff] %v1877
    %s2906 = scalar_lea.vmem [#allocation1], 5
    %2907 = vst [vmem:[%s2906] ss:$9 sm:$0xff] %v1878
    %s2908 = scalar_lea.vmem [#allocation1], 6
    %2909 = vst [vmem:[%s2908] ss:$9 sm:$0xff] %v1879
    %s2910 = scalar_lea.vmem [#allocation1], 7
    %2911 = vst [vmem:[%s2910] ss:$9 sm:$0xff] %v1880
    %v2912 = vld [vmem:[#allocation1] sm:$0xff]
    %2913 = vst [vmem:[#allocation1] ss:$9 sm:$0xff] %v1881
    %2914 = vst [vmem:[%s2898] ss:$9 sm:$0xff] %v1882
    %2915 = vst [vmem:[%s2900] ss:$9 sm:$0xff] %v1883
    %2916 = vst [vmem:[%s2902] ss:$9 sm:$0xff] %v1884
    %2917 = vst [vmem:[%s2904] ss:$9 sm:$0xff] %v1885
    %2918 = vst [vmem:[%s2906] ss:$9 sm:$0xff] %v1886
    %2919 = vst [vmem:[%s2908] ss:$9 sm:$0xff] %v1887
    %2920 = vst [vmem:[%s2910] ss:$9 sm:$0xff] %v1888
    %v2921 = vld [vmem:[#allocation1] sm:$0xff]
    %2922 = vst [vmem:[#allocation1] ss:$9 sm:$0xff] %v1889
    %2923 = vst [vmem:[%s2898] ss:$9 sm:$0xff] %v1890
    %2924 = vst [vmem:[%s2900] ss:$9 sm:$0xff] %v1891
    %2925 = vst [vmem:[%s2902] ss:$9 sm:$0xff] %v1892
    %2926 = vst [vmem:[%s2904] ss:$9 sm:$0xff] %v1893
    %2927 = vst [vmem:[%s2906] ss:$9 sm:$0xff] %v1894
    %2928 = vst [vmem:[%s2908] ss:$9 sm:$0xff] %v1895
    %2929 = vst [vmem:[%s2910] ss:$9 sm:$0xff] %v1896
    %v2930 = vld [vmem:[#allocation1] sm:$0xff]
    %2931 = vst [vmem:[#allocation1] ss:$9 sm:$0xff] %v1897
    %2932 = vst [vmem:[%s2898] ss:$9 sm:$0xff] %v1898
    %2933 = vst [vmem:[%s2900] ss:$9 sm:$0xff] %v1899
    %2934 = vst [vmem:[%s2902] ss:$9 sm:$0xff] %v1900
    %2935 = vst [vmem:[%s2904] ss:$9 sm:$0xff] %v1901
    %2936 = vst [vmem:[%s2906] ss:$9 sm:$0xff] %v1902
    %2937 = vst [vmem:[%s2908] ss:$9 sm:$0xff] %v1903
    %2938 = vst [vmem:[%s2910] ss:$9 sm:$0xff] %v1904
    %v2939 = vld [vmem:[#allocation1] sm:$0xff]
    %2940 = vst [vmem:[#allocation1] ss:$9 sm:$0xff] %v1905
    %2941 = vst [vmem:[%s2898] ss:$9 sm:$0xff] %v1906
    %2942 = vst [vmem:[%s2900] ss:$9 sm:$0xff] %v1907
    %2943 = vst [vmem:[%s2902] ss:$9 sm:$0xff] %v1908
    %2944 = vst [vmem:[%s2904] ss:$9 sm:$0xff] %v1909
    %2945 = vst [vmem:[%s2906] ss:$9 sm:$0xff] %v1910
    %2946 = vst [vmem:[%s2908] ss:$9 sm:$0xff] %v1911
    %2947 = vst [vmem:[%s2910] ss:$9 sm:$0xff] %v1912
    %v2948 = vld [vmem:[#allocation1] sm:$0xff]
    %2949 = vst [vmem:[#allocation1] ss:$9 sm:$0xff] %v1913
    %2950 = vst [vmem:[%s2898] ss:$9 sm:$0xff] %v1914
    %2951 = vst [vmem:[%s2900] ss:$9 sm:$0xff] %v1915
    %2952 = vst [vmem:[%s2902] ss:$9 sm:$0xff] %v1916
    %2953 = vst [vmem:[%s2904] ss:$9 sm:$0xff] %v1917
    %2954 = vst [vmem:[%s2906] ss:$9 sm:$0xff] %v1918
    %2955 = vst [vmem:[%s2908] ss:$9 sm:$0xff] %v1919
    %2956 = vst [vmem:[%s2910] ss:$9 sm:$0xff] %v1920
    %v2957 = vld [vmem:[#allocation1] sm:$0xff]
    %2958 = vst [vmem:[#allocation1] ss:$9 sm:$0xff] %v1921
    %2959 = vst [vmem:[%s2898] ss:$9 sm:$0xff] %v1922
    %2960 = vst [vmem:[%s2900] ss:$9 sm:$0xff] %v1923
    %2961 = vst [vmem:[%s2902] ss:$9 sm:$0xff] %v1924
    %2962 = vst [vmem:[%s2904] ss:$9 sm:$0xff] %v1925
    %2963 = vst [vmem:[%s2906] ss:$9 sm:$0xff] %v1926
    %2964 = vst [vmem:[%s2908] ss:$9 sm:$0xff] %v1927
    %2965 = vst [vmem:[%s2910] ss:$9 sm:$0xff] %v1928
    %v2966 = vld [vmem:[#allocation1] sm:$0xff]
    %2967 = vst [vmem:[#allocation1] ss:$9 sm:$0xff] %v1929
    %2968 = vst [vmem:[%s2898] ss:$9 sm:$0xff] %v1930
    %2969 = vst [vmem:[%s2900] ss:$9 sm:$0xff] %v1931
    %2970 = vst [vmem:[%s2902] ss:$9 sm:$0xff] %v1932
    %2971 = vst [vmem:[%s2904] ss:$9 sm:$0xff] %v1933
    %2972 = vst [vmem:[%s2906] ss:$9 sm:$0xff] %v1934
    %2973 = vst [vmem:[%s2908] ss:$9 sm:$0xff] %v1935
    %2974 = vst [vmem:[%s2910] ss:$9 sm:$0xff] %v1936
    %v2975 = vld [vmem:[#allocation1] sm:$0xff]
    %2976 = vst [vmem:[#allocation1] ss:$9 sm:$0xff] %v1937
    %2977 = vst [vmem:[%s2898] ss:$9 sm:$0xff] %v1938
    %2978 = vst [vmem:[%s2900] ss:$9 sm:$0xff] %v1939
    %2979 = vst [vmem:[%s2902] ss:$9 sm:$0xff] %v1940
    %2980 = vst [vmem:[%s2904] ss:$9 sm:$0xff] %v1941
    %2981 = vst [vmem:[%s2906] ss:$9 sm:$0xff] %v1942
    %2982 = vst [vmem:[%s2908] ss:$9 sm:$0xff] %v1943
    %2983 = vst [vmem:[%s2910] ss:$9 sm:$0xff] %v1944
    %v2984 = vld [vmem:[#allocation1] sm:$0xff]
    %2985 = vst [vmem:[#allocation1] ss:$9 sm:$0xff] %v1945
    %2986 = vst [vmem:[%s2898] ss:$9 sm:$0xff] %v1946
    %2987 = vst [vmem:[%s2900] ss:$9 sm:$0xff] %v1947
    %2988 = vst [vmem:[%s2902] ss:$9 sm:$0xff] %v1948
    %2989 = vst [vmem:[%s2904] ss:$9 sm:$0xff] %v1949
    %2990 = vst [vmem:[%s2906] ss:$9 sm:$0xff] %v1950
    %2991 = vst [vmem:[%s2908] ss:$9 sm:$0xff] %v1951
    %2992 = vst [vmem:[%s2910] ss:$9 sm:$0xff] %v1952
    %v2993 = vld [vmem:[#allocation1] sm:$0xff]
    %2994 = vst [vmem:[#allocation1] ss:$9 sm:$0xff] %v1953
    %2995 = vst [vmem:[%s2898] ss:$9 sm:$0xff] %v1954
    %2996 = vst [vmem:[%s2900] ss:$9 sm:$0xff] %v1955
    %2997 = vst [vmem:[%s2902] ss:$9 sm:$0xff] %v1956
    %2998 = vst [vmem:[%s2904] ss:$9 sm:$0xff] %v1957
    %2999 = vst [vmem:[%s2906] ss:$9 sm:$0xff] %v1958
    %3000 = vst [vmem:[%s2908] ss:$9 sm:$0xff] %v1959
    %3001 = vst [vmem:[%s2910] ss:$9 sm:$0xff] %v1960
    %v3002 = vld [vmem:[#allocation1] sm:$0xff]
    %3003 = vst [vmem:[#allocation1] ss:$9 sm:$0xff] %v1961
    %3004 = vst [vmem:[%s2898] ss:$9 sm:$0xff] %v1962
    %3005 = vst [vmem:[%s2900] ss:$9 sm:$0xff] %v1963
    %3006 = vst [vmem:[%s2902] ss:$9 sm:$0xff] %v1964
    %3007 = vst [vmem:[%s2904] ss:$9 sm:$0xff] %v1965
    %3008 = vst [vmem:[%s2906] ss:$9 sm:$0xff] %v1966
    %3009 = vst [vmem:[%s2908] ss:$9 sm:$0xff] %v1967
    %3010 = vst [vmem:[%s2910] ss:$9 sm:$0xff] %v1968
    %v3011 = vld [vmem:[#allocation1] sm:$0xff]
    %3012 = vst [vmem:[#allocation1] ss:$9 sm:$0xff] %v1969
    %3013 = vst [vmem:[%s2898] ss:$9 sm:$0xff] %v1970
    %3014 = vst [vmem:[%s2900] ss:$9 sm:$0xff] %v1971
    %3015 = vst [vmem:[%s2902] ss:$9 sm:$0xff] %v1972
    %3016 = vst [vmem:[%s2904] ss:$9 sm:$0xff] %v1973
    %3017 = vst [vmem:[%s2906] ss:$9 sm:$0xff] %v1974
    %3018 = vst [vmem:[%s2908] ss:$9 sm:$0xff] %v1975
    %3019 = vst [vmem:[%s2910] ss:$9 sm:$0xff] %v1976
    %v3020 = vld [vmem:[#allocation1] sm:$0xff]
    %3021 = vst [vmem:[#allocation1] ss:$9 sm:$0xff] %v1977
    %3022 = vst [vmem:[%s2898] ss:$9 sm:$0xff] %v1978
    %3023 = vst [vmem:[%s2900] ss:$9 sm:$0xff] %v1979
    %3024 = vst [vmem:[%s2902] ss:$9 sm:$0xff] %v1980
    %3025 = vst [vmem:[%s2904] ss:$9 sm:$0xff] %v1981
    %3026 = vst [vmem:[%s2906] ss:$9 sm:$0xff] %v1982
    %3027 = vst [vmem:[%s2908] ss:$9 sm:$0xff] %v1983
    %3028 = vst [vmem:[%s2910] ss:$9 sm:$0xff] %v1984
    %v3029 = vld [vmem:[#allocation1] sm:$0xff]
    %3030 = vst [vmem:[#allocation1] ss:$9 sm:$0xff] %v1985
    %3031 = vst [vmem:[%s2898] ss:$9 sm:$0xff] %v1986
    %3032 = vst [vmem:[%s2900] ss:$9 sm:$0xff] %v1987
    %3033 = vst [vmem:[%s2902] ss:$9 sm:$0xff] %v1988
    %3034 = vst [vmem:[%s2904] ss:$9 sm:$0xff] %v1989
    %3035 = vst [vmem:[%s2906] ss:$9 sm:$0xff] %v1990
    %3036 = vst [vmem:[%s2908] ss:$9 sm:$0xff] %v1991
    %3037 = vst [vmem:[%s2910] ss:$9 sm:$0xff] %v1992
    %v3038 = vld [vmem:[#allocation1] sm:$0xff]
    %3039 = vst [vmem:[#allocation1] ss:$9 sm:$0xff] %v1993
    %3040 = vst [vmem:[%s2898] ss:$9 sm:$0xff] %v1994
    %3041 = vst [vmem:[%s2900] ss:$9 sm:$0xff] %v1995
    %3042 = vst [vmem:[%s2902] ss:$9 sm:$0xff] %v1996
    %3043 = vst [vmem:[%s2904] ss:$9 sm:$0xff] %v1997
    %3044 = vst [vmem:[%s2906] ss:$9 sm:$0xff] %v1998
    %3045 = vst [vmem:[%s2908] ss:$9 sm:$0xff] %v1999
    %3046 = vst [vmem:[%s2910] ss:$9 sm:$0xff] %v2000
    %v3047 = vld [vmem:[#allocation1] sm:$0xff]
    %3048 = vst [vmem:[#allocation1] ss:$9 sm:$0xff] %v2001
    %3049 = vst [vmem:[%s2898] ss:$9 sm:$0xff] %v2002
    %3050 = vst [vmem:[%s2900] ss:$9 sm:$0xff] %v2003
    %3051 = vst [vmem:[%s2902] ss:$9 sm:$0xff] %v2004
    %3052 = vst [vmem:[%s2904] ss:$9 sm:$0xff] %v2005
    %3053 = vst [vmem:[%s2906] ss:$9 sm:$0xff] %v2006
    %3054 = vst [vmem:[%s2908] ss:$9 sm:$0xff] %v2007
    %3055 = vst [vmem:[%s2910] ss:$9 sm:$0xff] %v2008
    %v3056 = vld [vmem:[#allocation1] sm:$0xff]
    %3057 = vst [vmem:[#allocation1] ss:$9 sm:$0xff] %v2009
    %3058 = vst [vmem:[%s2898] ss:$9 sm:$0xff] %v2010
    %3059 = vst [vmem:[%s2900] ss:$9 sm:$0xff] %v2011
    %3060 = vst [vmem:[%s2902] ss:$9 sm:$0xff] %v2012
    %3061 = vst [vmem:[%s2904] ss:$9 sm:$0xff] %v2013
    %3062 = vst [vmem:[%s2906] ss:$9 sm:$0xff] %v2014
    %3063 = vst [vmem:[%s2908] ss:$9 sm:$0xff] %v2015
    %3064 = vst [vmem:[%s2910] ss:$9 sm:$0xff] %v2016
    %v3065 = vld [vmem:[#allocation1] sm:$0xff]
    %3066 = vst [vmem:[#allocation1] ss:$9 sm:$0xff] %v2017
    %3067 = vst [vmem:[%s2898] ss:$9 sm:$0xff] %v2018
    %3068 = vst [vmem:[%s2900] ss:$9 sm:$0xff] %v2019
    %3069 = vst [vmem:[%s2902] ss:$9 sm:$0xff] %v2020
    %3070 = vst [vmem:[%s2904] ss:$9 sm:$0xff] %v2021
    %3071 = vst [vmem:[%s2906] ss:$9 sm:$0xff] %v2022
    %3072 = vst [vmem:[%s2908] ss:$9 sm:$0xff] %v2023
    %3073 = vst [vmem:[%s2910] ss:$9 sm:$0xff] %v2024
    %v3074 = vld [vmem:[#allocation1] sm:$0xff]
    %3075 = vst [vmem:[#allocation1] ss:$9 sm:$0xff] %v2025
    %3076 = vst [vmem:[%s2898] ss:$9 sm:$0xff] %v2026
    %3077 = vst [vmem:[%s2900] ss:$9 sm:$0xff] %v2027
    %3078 = vst [vmem:[%s2902] ss:$9 sm:$0xff] %v2028
    %3079 = vst [vmem:[%s2904] ss:$9 sm:$0xff] %v2029
    %3080 = vst [vmem:[%s2906] ss:$9 sm:$0xff] %v2030
    %3081 = vst [vmem:[%s2908] ss:$9 sm:$0xff] %v2031
    %3082 = vst [vmem:[%s2910] ss:$9 sm:$0xff] %v2032
    %v3083 = vld [vmem:[#allocation1] sm:$0xff]
    %3084 = vst [vmem:[#allocation1] ss:$9 sm:$0xff] %v2033
    %3085 = vst [vmem:[%s2898] ss:$9 sm:$0xff] %v2034
    %3086 = vst [vmem:[%s2900] ss:$9 sm:$0xff] %v2035
    %3087 = vst [vmem:[%s2902] ss:$9 sm:$0xff] %v2036
    %3088 = vst [vmem:[%s2904] ss:$9 sm:$0xff] %v2037
    %3089 = vst [vmem:[%s2906] ss:$9 sm:$0xff] %v2038
    %3090 = vst [vmem:[%s2908] ss:$9 sm:$0xff] %v2039
    %3091 = vst [vmem:[%s2910] ss:$9 sm:$0xff] %v2040
    %v3092 = vld [vmem:[#allocation1] sm:$0xff]
    %3093 = vst [vmem:[#allocation1] ss:$9 sm:$0xff] %v2041
    %3094 = vst [vmem:[%s2898] ss:$9 sm:$0xff] %v2042
    %3095 = vst [vmem:[%s2900] ss:$9 sm:$0xff] %v2043
    %3096 = vst [vmem:[%s2902] ss:$9 sm:$0xff] %v2044
    %3097 = vst [vmem:[%s2904] ss:$9 sm:$0xff] %v2045
    %3098 = vst [vmem:[%s2906] ss:$9 sm:$0xff] %v2046
    %3099 = vst [vmem:[%s2908] ss:$9 sm:$0xff] %v2047
    %3100 = vst [vmem:[%s2910] ss:$9 sm:$0xff] %v2048
    %v3101 = vld [vmem:[#allocation1] sm:$0xff]
    %3102 = vst [vmem:[#allocation1] ss:$9 sm:$0xff] %v2049
    %3103 = vst [vmem:[%s2898] ss:$9 sm:$0xff] %v2050
    %3104 = vst [vmem:[%s2900] ss:$9 sm:$0xff] %v2051
    %3105 = vst [vmem:[%s2902] ss:$9 sm:$0xff] %v2052
    %3106 = vst [vmem:[%s2904] ss:$9 sm:$0xff] %v2053
    %3107 = vst [vmem:[%s2906] ss:$9 sm:$0xff] %v2054
    %3108 = vst [vmem:[%s2908] ss:$9 sm:$0xff] %v2055
    %3109 = vst [vmem:[%s2910] ss:$9 sm:$0xff] %v2056
    %v3110 = vld [vmem:[#allocation1] sm:$0xff]
    %3111 = vst [vmem:[#allocation1] ss:$9 sm:$0xff] %v2057
    %3112 = vst [vmem:[%s2898] ss:$9 sm:$0xff] %v2058
    %3113 = vst [vmem:[%s2900] ss:$9 sm:$0xff] %v2059
    %3114 = vst [vmem:[%s2902] ss:$9 sm:$0xff] %v2060
    %3115 = vst [vmem:[%s2904] ss:$9 sm:$0xff] %v2061
    %3116 = vst [vmem:[%s2906] ss:$9 sm:$0xff] %v2062
    %3117 = vst [vmem:[%s2908] ss:$9 sm:$0xff] %v2063
    %3118 = vst [vmem:[%s2910] ss:$9 sm:$0xff] %v2064
    %v3119 = vld [vmem:[#allocation1] sm:$0xff]
    %3120 = vst [vmem:[#allocation1] ss:$9 sm:$0xff] %v2065
    %3121 = vst [vmem:[%s2898] ss:$9 sm:$0xff] %v2066
    %3122 = vst [vmem:[%s2900] ss:$9 sm:$0xff] %v2067
    %3123 = vst [vmem:[%s2902] ss:$9 sm:$0xff] %v2068
    %3124 = vst [vmem:[%s2904] ss:$9 sm:$0xff] %v2069
    %3125 = vst [vmem:[%s2906] ss:$9 sm:$0xff] %v2070
    %3126 = vst [vmem:[%s2908] ss:$9 sm:$0xff] %v2071
    %3127 = vst [vmem:[%s2910] ss:$9 sm:$0xff] %v2072
    %v3128 = vld [vmem:[#allocation1] sm:$0xff]
    %3129 = vst [vmem:[#allocation1] ss:$9 sm:$0xff] %v2073
    %3130 = vst [vmem:[%s2898] ss:$9 sm:$0xff] %v2074
    %3131 = vst [vmem:[%s2900] ss:$9 sm:$0xff] %v2075
    %3132 = vst [vmem:[%s2902] ss:$9 sm:$0xff] %v2076
    %3133 = vst [vmem:[%s2904] ss:$9 sm:$0xff] %v2077
    %3134 = vst [vmem:[%s2906] ss:$9 sm:$0xff] %v2078
    %3135 = vst [vmem:[%s2908] ss:$9 sm:$0xff] %v2079
    %3136 = vst [vmem:[%s2910] ss:$9 sm:$0xff] %v2080
    %v3137 = vld [vmem:[#allocation1] sm:$0xff]
    %3138 = vst [vmem:[#allocation1] ss:$9 sm:$0xff] %v2081
    %3139 = vst [vmem:[%s2898] ss:$9 sm:$0xff] %v2082
    %3140 = vst [vmem:[%s2900] ss:$9 sm:$0xff] %v2083
    %3141 = vst [vmem:[%s2902] ss:$9 sm:$0xff] %v2084
    %3142 = vst [vmem:[%s2904] ss:$9 sm:$0xff] %v2085
    %3143 = vst [vmem:[%s2906] ss:$9 sm:$0xff] %v2086
    %3144 = vst [vmem:[%s2908] ss:$9 sm:$0xff] %v2087
    %3145 = vst [vmem:[%s2910] ss:$9 sm:$0xff] %v2088
    %v3146 = vld [vmem:[#allocation1] sm:$0xff]
    %3147 = vst [vmem:[#allocation1] ss:$9 sm:$0xff] %v2089
    %3148 = vst [vmem:[%s2898] ss:$9 sm:$0xff] %v2090
    %3149 = vst [vmem:[%s2900] ss:$9 sm:$0xff] %v2091
    %3150 = vst [vmem:[%s2902] ss:$9 sm:$0xff] %v2092
    %3151 = vst [vmem:[%s2904] ss:$9 sm:$0xff] %v2093
    %3152 = vst [vmem:[%s2906] ss:$9 sm:$0xff] %v2094
    %3153 = vst [vmem:[%s2908] ss:$9 sm:$0xff] %v2095
    %3154 = vst [vmem:[%s2910] ss:$9 sm:$0xff] %v2096
    %v3155 = vld [vmem:[#allocation1] sm:$0xff]
    %3156 = vst [vmem:[#allocation1] ss:$9 sm:$0xff] %v2097
    %3157 = vst [vmem:[%s2898] ss:$9 sm:$0xff] %v2098
    %3158 = vst [vmem:[%s2900] ss:$9 sm:$0xff] %v2099
    %3159 = vst [vmem:[%s2902] ss:$9 sm:$0xff] %v2100
    %3160 = vst [vmem:[%s2904] ss:$9 sm:$0xff] %v2101
    %3161 = vst [vmem:[%s2906] ss:$9 sm:$0xff] %v2102
    %3162 = vst [vmem:[%s2908] ss:$9 sm:$0xff] %v2103
    %3163 = vst [vmem:[%s2910] ss:$9 sm:$0xff] %v2104
    %v3164 = vld [vmem:[#allocation1] sm:$0xff]
    %3165 = vst [vmem:[#allocation1] ss:$9 sm:$0xff] %v2105
    %3166 = vst [vmem:[%s2898] ss:$9 sm:$0xff] %v2106
    %3167 = vst [vmem:[%s2900] ss:$9 sm:$0xff] %v2107
    %3168 = vst [vmem:[%s2902] ss:$9 sm:$0xff] %v2108
    %3169 = vst [vmem:[%s2904] ss:$9 sm:$0xff] %v2109
    %3170 = vst [vmem:[%s2906] ss:$9 sm:$0xff] %v2110
    %3171 = vst [vmem:[%s2908] ss:$9 sm:$0xff] %v2111
    %3172 = vst [vmem:[%s2910] ss:$9 sm:$0xff] %v2112
    %v3173 = vld [vmem:[#allocation1] sm:$0xff]
    %3174 = vst [vmem:[#allocation1] ss:$9 sm:$0xff] %v2113
    %3175 = vst [vmem:[%s2898] ss:$9 sm:$0xff] %v2114
    %3176 = vst [vmem:[%s2900] ss:$9 sm:$0xff] %v2115
    %3177 = vst [vmem:[%s2902] ss:$9 sm:$0xff] %v2116
    %3178 = vst [vmem:[%s2904] ss:$9 sm:$0xff] %v2117
    %3179 = vst [vmem:[%s2906] ss:$9 sm:$0xff] %v2118
    %3180 = vst [vmem:[%s2908] ss:$9 sm:$0xff] %v2119
    %3181 = vst [vmem:[%s2910] ss:$9 sm:$0xff] %v2120
    %v3182 = vld [vmem:[#allocation1] sm:$0xff]
    %3183 = vst [vmem:[#allocation1] ss:$9 sm:$0xff] %v2121
    %3184 = vst [vmem:[%s2898] ss:$9 sm:$0xff] %v2122
    %3185 = vst [vmem:[%s2900] ss:$9 sm:$0xff] %v2123
    %3186 = vst [vmem:[%s2902] ss:$9 sm:$0xff] %v2124
    %3187 = vst [vmem:[%s2904] ss:$9 sm:$0xff] %v2125
    %3188 = vst [vmem:[%s2906] ss:$9 sm:$0xff] %v2126
    %3189 = vst [vmem:[%s2908] ss:$9 sm:$0xff] %v2127
    %3190 = vst [vmem:[%s2910] ss:$9 sm:$0xff] %v2128
    %v3191 = vld [vmem:[#allocation1] sm:$0xff]
    %3192 = vst [vmem:[#allocation1] ss:$9 sm:$0xff] %v2129
    %3193 = vst [vmem:[%s2898] ss:$9 sm:$0xff] %v2130
    %3194 = vst [vmem:[%s2900] ss:$9 sm:$0xff] %v2131
    %3195 = vst [vmem:[%s2902] ss:$9 sm:$0xff] %v2132
    %3196 = vst [vmem:[%s2904] ss:$9 sm:$0xff] %v2133
    %3197 = vst [vmem:[%s2906] ss:$9 sm:$0xff] %v2134
    %3198 = vst [vmem:[%s2908] ss:$9 sm:$0xff] %v2135
    %3199 = vst [vmem:[%s2910] ss:$9 sm:$0xff] %v2136
    %v3200 = vld [vmem:[#allocation1] sm:$0xff]
    %3201 = vst [vmem:[#allocation1] ss:$9 sm:$0xff] %v2137
    %3202 = vst [vmem:[%s2898] ss:$9 sm:$0xff] %v2138
    %3203 = vst [vmem:[%s2900] ss:$9 sm:$0xff] %v2139
    %3204 = vst [vmem:[%s2902] ss:$9 sm:$0xff] %v2140
    %3205 = vst [vmem:[%s2904] ss:$9 sm:$0xff] %v2141
    %3206 = vst [vmem:[%s2906] ss:$9 sm:$0xff] %v2142
    %3207 = vst [vmem:[%s2908] ss:$9 sm:$0xff] %v2143
    %3208 = vst [vmem:[%s2910] ss:$9 sm:$0xff] %v2144
    %v3209 = vld [vmem:[#allocation1] sm:$0xff]
    %3210 = vst [vmem:[#allocation1] ss:$9 sm:$0xff] %v2145
    %3211 = vst [vmem:[%s2898] ss:$9 sm:$0xff] %v2146
    %3212 = vst [vmem:[%s2900] ss:$9 sm:$0xff] %v2147
    %3213 = vst [vmem:[%s2902] ss:$9 sm:$0xff] %v2148
    %3214 = vst [vmem:[%s2904] ss:$9 sm:$0xff] %v2149
    %3215 = vst [vmem:[%s2906] ss:$9 sm:$0xff] %v2150
    %3216 = vst [vmem:[%s2908] ss:$9 sm:$0xff] %v2151
    %3217 = vst [vmem:[%s2910] ss:$9 sm:$0xff] %v2152
    %v3218 = vld [vmem:[#allocation1] sm:$0xff]
    %3219 = vst [vmem:[#allocation1] ss:$9 sm:$0xff] %v2153
    %3220 = vst [vmem:[%s2898] ss:$9 sm:$0xff] %v2154
    %3221 = vst [vmem:[%s2900] ss:$9 sm:$0xff] %v2155
    %3222 = vst [vmem:[%s2902] ss:$9 sm:$0xff] %v2156
    %3223 = vst [vmem:[%s2904] ss:$9 sm:$0xff] %v2157
    %3224 = vst [vmem:[%s2906] ss:$9 sm:$0xff] %v2158
    %3225 = vst [vmem:[%s2908] ss:$9 sm:$0xff] %v2159
    %3226 = vst [vmem:[%s2910] ss:$9 sm:$0xff] %v2160
    %v3227 = vld [vmem:[#allocation1] sm:$0xff]
    %3228 = vst [vmem:[#allocation1] ss:$9 sm:$0xff] %v2161
    %3229 = vst [vmem:[%s2898] ss:$9 sm:$0xff] %v2162
    %3230 = vst [vmem:[%s2900] ss:$9 sm:$0xff] %v2163
    %3231 = vst [vmem:[%s2902] ss:$9 sm:$0xff] %v2164
    %3232 = vst [vmem:[%s2904] ss:$9 sm:$0xff] %v2165
    %3233 = vst [vmem:[%s2906] ss:$9 sm:$0xff] %v2166
    %3234 = vst [vmem:[%s2908] ss:$9 sm:$0xff] %v2167
    %3235 = vst [vmem:[%s2910] ss:$9 sm:$0xff] %v2168
    %v3236 = vld [vmem:[#allocation1] sm:$0xff]
    %3237 = vst [vmem:[#allocation1] ss:$9 sm:$0xff] %v2169
    %3238 = vst [vmem:[%s2898] ss:$9 sm:$0xff] %v2170
    %3239 = vst [vmem:[%s2900] ss:$9 sm:$0xff] %v2171
    %3240 = vst [vmem:[%s2902] ss:$9 sm:$0xff] %v2172
    %3241 = vst [vmem:[%s2904] ss:$9 sm:$0xff] %v2173
    %3242 = vst [vmem:[%s2906] ss:$9 sm:$0xff] %v2174
    %3243 = vst [vmem:[%s2908] ss:$9 sm:$0xff] %v2175
    %3244 = vst [vmem:[%s2910] ss:$9 sm:$0xff] %v2176
    %v3245 = vld [vmem:[#allocation1] sm:$0xff]
    %3246 = vst [vmem:[#allocation1] ss:$9 sm:$0xff] %v2177
    %3247 = vst [vmem:[%s2898] ss:$9 sm:$0xff] %v2178
    %3248 = vst [vmem:[%s2900] ss:$9 sm:$0xff] %v2179
    %3249 = vst [vmem:[%s2902] ss:$9 sm:$0xff] %v2180
    %3250 = vst [vmem:[%s2904] ss:$9 sm:$0xff] %v2181
    %3251 = vst [vmem:[%s2906] ss:$9 sm:$0xff] %v2182
    %3252 = vst [vmem:[%s2908] ss:$9 sm:$0xff] %v2183
    %3253 = vst [vmem:[%s2910] ss:$9 sm:$0xff] %v2184
    %v3254 = vld [vmem:[#allocation1] sm:$0xff]
    %3255 = vst [vmem:[#allocation1] ss:$9 sm:$0xff] %v2185
    %3256 = vst [vmem:[%s2898] ss:$9 sm:$0xff] %v2186
    %3257 = vst [vmem:[%s2900] ss:$9 sm:$0xff] %v2187
    %3258 = vst [vmem:[%s2902] ss:$9 sm:$0xff] %v2188
    %3259 = vst [vmem:[%s2904] ss:$9 sm:$0xff] %v2189
    %3260 = vst [vmem:[%s2906] ss:$9 sm:$0xff] %v2190
    %3261 = vst [vmem:[%s2908] ss:$9 sm:$0xff] %v2191
    %3262 = vst [vmem:[%s2910] ss:$9 sm:$0xff] %v2192
    %v3263 = vld [vmem:[#allocation1] sm:$0xff]
    %3264 = vst [vmem:[#allocation1] ss:$9 sm:$0xff] %v2193
    %3265 = vst [vmem:[%s2898] ss:$9 sm:$0xff] %v2194
    %3266 = vst [vmem:[%s2900] ss:$9 sm:$0xff] %v2195
    %3267 = vst [vmem:[%s2902] ss:$9 sm:$0xff] %v2196
    %3268 = vst [vmem:[%s2904] ss:$9 sm:$0xff] %v2197
    %3269 = vst [vmem:[%s2906] ss:$9 sm:$0xff] %v2198
    %3270 = vst [vmem:[%s2908] ss:$9 sm:$0xff] %v2199
    %3271 = vst [vmem:[%s2910] ss:$9 sm:$0xff] %v2200
    %v3272 = vld [vmem:[#allocation1] sm:$0xff]
    %3273 = vst [vmem:[#allocation1] ss:$9 sm:$0xff] %v2201
    %3274 = vst [vmem:[%s2898] ss:$9 sm:$0xff] %v2202
    %3275 = vst [vmem:[%s2900] ss:$9 sm:$0xff] %v2203
    %3276 = vst [vmem:[%s2902] ss:$9 sm:$0xff] %v2204
    %3277 = vst [vmem:[%s2904] ss:$9 sm:$0xff] %v2205
    %3278 = vst [vmem:[%s2906] ss:$9 sm:$0xff] %v2206
    %3279 = vst [vmem:[%s2908] ss:$9 sm:$0xff] %v2207
    %3280 = vst [vmem:[%s2910] ss:$9 sm:$0xff] %v2208
    %v3281 = vld [vmem:[#allocation1] sm:$0xff]
    %3282 = vst [vmem:[#allocation1] ss:$9 sm:$0xff] %v2209
    %3283 = vst [vmem:[%s2898] ss:$9 sm:$0xff] %v2210
    %3284 = vst [vmem:[%s2900] ss:$9 sm:$0xff] %v2211
    %3285 = vst [vmem:[%s2902] ss:$9 sm:$0xff] %v2212
    %3286 = vst [vmem:[%s2904] ss:$9 sm:$0xff] %v2213
    %3287 = vst [vmem:[%s2906] ss:$9 sm:$0xff] %v2214
    %3288 = vst [vmem:[%s2908] ss:$9 sm:$0xff] %v2215
    %3289 = vst [vmem:[%s2910] ss:$9 sm:$0xff] %v2216
    %v3290 = vld [vmem:[#allocation1] sm:$0xff]
    %3291 = vst [vmem:[#allocation1] ss:$9 sm:$0xff] %v2217
    %3292 = vst [vmem:[%s2898] ss:$9 sm:$0xff] %v2218
    %3293 = vst [vmem:[%s2900] ss:$9 sm:$0xff] %v2219
    %3294 = vst [vmem:[%s2902] ss:$9 sm:$0xff] %v2220
    %3295 = vst [vmem:[%s2904] ss:$9 sm:$0xff] %v2221
    %3296 = vst [vmem:[%s2906] ss:$9 sm:$0xff] %v2222
    %3297 = vst [vmem:[%s2908] ss:$9 sm:$0xff] %v2223
    %3298 = vst [vmem:[%s2910] ss:$9 sm:$0xff] %v2224
    %v3299 = vld [vmem:[#allocation1] sm:$0xff]
    %3300 = vst [vmem:[#allocation1] ss:$9 sm:$0xff] %v2225
    %3301 = vst [vmem:[%s2898] ss:$9 sm:$0xff] %v2226
    %3302 = vst [vmem:[%s2900] ss:$9 sm:$0xff] %v2227
    %3303 = vst [vmem:[%s2902] ss:$9 sm:$0xff] %v2228
    %3304 = vst [vmem:[%s2904] ss:$9 sm:$0xff] %v2229
    %3305 = vst [vmem:[%s2906] ss:$9 sm:$0xff] %v2230
    %3306 = vst [vmem:[%s2908] ss:$9 sm:$0xff] %v2231
    %3307 = vst [vmem:[%s2910] ss:$9 sm:$0xff] %v2232
    %v3308 = vld [vmem:[#allocation1] sm:$0xff]
    %3309 = vst [vmem:[#allocation1] ss:$9 sm:$0xff] %v2233
    %3310 = vst [vmem:[%s2898] ss:$9 sm:$0xff] %v2234
    %3311 = vst [vmem:[%s2900] ss:$9 sm:$0xff] %v2235
    %3312 = vst [vmem:[%s2902] ss:$9 sm:$0xff] %v2236
    %3313 = vst [vmem:[%s2904] ss:$9 sm:$0xff] %v2237
    %3314 = vst [vmem:[%s2906] ss:$9 sm:$0xff] %v2238
    %3315 = vst [vmem:[%s2908] ss:$9 sm:$0xff] %v2239
    %3316 = vst [vmem:[%s2910] ss:$9 sm:$0xff] %v2240
    %v3317 = vld [vmem:[#allocation1] sm:$0xff]
    %3318 = vst [vmem:[#allocation1] ss:$9 sm:$0xff] %v2241
    %3319 = vst [vmem:[%s2898] ss:$9 sm:$0xff] %v2242
    %3320 = vst [vmem:[%s2900] ss:$9 sm:$0xff] %v2243
    %3321 = vst [vmem:[%s2902] ss:$9 sm:$0xff] %v2244
    %3322 = vst [vmem:[%s2904] ss:$9 sm:$0xff] %v2245
    %3323 = vst [vmem:[%s2906] ss:$9 sm:$0xff] %v2246
    %3324 = vst [vmem:[%s2908] ss:$9 sm:$0xff] %v2247
    %3325 = vst [vmem:[%s2910] ss:$9 sm:$0xff] %v2248
    %v3326 = vld [vmem:[#allocation1] sm:$0xff]
    %3327 = vst [vmem:[#allocation1] ss:$9 sm:$0xff] %v2249
    %3328 = vst [vmem:[%s2898] ss:$9 sm:$0xff] %v2250
    %3329 = vst [vmem:[%s2900] ss:$9 sm:$0xff] %v2251
    %3330 = vst [vmem:[%s2902] ss:$9 sm:$0xff] %v2252
    %3331 = vst [vmem:[%s2904] ss:$9 sm:$0xff] %v2253
    %3332 = vst [vmem:[%s2906] ss:$9 sm:$0xff] %v2254
    %3333 = vst [vmem:[%s2908] ss:$9 sm:$0xff] %v2255
    %3334 = vst [vmem:[%s2910] ss:$9 sm:$0xff] %v2256
    %v3335 = vld [vmem:[#allocation1] sm:$0xff]
    %3336 = vst [vmem:[#allocation1] ss:$9 sm:$0xff] %v2257
    %3337 = vst [vmem:[%s2898] ss:$9 sm:$0xff] %v2258
    %3338 = vst [vmem:[%s2900] ss:$9 sm:$0xff] %v2259
    %3339 = vst [vmem:[%s2902] ss:$9 sm:$0xff] %v2260
    %3340 = vst [vmem:[%s2904] ss:$9 sm:$0xff] %v2261
    %3341 = vst [vmem:[%s2906] ss:$9 sm:$0xff] %v2262
    %3342 = vst [vmem:[%s2908] ss:$9 sm:$0xff] %v2263
    %3343 = vst [vmem:[%s2910] ss:$9 sm:$0xff] %v2264
    %v3344 = vld [vmem:[#allocation1] sm:$0xff]
    %3345 = vst [vmem:[#allocation1] ss:$9 sm:$0xff] %v2265
    %3346 = vst [vmem:[%s2898] ss:$9 sm:$0xff] %v2266
    %3347 = vst [vmem:[%s2900] ss:$9 sm:$0xff] %v2267
    %3348 = vst [vmem:[%s2902] ss:$9 sm:$0xff] %v2268
    %3349 = vst [vmem:[%s2904] ss:$9 sm:$0xff] %v2269
    %3350 = vst [vmem:[%s2906] ss:$9 sm:$0xff] %v2270
    %3351 = vst [vmem:[%s2908] ss:$9 sm:$0xff] %v2271
    %3352 = vst [vmem:[%s2910] ss:$9 sm:$0xff] %v2272
    %v3353 = vld [vmem:[#allocation1] sm:$0xff]
    %3354 = vst [vmem:[#allocation1] ss:$9 sm:$0xff] %v2273
    %3355 = vst [vmem:[%s2898] ss:$9 sm:$0xff] %v2274
    %3356 = vst [vmem:[%s2900] ss:$9 sm:$0xff] %v2275
    %3357 = vst [vmem:[%s2902] ss:$9 sm:$0xff] %v2276
    %3358 = vst [vmem:[%s2904] ss:$9 sm:$0xff] %v2277
    %3359 = vst [vmem:[%s2906] ss:$9 sm:$0xff] %v2278
    %3360 = vst [vmem:[%s2908] ss:$9 sm:$0xff] %v2279
    %3361 = vst [vmem:[%s2910] ss:$9 sm:$0xff] %v2280
    %v3362 = vld [vmem:[#allocation1] sm:$0xff]
    %3363 = vst [vmem:[#allocation1] ss:$9 sm:$0xff] %v2281
    %3364 = vst [vmem:[%s2898] ss:$9 sm:$0xff] %v2282
    %3365 = vst [vmem:[%s2900] ss:$9 sm:$0xff] %v2283
    %3366 = vst [vmem:[%s2902] ss:$9 sm:$0xff] %v2284
    %3367 = vst [vmem:[%s2904] ss:$9 sm:$0xff] %v2285
    %3368 = vst [vmem:[%s2906] ss:$9 sm:$0xff] %v2286
    %3369 = vst [vmem:[%s2908] ss:$9 sm:$0xff] %v2287
    %3370 = vst [vmem:[%s2910] ss:$9 sm:$0xff] %v2288
    %v3371 = vld [vmem:[#allocation1] sm:$0xff]
    %3372 = vst [vmem:[#allocation1] ss:$9 sm:$0xff] %v2289
    %3373 = vst [vmem:[%s2898] ss:$9 sm:$0xff] %v2290
    %3374 = vst [vmem:[%s2900] ss:$9 sm:$0xff] %v2291
    %3375 = vst [vmem:[%s2902] ss:$9 sm:$0xff] %v2292
    %3376 = vst [vmem:[%s2904] ss:$9 sm:$0xff] %v2293
    %3377 = vst [vmem:[%s2906] ss:$9 sm:$0xff] %v2294
    %3378 = vst [vmem:[%s2908] ss:$9 sm:$0xff] %v2295
    %3379 = vst [vmem:[%s2910] ss:$9 sm:$0xff] %v2296
    %v3380 = vld [vmem:[#allocation1] sm:$0xff]
    %3381 = vst [vmem:[#allocation1] ss:$9 sm:$0xff] %v2297
    %3382 = vst [vmem:[%s2898] ss:$9 sm:$0xff] %v2298
    %3383 = vst [vmem:[%s2900] ss:$9 sm:$0xff] %v2299
    %3384 = vst [vmem:[%s2902] ss:$9 sm:$0xff] %v2300
    %3385 = vst [vmem:[%s2904] ss:$9 sm:$0xff] %v2301
    %3386 = vst [vmem:[%s2906] ss:$9 sm:$0xff] %v2302
    %3387 = vst [vmem:[%s2908] ss:$9 sm:$0xff] %v2303
    %3388 = vst [vmem:[%s2910] ss:$9 sm:$0xff] %v2304
    %v3389 = vld [vmem:[#allocation1] sm:$0xff]
    %3390 = vst [vmem:[#allocation1] ss:$9 sm:$0xff] %v2305
    %3391 = vst [vmem:[%s2898] ss:$9 sm:$0xff] %v2306
    %3392 = vst [vmem:[%s2900] ss:$9 sm:$0xff] %v2307
    %3393 = vst [vmem:[%s2902] ss:$9 sm:$0xff] %v2308
    %3394 = vst [vmem:[%s2904] ss:$9 sm:$0xff] %v2309
    %3395 = vst [vmem:[%s2906] ss:$9 sm:$0xff] %v2310
    %3396 = vst [vmem:[%s2908] ss:$9 sm:$0xff] %v2311
    %3397 = vst [vmem:[%s2910] ss:$9 sm:$0xff] %v2312
    %v3398 = vld [vmem:[#allocation1] sm:$0xff]
    %3399 = vst [vmem:[#allocation1] ss:$9 sm:$0xff] %v2313
    %3400 = vst [vmem:[%s2898] ss:$9 sm:$0xff] %v2314
    %3401 = vst [vmem:[%s2900] ss:$9 sm:$0xff] %v2315
    %3402 = vst [vmem:[%s2902] ss:$9 sm:$0xff] %v2316
    %3403 = vst [vmem:[%s2904] ss:$9 sm:$0xff] %v2317
    %3404 = vst [vmem:[%s2906] ss:$9 sm:$0xff] %v2318
    %3405 = vst [vmem:[%s2908] ss:$9 sm:$0xff] %v2319
    %3406 = vst [vmem:[%s2910] ss:$9 sm:$0xff] %v2320
    %v3407 = vld [vmem:[#allocation1] sm:$0xff]
    %3408 = vst [vmem:[#allocation1] ss:$9 sm:$0xff] %v2321
    %3409 = vst [vmem:[%s2898] ss:$9 sm:$0xff] %v2322
    %3410 = vst [vmem:[%s2900] ss:$9 sm:$0xff] %v2323
    %3411 = vst [vmem:[%s2902] ss:$9 sm:$0xff] %v2324
    %3412 = vst [vmem:[%s2904] ss:$9 sm:$0xff] %v2325
    %3413 = vst [vmem:[%s2906] ss:$9 sm:$0xff] %v2326
    %3414 = vst [vmem:[%s2908] ss:$9 sm:$0xff] %v2327
    %3415 = vst [vmem:[%s2910] ss:$9 sm:$0xff] %v2328
    %v3416 = vld [vmem:[#allocation1] sm:$0xff]
    %3417 = vst [vmem:[#allocation1] ss:$9 sm:$0xff] %v2329
    %3418 = vst [vmem:[%s2898] ss:$9 sm:$0xff] %v2330
    %3419 = vst [vmem:[%s2900] ss:$9 sm:$0xff] %v2331
    %3420 = vst [vmem:[%s2902] ss:$9 sm:$0xff] %v2332
    %3421 = vst [vmem:[%s2904] ss:$9 sm:$0xff] %v2333
    %3422 = vst [vmem:[%s2906] ss:$9 sm:$0xff] %v2334
    %3423 = vst [vmem:[%s2908] ss:$9 sm:$0xff] %v2335
    %3424 = vst [vmem:[%s2910] ss:$9 sm:$0xff] %v2336
    %v3425 = vld [vmem:[#allocation1] sm:$0xff]
    %3426 = vst [vmem:[#allocation1] ss:$9 sm:$0xff] %v2337
    %3427 = vst [vmem:[%s2898] ss:$9 sm:$0xff] %v2338
    %3428 = vst [vmem:[%s2900] ss:$9 sm:$0xff] %v2339
    %3429 = vst [vmem:[%s2902] ss:$9 sm:$0xff] %v2340
    %3430 = vst [vmem:[%s2904] ss:$9 sm:$0xff] %v2341
    %3431 = vst [vmem:[%s2906] ss:$9 sm:$0xff] %v2342
    %3432 = vst [vmem:[%s2908] ss:$9 sm:$0xff] %v2343
    %3433 = vst [vmem:[%s2910] ss:$9 sm:$0xff] %v2344
    %v3434 = vld [vmem:[#allocation1] sm:$0xff]
    %3435 = vst [vmem:[#allocation1] ss:$9 sm:$0xff] %v2345
    %3436 = vst [vmem:[%s2898] ss:$9 sm:$0xff] %v2346
    %3437 = vst [vmem:[%s2900] ss:$9 sm:$0xff] %v2347
    %3438 = vst [vmem:[%s2902] ss:$9 sm:$0xff] %v2348
    %3439 = vst [vmem:[%s2904] ss:$9 sm:$0xff] %v2349
    %3440 = vst [vmem:[%s2906] ss:$9 sm:$0xff] %v2350
    %3441 = vst [vmem:[%s2908] ss:$9 sm:$0xff] %v2351
    %3442 = vst [vmem:[%s2910] ss:$9 sm:$0xff] %v2352
    %v3443 = vld [vmem:[#allocation1] sm:$0xff]
    %3444 = vst [vmem:[#allocation1] ss:$9 sm:$0xff] %v2353
    %3445 = vst [vmem:[%s2898] ss:$9 sm:$0xff] %v2354
    %3446 = vst [vmem:[%s2900] ss:$9 sm:$0xff] %v2355
    %3447 = vst [vmem:[%s2902] ss:$9 sm:$0xff] %v2356
    %3448 = vst [vmem:[%s2904] ss:$9 sm:$0xff] %v2357
    %3449 = vst [vmem:[%s2906] ss:$9 sm:$0xff] %v2358
    %3450 = vst [vmem:[%s2908] ss:$9 sm:$0xff] %v2359
    %3451 = vst [vmem:[%s2910] ss:$9 sm:$0xff] %v2360
    %v3452 = vld [vmem:[#allocation1] sm:$0xff]
    %3453 = vst [vmem:[#allocation1] ss:$9 sm:$0xff] %v2361
    %3454 = vst [vmem:[%s2898] ss:$9 sm:$0xff] %v2362
    %3455 = vst [vmem:[%s2900] ss:$9 sm:$0xff] %v2363
    %3456 = vst [vmem:[%s2902] ss:$9 sm:$0xff] %v2364
    %3457 = vst [vmem:[%s2904] ss:$9 sm:$0xff] %v2365
    %3458 = vst [vmem:[%s2906] ss:$9 sm:$0xff] %v2366
    %3459 = vst [vmem:[%s2908] ss:$9 sm:$0xff] %v2367
    %3460 = vst [vmem:[%s2910] ss:$9 sm:$0xff] %v2368
    %v3461 = vld [vmem:[#allocation1] sm:$0xff]
    %3462 = vst [vmem:[#allocation1] ss:$9 sm:$0xff] %v2369
    %3463 = vst [vmem:[%s2898] ss:$9 sm:$0xff] %v2370
    %3464 = vst [vmem:[%s2900] ss:$9 sm:$0xff] %v2371
    %3465 = vst [vmem:[%s2902] ss:$9 sm:$0xff] %v2372
    %3466 = vst [vmem:[%s2904] ss:$9 sm:$0xff] %v2373
    %3467 = vst [vmem:[%s2906] ss:$9 sm:$0xff] %v2374
    %3468 = vst [vmem:[%s2908] ss:$9 sm:$0xff] %v2375
    %3469 = vst [vmem:[%s2910] ss:$9 sm:$0xff] %v2376
    %v3470 = vld [vmem:[#allocation1] sm:$0xff]
    %3471 = vst [vmem:[#allocation1] ss:$9 sm:$0xff] %v2377
    %3472 = vst [vmem:[%s2898] ss:$9 sm:$0xff] %v2378
    %3473 = vst [vmem:[%s2900] ss:$9 sm:$0xff] %v2379
    %3474 = vst [vmem:[%s2902] ss:$9 sm:$0xff] %v2380
    %3475 = vst [vmem:[%s2904] ss:$9 sm:$0xff] %v2381
    %3476 = vst [vmem:[%s2906] ss:$9 sm:$0xff] %v2382
    %3477 = vst [vmem:[%s2908] ss:$9 sm:$0xff] %v2383
    %3478 = vst [vmem:[%s2910] ss:$9 sm:$0xff] %v2384
    %v3479 = vld [vmem:[#allocation1] sm:$0xff]
    %3480 = vst [vmem:[#allocation1] ss:$9 sm:$0xff] %v2385
    %3481 = vst [vmem:[%s2898] ss:$9 sm:$0xff] %v2386
    %3482 = vst [vmem:[%s2900] ss:$9 sm:$0xff] %v2387
    %3483 = vst [vmem:[%s2902] ss:$9 sm:$0xff] %v2388
    %3484 = vst [vmem:[%s2904] ss:$9 sm:$0xff] %v2389
    %3485 = vst [vmem:[%s2906] ss:$9 sm:$0xff] %v2390
    %3486 = vst [vmem:[%s2908] ss:$9 sm:$0xff] %v2391
    %3487 = vst [vmem:[%s2910] ss:$9 sm:$0xff] %v2392
    %v3488 = vld [vmem:[#allocation1] sm:$0xff]
    %3489 = vst [vmem:[#allocation1] ss:$9 sm:$0xff] %v2393
    %3490 = vst [vmem:[%s2898] ss:$9 sm:$0xff] %v2394
    %3491 = vst [vmem:[%s2900] ss:$9 sm:$0xff] %v2395
    %3492 = vst [vmem:[%s2902] ss:$9 sm:$0xff] %v2396
    %3493 = vst [vmem:[%s2904] ss:$9 sm:$0xff] %v2397
    %3494 = vst [vmem:[%s2906] ss:$9 sm:$0xff] %v2398
    %3495 = vst [vmem:[%s2908] ss:$9 sm:$0xff] %v2399
    %3496 = vst [vmem:[%s2910] ss:$9 sm:$0xff] %v2400
    %v3497 = vld [vmem:[#allocation1] sm:$0xff]
    %3498 = vst [vmem:[#allocation1] ss:$9 sm:$0xff] %v2401
    %3499 = vst [vmem:[%s2898] ss:$9 sm:$0xff] %v2402
    %3500 = vst [vmem:[%s2900] ss:$9 sm:$0xff] %v2403
    %3501 = vst [vmem:[%s2902] ss:$9 sm:$0xff] %v2404
    %3502 = vst [vmem:[%s2904] ss:$9 sm:$0xff] %v2405
    %3503 = vst [vmem:[%s2906] ss:$9 sm:$0xff] %v2406
    %3504 = vst [vmem:[%s2908] ss:$9 sm:$0xff] %v2407
    %3505 = vst [vmem:[%s2910] ss:$9 sm:$0xff] %v2408
    %v3506 = vld [vmem:[#allocation1] sm:$0xff]
    %3507 = vst [vmem:[#allocation1] ss:$9 sm:$0xff] %v2409
    %3508 = vst [vmem:[%s2898] ss:$9 sm:$0xff] %v2410
    %3509 = vst [vmem:[%s2900] ss:$9 sm:$0xff] %v2411
    %3510 = vst [vmem:[%s2902] ss:$9 sm:$0xff] %v2412
    %3511 = vst [vmem:[%s2904] ss:$9 sm:$0xff] %v2413
    %3512 = vst [vmem:[%s2906] ss:$9 sm:$0xff] %v2414
    %3513 = vst [vmem:[%s2908] ss:$9 sm:$0xff] %v2415
    %3514 = vst [vmem:[%s2910] ss:$9 sm:$0xff] %v2416
    %v3515 = vld [vmem:[#allocation1] sm:$0xff]
    %3516 = vst [vmem:[#allocation1] ss:$9 sm:$0xff] %v2417
    %3517 = vst [vmem:[%s2898] ss:$9 sm:$0xff] %v2418
    %3518 = vst [vmem:[%s2900] ss:$9 sm:$0xff] %v2419
    %3519 = vst [vmem:[%s2902] ss:$9 sm:$0xff] %v2420
    %3520 = vst [vmem:[%s2904] ss:$9 sm:$0xff] %v2421
    %3521 = vst [vmem:[%s2906] ss:$9 sm:$0xff] %v2422
    %3522 = vst [vmem:[%s2908] ss:$9 sm:$0xff] %v2423
    %3523 = vst [vmem:[%s2910] ss:$9 sm:$0xff] %v2424
    %v3524 = vld [vmem:[#allocation1] sm:$0xff]
    %3525 = vst [vmem:[#allocation1] ss:$9 sm:$0xff] %v2425
    %3526 = vst [vmem:[%s2898] ss:$9 sm:$0xff] %v2426
    %3527 = vst [vmem:[%s2900] ss:$9 sm:$0xff] %v2427
    %3528 = vst [vmem:[%s2902] ss:$9 sm:$0xff] %v2428
    %3529 = vst [vmem:[%s2904] ss:$9 sm:$0xff] %v2429
    %3530 = vst [vmem:[%s2906] ss:$9 sm:$0xff] %v2430
    %3531 = vst [vmem:[%s2908] ss:$9 sm:$0xff] %v2431
    %3532 = vst [vmem:[%s2910] ss:$9 sm:$0xff] %v2432
    %v3533 = vld [vmem:[#allocation1] sm:$0xff]
    %3534 = vst [vmem:[#allocation1] ss:$9 sm:$0xff] %v2433
    %3535 = vst [vmem:[%s2898] ss:$9 sm:$0xff] %v2434
    %3536 = vst [vmem:[%s2900] ss:$9 sm:$0xff] %v2435
    %3537 = vst [vmem:[%s2902] ss:$9 sm:$0xff] %v2436
    %3538 = vst [vmem:[%s2904] ss:$9 sm:$0xff] %v2437
    %3539 = vst [vmem:[%s2906] ss:$9 sm:$0xff] %v2438
    %3540 = vst [vmem:[%s2908] ss:$9 sm:$0xff] %v2439
    %3541 = vst [vmem:[%s2910] ss:$9 sm:$0xff] %v2440
    %v3542 = vld [vmem:[#allocation1] sm:$0xff]
    %3543 = vst [vmem:[#allocation1] ss:$9 sm:$0xff] %v2441
    %3544 = vst [vmem:[%s2898] ss:$9 sm:$0xff] %v2442
    %3545 = vst [vmem:[%s2900] ss:$9 sm:$0xff] %v2443
    %3546 = vst [vmem:[%s2902] ss:$9 sm:$0xff] %v2444
    %3547 = vst [vmem:[%s2904] ss:$9 sm:$0xff] %v2445
    %3548 = vst [vmem:[%s2906] ss:$9 sm:$0xff] %v2446
    %3549 = vst [vmem:[%s2908] ss:$9 sm:$0xff] %v2447
    %3550 = vst [vmem:[%s2910] ss:$9 sm:$0xff] %v2448
    %v3551 = vld [vmem:[#allocation1] sm:$0xff]
    %3552 = vst [vmem:[#allocation1] ss:$9 sm:$0xff] %v2449
    %3553 = vst [vmem:[%s2898] ss:$9 sm:$0xff] %v2450
    %3554 = vst [vmem:[%s2900] ss:$9 sm:$0xff] %v2451
    %3555 = vst [vmem:[%s2902] ss:$9 sm:$0xff] %v2452
    %3556 = vst [vmem:[%s2904] ss:$9 sm:$0xff] %v2453
    %3557 = vst [vmem:[%s2906] ss:$9 sm:$0xff] %v2454
    %3558 = vst [vmem:[%s2908] ss:$9 sm:$0xff] %v2455
    %3559 = vst [vmem:[%s2910] ss:$9 sm:$0xff] %v2456
    %v3560 = vld [vmem:[#allocation1] sm:$0xff]
    %3561 = vst [vmem:[#allocation1] ss:$9 sm:$0xff] %v2457
    %3562 = vst [vmem:[%s2898] ss:$9 sm:$0xff] %v2458
    %3563 = vst [vmem:[%s2900] ss:$9 sm:$0xff] %v2459
    %3564 = vst [vmem:[%s2902] ss:$9 sm:$0xff] %v2460
    %3565 = vst [vmem:[%s2904] ss:$9 sm:$0xff] %v2461
    %3566 = vst [vmem:[%s2906] ss:$9 sm:$0xff] %v2462
    %3567 = vst [vmem:[%s2908] ss:$9 sm:$0xff] %v2463
    %3568 = vst [vmem:[%s2910] ss:$9 sm:$0xff] %v2464
    %v3569 = vld [vmem:[#allocation1] sm:$0xff]
    %3570 = vst [vmem:[#allocation1] ss:$9 sm:$0xff] %v2465
    %3571 = vst [vmem:[%s2898] ss:$9 sm:$0xff] %v2466
    %3572 = vst [vmem:[%s2900] ss:$9 sm:$0xff] %v2467
    %3573 = vst [vmem:[%s2902] ss:$9 sm:$0xff] %v2468
    %3574 = vst [vmem:[%s2904] ss:$9 sm:$0xff] %v2469
    %3575 = vst [vmem:[%s2906] ss:$9 sm:$0xff] %v2470
    %3576 = vst [vmem:[%s2908] ss:$9 sm:$0xff] %v2471
    %3577 = vst [vmem:[%s2910] ss:$9 sm:$0xff] %v2472
    %v3578 = vld [vmem:[#allocation1] sm:$0xff]
    %3579 = vst [vmem:[#allocation1] ss:$9 sm:$0xff] %v2473
    %3580 = vst [vmem:[%s2898] ss:$9 sm:$0xff] %v2474
    %3581 = vst [vmem:[%s2900] ss:$9 sm:$0xff] %v2475
    %3582 = vst [vmem:[%s2902] ss:$9 sm:$0xff] %v2476
    %3583 = vst [vmem:[%s2904] ss:$9 sm:$0xff] %v2477
    %3584 = vst [vmem:[%s2906] ss:$9 sm:$0xff] %v2478
    %3585 = vst [vmem:[%s2908] ss:$9 sm:$0xff] %v2479
    %3586 = vst [vmem:[%s2910] ss:$9 sm:$0xff] %v2480
    %v3587 = vld [vmem:[#allocation1] sm:$0xff]
    %3588 = vst [vmem:[#allocation1] ss:$9 sm:$0xff] %v2481
    %3589 = vst [vmem:[%s2898] ss:$9 sm:$0xff] %v2482
    %3590 = vst [vmem:[%s2900] ss:$9 sm:$0xff] %v2483
    %3591 = vst [vmem:[%s2902] ss:$9 sm:$0xff] %v2484
    %3592 = vst [vmem:[%s2904] ss:$9 sm:$0xff] %v2485
    %3593 = vst [vmem:[%s2906] ss:$9 sm:$0xff] %v2486
    %3594 = vst [vmem:[%s2908] ss:$9 sm:$0xff] %v2487
    %3595 = vst [vmem:[%s2910] ss:$9 sm:$0xff] %v2488
    %v3596 = vld [vmem:[#allocation1] sm:$0xff]
    %3597 = vst [vmem:[#allocation1] ss:$9 sm:$0xff] %v2489
    %3598 = vst [vmem:[%s2898] ss:$9 sm:$0xff] %v2490
    %3599 = vst [vmem:[%s2900] ss:$9 sm:$0xff] %v2491
    %3600 = vst [vmem:[%s2902] ss:$9 sm:$0xff] %v2492
    %3601 = vst [vmem:[%s2904] ss:$9 sm:$0xff] %v2493
    %3602 = vst [vmem:[%s2906] ss:$9 sm:$0xff] %v2494
    %3603 = vst [vmem:[%s2908] ss:$9 sm:$0xff] %v2495
    %3604 = vst [vmem:[%s2910] ss:$9 sm:$0xff] %v2496
    %v3605 = vld [vmem:[#allocation1] sm:$0xff]
    %3606 = vst [vmem:[#allocation1] ss:$9 sm:$0xff] %v2497
    %3607 = vst [vmem:[%s2898] ss:$9 sm:$0xff] %v2498
    %3608 = vst [vmem:[%s2900] ss:$9 sm:$0xff] %v2499
    %3609 = vst [vmem:[%s2902] ss:$9 sm:$0xff] %v2500
    %3610 = vst [vmem:[%s2904] ss:$9 sm:$0xff] %v2501
    %3611 = vst [vmem:[%s2906] ss:$9 sm:$0xff] %v2502
    %3612 = vst [vmem:[%s2908] ss:$9 sm:$0xff] %v2503
    %3613 = vst [vmem:[%s2910] ss:$9 sm:$0xff] %v2504
    %v3614 = vld [vmem:[#allocation1] sm:$0xff]
    %3615 = vst [vmem:[#allocation1] ss:$9 sm:$0xff] %v2505
    %3616 = vst [vmem:[%s2898] ss:$9 sm:$0xff] %v2506
    %3617 = vst [vmem:[%s2900] ss:$9 sm:$0xff] %v2507
    %3618 = vst [vmem:[%s2902] ss:$9 sm:$0xff] %v2508
    %3619 = vst [vmem:[%s2904] ss:$9 sm:$0xff] %v2509
    %3620 = vst [vmem:[%s2906] ss:$9 sm:$0xff] %v2510
    %3621 = vst [vmem:[%s2908] ss:$9 sm:$0xff] %v2511
    %3622 = vst [vmem:[%s2910] ss:$9 sm:$0xff] %v2512
    %v3623 = vld [vmem:[#allocation1] sm:$0xff]
    %3624 = vst [vmem:[#allocation1] ss:$9 sm:$0xff] %v2513
    %3625 = vst [vmem:[%s2898] ss:$9 sm:$0xff] %v2514
    %3626 = vst [vmem:[%s2900] ss:$9 sm:$0xff] %v2515
    %3627 = vst [vmem:[%s2902] ss:$9 sm:$0xff] %v2516
    %3628 = vst [vmem:[%s2904] ss:$9 sm:$0xff] %v2517
    %3629 = vst [vmem:[%s2906] ss:$9 sm:$0xff] %v2518
    %3630 = vst [vmem:[%s2908] ss:$9 sm:$0xff] %v2519
    %3631 = vst [vmem:[%s2910] ss:$9 sm:$0xff] %v2520
    %v3632 = vld [vmem:[#allocation1] sm:$0xff]
    %3633 = vst [vmem:[#allocation1] ss:$9 sm:$0xff] %v2521
    %3634 = vst [vmem:[%s2898] ss:$9 sm:$0xff] %v2522
    %3635 = vst [vmem:[%s2900] ss:$9 sm:$0xff] %v2523
    %3636 = vst [vmem:[%s2902] ss:$9 sm:$0xff] %v2524
    %3637 = vst [vmem:[%s2904] ss:$9 sm:$0xff] %v2525
    %3638 = vst [vmem:[%s2906] ss:$9 sm:$0xff] %v2526
    %3639 = vst [vmem:[%s2908] ss:$9 sm:$0xff] %v2527
    %3640 = vst [vmem:[%s2910] ss:$9 sm:$0xff] %v2528
    %v3641 = vld [vmem:[#allocation1] sm:$0xff]
    %3642 = vst [vmem:[#allocation1] ss:$9 sm:$0xff] %v2529
    %3643 = vst [vmem:[%s2898] ss:$9 sm:$0xff] %v2530
    %3644 = vst [vmem:[%s2900] ss:$9 sm:$0xff] %v2531
    %3645 = vst [vmem:[%s2902] ss:$9 sm:$0xff] %v2532
    %3646 = vst [vmem:[%s2904] ss:$9 sm:$0xff] %v2533
    %3647 = vst [vmem:[%s2906] ss:$9 sm:$0xff] %v2534
    %3648 = vst [vmem:[%s2908] ss:$9 sm:$0xff] %v2535
    %3649 = vst [vmem:[%s2910] ss:$9 sm:$0xff] %v2536
    %v3650 = vld [vmem:[#allocation1] sm:$0xff]
    %3651 = vst [vmem:[#allocation1] ss:$9 sm:$0xff] %v2537
    %3652 = vst [vmem:[%s2898] ss:$9 sm:$0xff] %v2538
    %3653 = vst [vmem:[%s2900] ss:$9 sm:$0xff] %v2539
    %3654 = vst [vmem:[%s2902] ss:$9 sm:$0xff] %v2540
    %3655 = vst [vmem:[%s2904] ss:$9 sm:$0xff] %v2541
    %3656 = vst [vmem:[%s2906] ss:$9 sm:$0xff] %v2542
    %3657 = vst [vmem:[%s2908] ss:$9 sm:$0xff] %v2543
    %3658 = vst [vmem:[%s2910] ss:$9 sm:$0xff] %v2544
    %v3659 = vld [vmem:[#allocation1] sm:$0xff]
    %3660 = vst [vmem:[#allocation1] ss:$9 sm:$0xff] %v2545
    %3661 = vst [vmem:[%s2898] ss:$9 sm:$0xff] %v2546
    %3662 = vst [vmem:[%s2900] ss:$9 sm:$0xff] %v2547
    %3663 = vst [vmem:[%s2902] ss:$9 sm:$0xff] %v2548
    %3664 = vst [vmem:[%s2904] ss:$9 sm:$0xff] %v2549
    %3665 = vst [vmem:[%s2906] ss:$9 sm:$0xff] %v2550
    %3666 = vst [vmem:[%s2908] ss:$9 sm:$0xff] %v2551
    %3667 = vst [vmem:[%s2910] ss:$9 sm:$0xff] %v2552
    %v3668 = vld [vmem:[#allocation1] sm:$0xff]
    %3669 = vst [vmem:[#allocation1] ss:$9 sm:$0xff] %v2553
    %3670 = vst [vmem:[%s2898] ss:$9 sm:$0xff] %v2554
    %3671 = vst [vmem:[%s2900] ss:$9 sm:$0xff] %v2555
    %3672 = vst [vmem:[%s2902] ss:$9 sm:$0xff] %v2556
    %3673 = vst [vmem:[%s2904] ss:$9 sm:$0xff] %v2557
    %3674 = vst [vmem:[%s2906] ss:$9 sm:$0xff] %v2558
    %3675 = vst [vmem:[%s2908] ss:$9 sm:$0xff] %v2559
    %3676 = vst [vmem:[%s2910] ss:$9 sm:$0xff] %v2560
    %v3677 = vld [vmem:[#allocation1] sm:$0xff]
    %3678 = vst [vmem:[#allocation1] ss:$9 sm:$0xff] %v2561
    %3679 = vst [vmem:[%s2898] ss:$9 sm:$0xff] %v2562
    %3680 = vst [vmem:[%s2900] ss:$9 sm:$0xff] %v2563
    %3681 = vst [vmem:[%s2902] ss:$9 sm:$0xff] %v2564
    %3682 = vst [vmem:[%s2904] ss:$9 sm:$0xff] %v2565
    %3683 = vst [vmem:[%s2906] ss:$9 sm:$0xff] %v2566
    %3684 = vst [vmem:[%s2908] ss:$9 sm:$0xff] %v2567
    %3685 = vst [vmem:[%s2910] ss:$9 sm:$0xff] %v2568
    %v3686 = vld [vmem:[#allocation1] sm:$0xff]
    %3687 = vst [vmem:[#allocation1] ss:$9 sm:$0xff] %v2569
    %3688 = vst [vmem:[%s2898] ss:$9 sm:$0xff] %v2570
    %3689 = vst [vmem:[%s2900] ss:$9 sm:$0xff] %v2571
    %3690 = vst [vmem:[%s2902] ss:$9 sm:$0xff] %v2572
    %3691 = vst [vmem:[%s2904] ss:$9 sm:$0xff] %v2573
    %3692 = vst [vmem:[%s2906] ss:$9 sm:$0xff] %v2574
    %3693 = vst [vmem:[%s2908] ss:$9 sm:$0xff] %v2575
    %3694 = vst [vmem:[%s2910] ss:$9 sm:$0xff] %v2576
    %v3695 = vld [vmem:[#allocation1] sm:$0xff]
    %3696 = vst [vmem:[#allocation1] ss:$9 sm:$0xff] %v2577
    %3697 = vst [vmem:[%s2898] ss:$9 sm:$0xff] %v2578
    %3698 = vst [vmem:[%s2900] ss:$9 sm:$0xff] %v2579
    %3699 = vst [vmem:[%s2902] ss:$9 sm:$0xff] %v2580
    %3700 = vst [vmem:[%s2904] ss:$9 sm:$0xff] %v2581
    %3701 = vst [vmem:[%s2906] ss:$9 sm:$0xff] %v2582
    %3702 = vst [vmem:[%s2908] ss:$9 sm:$0xff] %v2583
    %3703 = vst [vmem:[%s2910] ss:$9 sm:$0xff] %v2584
    %v3704 = vld [vmem:[#allocation1] sm:$0xff]
    %3705 = vst [vmem:[#allocation1] ss:$9 sm:$0xff] %v2585
    %3706 = vst [vmem:[%s2898] ss:$9 sm:$0xff] %v2586
    %3707 = vst [vmem:[%s2900] ss:$9 sm:$0xff] %v2587
    %3708 = vst [vmem:[%s2902] ss:$9 sm:$0xff] %v2588
    %3709 = vst [vmem:[%s2904] ss:$9 sm:$0xff] %v2589
    %3710 = vst [vmem:[%s2906] ss:$9 sm:$0xff] %v2590
    %3711 = vst [vmem:[%s2908] ss:$9 sm:$0xff] %v2591
    %3712 = vst [vmem:[%s2910] ss:$9 sm:$0xff] %v2592
    %v3713 = vld [vmem:[#allocation1] sm:$0xff]
    %3714 = vst [vmem:[#allocation1] ss:$9 sm:$0xff] %v2593
    %3715 = vst [vmem:[%s2898] ss:$9 sm:$0xff] %v2594
    %3716 = vst [vmem:[%s2900] ss:$9 sm:$0xff] %v2595
    %3717 = vst [vmem:[%s2902] ss:$9 sm:$0xff] %v2596
    %3718 = vst [vmem:[%s2904] ss:$9 sm:$0xff] %v2597
    %3719 = vst [vmem:[%s2906] ss:$9 sm:$0xff] %v2598
    %3720 = vst [vmem:[%s2908] ss:$9 sm:$0xff] %v2599
    %3721 = vst [vmem:[%s2910] ss:$9 sm:$0xff] %v2600
    %v3722 = vld [vmem:[#allocation1] sm:$0xff]
    %3723 = vst [vmem:[#allocation1] ss:$9 sm:$0xff] %v2601
    %3724 = vst [vmem:[%s2898] ss:$9 sm:$0xff] %v2602
    %3725 = vst [vmem:[%s2900] ss:$9 sm:$0xff] %v2603
    %3726 = vst [vmem:[%s2902] ss:$9 sm:$0xff] %v2604
    %3727 = vst [vmem:[%s2904] ss:$9 sm:$0xff] %v2605
    %3728 = vst [vmem:[%s2906] ss:$9 sm:$0xff] %v2606
    %3729 = vst [vmem:[%s2908] ss:$9 sm:$0xff] %v2607
    %3730 = vst [vmem:[%s2910] ss:$9 sm:$0xff] %v2608
    %v3731 = vld [vmem:[#allocation1] sm:$0xff]
    %3732 = vst [vmem:[#allocation1] ss:$9 sm:$0xff] %v2609
    %3733 = vst [vmem:[%s2898] ss:$9 sm:$0xff] %v2610
    %3734 = vst [vmem:[%s2900] ss:$9 sm:$0xff] %v2611
    %3735 = vst [vmem:[%s2902] ss:$9 sm:$0xff] %v2612
    %3736 = vst [vmem:[%s2904] ss:$9 sm:$0xff] %v2613
    %3737 = vst [vmem:[%s2906] ss:$9 sm:$0xff] %v2614
    %3738 = vst [vmem:[%s2908] ss:$9 sm:$0xff] %v2615
    %3739 = vst [vmem:[%s2910] ss:$9 sm:$0xff] %v2616
    %v3740 = vld [vmem:[#allocation1] sm:$0xff]
    %3741 = vst [vmem:[#allocation1] ss:$9 sm:$0xff] %v2617
    %3742 = vst [vmem:[%s2898] ss:$9 sm:$0xff] %v2618
    %3743 = vst [vmem:[%s2900] ss:$9 sm:$0xff] %v2619
    %3744 = vst [vmem:[%s2902] ss:$9 sm:$0xff] %v2620
    %3745 = vst [vmem:[%s2904] ss:$9 sm:$0xff] %v2621
    %3746 = vst [vmem:[%s2906] ss:$9 sm:$0xff] %v2622
    %3747 = vst [vmem:[%s2908] ss:$9 sm:$0xff] %v2623
    %3748 = vst [vmem:[%s2910] ss:$9 sm:$0xff] %v2624
    %v3749 = vld [vmem:[#allocation1] sm:$0xff]
    %3750 = vst [vmem:[#allocation1] ss:$9 sm:$0xff] %v2625
    %3751 = vst [vmem:[%s2898] ss:$9 sm:$0xff] %v2626
    %3752 = vst [vmem:[%s2900] ss:$9 sm:$0xff] %v2627
    %3753 = vst [vmem:[%s2902] ss:$9 sm:$0xff] %v2628
    %3754 = vst [vmem:[%s2904] ss:$9 sm:$0xff] %v2629
    %3755 = vst [vmem:[%s2906] ss:$9 sm:$0xff] %v2630
    %3756 = vst [vmem:[%s2908] ss:$9 sm:$0xff] %v2631
    %3757 = vst [vmem:[%s2910] ss:$9 sm:$0xff] %v2632
    %v3758 = vld [vmem:[#allocation1] sm:$0xff]
    %3759 = vst [vmem:[#allocation1] ss:$9 sm:$0xff] %v2633
    %3760 = vst [vmem:[%s2898] ss:$9 sm:$0xff] %v2634
    %3761 = vst [vmem:[%s2900] ss:$9 sm:$0xff] %v2635
    %3762 = vst [vmem:[%s2902] ss:$9 sm:$0xff] %v2636
    %3763 = vst [vmem:[%s2904] ss:$9 sm:$0xff] %v2637
    %3764 = vst [vmem:[%s2906] ss:$9 sm:$0xff] %v2638
    %3765 = vst [vmem:[%s2908] ss:$9 sm:$0xff] %v2639
    %3766 = vst [vmem:[%s2910] ss:$9 sm:$0xff] %v2640
    %v3767 = vld [vmem:[#allocation1] sm:$0xff]
    %3768 = vst [vmem:[#allocation1] ss:$9 sm:$0xff] %v2641
    %3769 = vst [vmem:[%s2898] ss:$9 sm:$0xff] %v2642
    %3770 = vst [vmem:[%s2900] ss:$9 sm:$0xff] %v2643
    %3771 = vst [vmem:[%s2902] ss:$9 sm:$0xff] %v2644
    %3772 = vst [vmem:[%s2904] ss:$9 sm:$0xff] %v2645
    %3773 = vst [vmem:[%s2906] ss:$9 sm:$0xff] %v2646
    %3774 = vst [vmem:[%s2908] ss:$9 sm:$0xff] %v2647
    %3775 = vst [vmem:[%s2910] ss:$9 sm:$0xff] %v2648
    %v3776 = vld [vmem:[#allocation1] sm:$0xff]
    %3777 = vst [vmem:[#allocation1] ss:$9 sm:$0xff] %v2649
    %3778 = vst [vmem:[%s2898] ss:$9 sm:$0xff] %v2650
    %3779 = vst [vmem:[%s2900] ss:$9 sm:$0xff] %v2651
    %3780 = vst [vmem:[%s2902] ss:$9 sm:$0xff] %v2652
    %3781 = vst [vmem:[%s2904] ss:$9 sm:$0xff] %v2653
    %3782 = vst [vmem:[%s2906] ss:$9 sm:$0xff] %v2654
    %3783 = vst [vmem:[%s2908] ss:$9 sm:$0xff] %v2655
    %3784 = vst [vmem:[%s2910] ss:$9 sm:$0xff] %v2656
    %v3785 = vld [vmem:[#allocation1] sm:$0xff]
    %3786 = vst [vmem:[#allocation1] ss:$9 sm:$0xff] %v2657
    %3787 = vst [vmem:[%s2898] ss:$9 sm:$0xff] %v2658
    %3788 = vst [vmem:[%s2900] ss:$9 sm:$0xff] %v2659
    %3789 = vst [vmem:[%s2902] ss:$9 sm:$0xff] %v2660
    %3790 = vst [vmem:[%s2904] ss:$9 sm:$0xff] %v2661
    %3791 = vst [vmem:[%s2906] ss:$9 sm:$0xff] %v2662
    %3792 = vst [vmem:[%s2908] ss:$9 sm:$0xff] %v2663
    %3793 = vst [vmem:[%s2910] ss:$9 sm:$0xff] %v2664
    %v3794 = vld [vmem:[#allocation1] sm:$0xff]
    %3795 = vst [vmem:[#allocation1] ss:$9 sm:$0xff] %v2665
    %3796 = vst [vmem:[%s2898] ss:$9 sm:$0xff] %v2666
    %3797 = vst [vmem:[%s2900] ss:$9 sm:$0xff] %v2667
    %3798 = vst [vmem:[%s2902] ss:$9 sm:$0xff] %v2668
    %3799 = vst [vmem:[%s2904] ss:$9 sm:$0xff] %v2669
    %3800 = vst [vmem:[%s2906] ss:$9 sm:$0xff] %v2670
    %3801 = vst [vmem:[%s2908] ss:$9 sm:$0xff] %v2671
    %3802 = vst [vmem:[%s2910] ss:$9 sm:$0xff] %v2672
    %v3803 = vld [vmem:[#allocation1] sm:$0xff]
    %3804 = vst [vmem:[#allocation1] ss:$9 sm:$0xff] %v2673
    %3805 = vst [vmem:[%s2898] ss:$9 sm:$0xff] %v2674
    %3806 = vst [vmem:[%s2900] ss:$9 sm:$0xff] %v2675
    %3807 = vst [vmem:[%s2902] ss:$9 sm:$0xff] %v2676
    %3808 = vst [vmem:[%s2904] ss:$9 sm:$0xff] %v2677
    %3809 = vst [vmem:[%s2906] ss:$9 sm:$0xff] %v2678
    %3810 = vst [vmem:[%s2908] ss:$9 sm:$0xff] %v2679
    %3811 = vst [vmem:[%s2910] ss:$9 sm:$0xff] %v2680
    %v3812 = vld [vmem:[#allocation1] sm:$0xff]
    %3813 = vst [vmem:[#allocation1] ss:$9 sm:$0xff] %v2681
    %3814 = vst [vmem:[%s2898] ss:$9 sm:$0xff] %v2682
    %3815 = vst [vmem:[%s2900] ss:$9 sm:$0xff] %v2683
    %3816 = vst [vmem:[%s2902] ss:$9 sm:$0xff] %v2684
    %3817 = vst [vmem:[%s2904] ss:$9 sm:$0xff] %v2685
    %3818 = vst [vmem:[%s2906] ss:$9 sm:$0xff] %v2686
    %3819 = vst [vmem:[%s2908] ss:$9 sm:$0xff] %v2687
    %3820 = vst [vmem:[%s2910] ss:$9 sm:$0xff] %v2688
    %v3821 = vld [vmem:[#allocation1] sm:$0xff]
    %3822 = vst [vmem:[#allocation1] ss:$9 sm:$0xff] %v2689
    %3823 = vst [vmem:[%s2898] ss:$9 sm:$0xff] %v2690
    %3824 = vst [vmem:[%s2900] ss:$9 sm:$0xff] %v2691
    %3825 = vst [vmem:[%s2902] ss:$9 sm:$0xff] %v2692
    %3826 = vst [vmem:[%s2904] ss:$9 sm:$0xff] %v2693
    %3827 = vst [vmem:[%s2906] ss:$9 sm:$0xff] %v2694
    %3828 = vst [vmem:[%s2908] ss:$9 sm:$0xff] %v2695
    %3829 = vst [vmem:[%s2910] ss:$9 sm:$0xff] %v2696
    %v3830 = vld [vmem:[#allocation1] sm:$0xff]
    %3831 = vst [vmem:[#allocation1] ss:$9 sm:$0xff] %v2697
    %3832 = vst [vmem:[%s2898] ss:$9 sm:$0xff] %v2698
    %3833 = vst [vmem:[%s2900] ss:$9 sm:$0xff] %v2699
    %3834 = vst [vmem:[%s2902] ss:$9 sm:$0xff] %v2700
    %3835 = vst [vmem:[%s2904] ss:$9 sm:$0xff] %v2701
    %3836 = vst [vmem:[%s2906] ss:$9 sm:$0xff] %v2702
    %3837 = vst [vmem:[%s2908] ss:$9 sm:$0xff] %v2703
    %3838 = vst [vmem:[%s2910] ss:$9 sm:$0xff] %v2704
    %v3839 = vld [vmem:[#allocation1] sm:$0xff]
    %3840 = vst [vmem:[#allocation1] ss:$9 sm:$0xff] %v2705
    %3841 = vst [vmem:[%s2898] ss:$9 sm:$0xff] %v2706
    %3842 = vst [vmem:[%s2900] ss:$9 sm:$0xff] %v2707
    %3843 = vst [vmem:[%s2902] ss:$9 sm:$0xff] %v2708
    %3844 = vst [vmem:[%s2904] ss:$9 sm:$0xff] %v2709
    %3845 = vst [vmem:[%s2906] ss:$9 sm:$0xff] %v2710
    %3846 = vst [vmem:[%s2908] ss:$9 sm:$0xff] %v2711
    %3847 = vst [vmem:[%s2910] ss:$9 sm:$0xff] %v2712
    %v3848 = vld [vmem:[#allocation1] sm:$0xff]
    %3849 = vst [vmem:[#allocation1] ss:$9 sm:$0xff] %v2713
    %3850 = vst [vmem:[%s2898] ss:$9 sm:$0xff] %v2714
    %3851 = vst [vmem:[%s2900] ss:$9 sm:$0xff] %v2715
    %3852 = vst [vmem:[%s2902] ss:$9 sm:$0xff] %v2716
    %3853 = vst [vmem:[%s2904] ss:$9 sm:$0xff] %v2717
    %3854 = vst [vmem:[%s2906] ss:$9 sm:$0xff] %v2718
    %3855 = vst [vmem:[%s2908] ss:$9 sm:$0xff] %v2719
    %3856 = vst [vmem:[%s2910] ss:$9 sm:$0xff] %v2720
    %v3857 = vld [vmem:[#allocation1] sm:$0xff]
    %3858 = vst [vmem:[#allocation1] ss:$9 sm:$0xff] %v2721
    %3859 = vst [vmem:[%s2898] ss:$9 sm:$0xff] %v2722
    %3860 = vst [vmem:[%s2900] ss:$9 sm:$0xff] %v2723
    %3861 = vst [vmem:[%s2902] ss:$9 sm:$0xff] %v2724
    %3862 = vst [vmem:[%s2904] ss:$9 sm:$0xff] %v2725
    %3863 = vst [vmem:[%s2906] ss:$9 sm:$0xff] %v2726
    %3864 = vst [vmem:[%s2908] ss:$9 sm:$0xff] %v2727
    %3865 = vst [vmem:[%s2910] ss:$9 sm:$0xff] %v2728
    %v3866 = vld [vmem:[#allocation1] sm:$0xff]
    %3867 = vst [vmem:[#allocation1] ss:$9 sm:$0xff] %v2729
    %3868 = vst [vmem:[%s2898] ss:$9 sm:$0xff] %v2730
    %3869 = vst [vmem:[%s2900] ss:$9 sm:$0xff] %v2731
    %3870 = vst [vmem:[%s2902] ss:$9 sm:$0xff] %v2732
    %3871 = vst [vmem:[%s2904] ss:$9 sm:$0xff] %v2733
    %3872 = vst [vmem:[%s2906] ss:$9 sm:$0xff] %v2734
    %3873 = vst [vmem:[%s2908] ss:$9 sm:$0xff] %v2735
    %3874 = vst [vmem:[%s2910] ss:$9 sm:$0xff] %v2736
    %v3875 = vld [vmem:[#allocation1] sm:$0xff]
    %3876 = vst [vmem:[#allocation1] ss:$9 sm:$0xff] %v2737
    %3877 = vst [vmem:[%s2898] ss:$9 sm:$0xff] %v2738
    %3878 = vst [vmem:[%s2900] ss:$9 sm:$0xff] %v2739
    %3879 = vst [vmem:[%s2902] ss:$9 sm:$0xff] %v2740
    %3880 = vst [vmem:[%s2904] ss:$9 sm:$0xff] %v2741
    %3881 = vst [vmem:[%s2906] ss:$9 sm:$0xff] %v2742
    %3882 = vst [vmem:[%s2908] ss:$9 sm:$0xff] %v2743
    %3883 = vst [vmem:[%s2910] ss:$9 sm:$0xff] %v2744
    %v3884 = vld [vmem:[#allocation1] sm:$0xff]
    %3885 = vst [vmem:[#allocation1] ss:$9 sm:$0xff] %v2745
    %3886 = vst [vmem:[%s2898] ss:$9 sm:$0xff] %v2746
    %3887 = vst [vmem:[%s2900] ss:$9 sm:$0xff] %v2747
    %3888 = vst [vmem:[%s2902] ss:$9 sm:$0xff] %v2748
    %3889 = vst [vmem:[%s2904] ss:$9 sm:$0xff] %v2749
    %3890 = vst [vmem:[%s2906] ss:$9 sm:$0xff] %v2750
    %3891 = vst [vmem:[%s2908] ss:$9 sm:$0xff] %v2751
    %3892 = vst [vmem:[%s2910] ss:$9 sm:$0xff] %v2752
    %v3893 = vld [vmem:[#allocation1] sm:$0xff]
    %3894 = vst [vmem:[#allocation1] ss:$9 sm:$0xff] %v2753
    %3895 = vst [vmem:[%s2898] ss:$9 sm:$0xff] %v2754
    %3896 = vst [vmem:[%s2900] ss:$9 sm:$0xff] %v2755
    %3897 = vst [vmem:[%s2902] ss:$9 sm:$0xff] %v2756
    %3898 = vst [vmem:[%s2904] ss:$9 sm:$0xff] %v2757
    %3899 = vst [vmem:[%s2906] ss:$9 sm:$0xff] %v2758
    %3900 = vst [vmem:[%s2908] ss:$9 sm:$0xff] %v2759
    %3901 = vst [vmem:[%s2910] ss:$9 sm:$0xff] %v2760
    %v3902 = vld [vmem:[#allocation1] sm:$0xff]
    %3903 = vst [vmem:[#allocation1] ss:$9 sm:$0xff] %v2761
    %3904 = vst [vmem:[%s2898] ss:$9 sm:$0xff] %v2762
    %3905 = vst [vmem:[%s2900] ss:$9 sm:$0xff] %v2763
    %3906 = vst [vmem:[%s2902] ss:$9 sm:$0xff] %v2764
    %3907 = vst [vmem:[%s2904] ss:$9 sm:$0xff] %v2765
    %3908 = vst [vmem:[%s2906] ss:$9 sm:$0xff] %v2766
    %3909 = vst [vmem:[%s2908] ss:$9 sm:$0xff] %v2767
    %3910 = vst [vmem:[%s2910] ss:$9 sm:$0xff] %v2768
    %v3911 = vld [vmem:[#allocation1] sm:$0xff]
    %3912 = vst [vmem:[#allocation1] ss:$9 sm:$0xff] %v2769
    %3913 = vst [vmem:[%s2898] ss:$9 sm:$0xff] %v2770
    %3914 = vst [vmem:[%s2900] ss:$9 sm:$0xff] %v2771
    %3915 = vst [vmem:[%s2902] ss:$9 sm:$0xff] %v2772
    %3916 = vst [vmem:[%s2904] ss:$9 sm:$0xff] %v2773
    %3917 = vst [vmem:[%s2906] ss:$9 sm:$0xff] %v2774
    %3918 = vst [vmem:[%s2908] ss:$9 sm:$0xff] %v2775
    %3919 = vst [vmem:[%s2910] ss:$9 sm:$0xff] %v2776
    %v3920 = vld [vmem:[#allocation1] sm:$0xff]
    %3921 = vst [vmem:[#allocation1] ss:$9 sm:$0xff] %v2777
    %3922 = vst [vmem:[%s2898] ss:$9 sm:$0xff] %v2778
    %3923 = vst [vmem:[%s2900] ss:$9 sm:$0xff] %v2779
    %3924 = vst [vmem:[%s2902] ss:$9 sm:$0xff] %v2780
    %3925 = vst [vmem:[%s2904] ss:$9 sm:$0xff] %v2781
    %3926 = vst [vmem:[%s2906] ss:$9 sm:$0xff] %v2782
    %3927 = vst [vmem:[%s2908] ss:$9 sm:$0xff] %v2783
    %3928 = vst [vmem:[%s2910] ss:$9 sm:$0xff] %v2784
    %v3929 = vld [vmem:[#allocation1] sm:$0xff]
    %3930 = vst [vmem:[#allocation1] ss:$9 sm:$0xff] %v2785
    %3931 = vst [vmem:[%s2898] ss:$9 sm:$0xff] %v2786
    %3932 = vst [vmem:[%s2900] ss:$9 sm:$0xff] %v2787
    %3933 = vst [vmem:[%s2902] ss:$9 sm:$0xff] %v2788
    %3934 = vst [vmem:[%s2904] ss:$9 sm:$0xff] %v2789
    %3935 = vst [vmem:[%s2906] ss:$9 sm:$0xff] %v2790
    %3936 = vst [vmem:[%s2908] ss:$9 sm:$0xff] %v2791
    %3937 = vst [vmem:[%s2910] ss:$9 sm:$0xff] %v2792
    %v3938 = vld [vmem:[#allocation1] sm:$0xff]
    %3939 = vst [vmem:[#allocation1] ss:$9 sm:$0xff] %v2793
    %3940 = vst [vmem:[%s2898] ss:$9 sm:$0xff] %v2794
    %3941 = vst [vmem:[%s2900] ss:$9 sm:$0xff] %v2795
    %3942 = vst [vmem:[%s2902] ss:$9 sm:$0xff] %v2796
    %3943 = vst [vmem:[%s2904] ss:$9 sm:$0xff] %v2797
    %3944 = vst [vmem:[%s2906] ss:$9 sm:$0xff] %v2798
    %3945 = vst [vmem:[%s2908] ss:$9 sm:$0xff] %v2799
    %3946 = vst [vmem:[%s2910] ss:$9 sm:$0xff] %v2800
    %v3947 = vld [vmem:[#allocation1] sm:$0xff]
    %3948 = vst [vmem:[#allocation1] ss:$9 sm:$0xff] %v2801
    %3949 = vst [vmem:[%s2898] ss:$9 sm:$0xff] %v2802
    %3950 = vst [vmem:[%s2900] ss:$9 sm:$0xff] %v2803
    %3951 = vst [vmem:[%s2902] ss:$9 sm:$0xff] %v2804
    %3952 = vst [vmem:[%s2904] ss:$9 sm:$0xff] %v2805
    %3953 = vst [vmem:[%s2906] ss:$9 sm:$0xff] %v2806
    %3954 = vst [vmem:[%s2908] ss:$9 sm:$0xff] %v2807
    %3955 = vst [vmem:[%s2910] ss:$9 sm:$0xff] %v2808
    %v3956 = vld [vmem:[#allocation1] sm:$0xff]
    %3957 = vst [vmem:[#allocation1] ss:$9 sm:$0xff] %v2809
    %3958 = vst [vmem:[%s2898] ss:$9 sm:$0xff] %v2810
    %3959 = vst [vmem:[%s2900] ss:$9 sm:$0xff] %v2811
    %3960 = vst [vmem:[%s2902] ss:$9 sm:$0xff] %v2812
    %3961 = vst [vmem:[%s2904] ss:$9 sm:$0xff] %v2813
    %3962 = vst [vmem:[%s2906] ss:$9 sm:$0xff] %v2814
    %3963 = vst [vmem:[%s2908] ss:$9 sm:$0xff] %v2815
    %3964 = vst [vmem:[%s2910] ss:$9 sm:$0xff] %v2816
    %v3965 = vld [vmem:[#allocation1] sm:$0xff]
    %3966 = vst [vmem:[#allocation1] ss:$9 sm:$0xff] %v2817
    %3967 = vst [vmem:[%s2898] ss:$9 sm:$0xff] %v2818
    %3968 = vst [vmem:[%s2900] ss:$9 sm:$0xff] %v2819
    %3969 = vst [vmem:[%s2902] ss:$9 sm:$0xff] %v2820
    %3970 = vst [vmem:[%s2904] ss:$9 sm:$0xff] %v2821
    %3971 = vst [vmem:[%s2906] ss:$9 sm:$0xff] %v2822
    %3972 = vst [vmem:[%s2908] ss:$9 sm:$0xff] %v2823
    %3973 = vst [vmem:[%s2910] ss:$9 sm:$0xff] %v2824
    %v3974 = vld [vmem:[#allocation1] sm:$0xff]
    %3975 = vst [vmem:[#allocation1] ss:$9 sm:$0xff] %v2825
    %3976 = vst [vmem:[%s2898] ss:$9 sm:$0xff] %v2826
    %3977 = vst [vmem:[%s2900] ss:$9 sm:$0xff] %v2827
    %3978 = vst [vmem:[%s2902] ss:$9 sm:$0xff] %v2828
    %3979 = vst [vmem:[%s2904] ss:$9 sm:$0xff] %v2829
    %3980 = vst [vmem:[%s2906] ss:$9 sm:$0xff] %v2830
    %3981 = vst [vmem:[%s2908] ss:$9 sm:$0xff] %v2831
    %3982 = vst [vmem:[%s2910] ss:$9 sm:$0xff] %v2832
    %v3983 = vld [vmem:[#allocation1] sm:$0xff]
    %3984 = vst [vmem:[#allocation1] ss:$9 sm:$0xff] %v2833
    %3985 = vst [vmem:[%s2898] ss:$9 sm:$0xff] %v2834
    %3986 = vst [vmem:[%s2900] ss:$9 sm:$0xff] %v2835
    %3987 = vst [vmem:[%s2902] ss:$9 sm:$0xff] %v2836
    %3988 = vst [vmem:[%s2904] ss:$9 sm:$0xff] %v2837
    %3989 = vst [vmem:[%s2906] ss:$9 sm:$0xff] %v2838
    %3990 = vst [vmem:[%s2908] ss:$9 sm:$0xff] %v2839
    %3991 = vst [vmem:[%s2910] ss:$9 sm:$0xff] %v2840
    %v3992 = vld [vmem:[#allocation1] sm:$0xff]
    %3993 = vst [vmem:[#allocation1] ss:$9 sm:$0xff] %v2841
    %3994 = vst [vmem:[%s2898] ss:$9 sm:$0xff] %v2842
    %3995 = vst [vmem:[%s2900] ss:$9 sm:$0xff] %v2843
    %3996 = vst [vmem:[%s2902] ss:$9 sm:$0xff] %v2844
    %3997 = vst [vmem:[%s2904] ss:$9 sm:$0xff] %v2845
    %3998 = vst [vmem:[%s2906] ss:$9 sm:$0xff] %v2846
    %3999 = vst [vmem:[%s2908] ss:$9 sm:$0xff] %v2847
    %4000 = vst [vmem:[%s2910] ss:$9 sm:$0xff] %v2848
    %v4001 = vld [vmem:[#allocation1] sm:$0xff]
    %4002 = vst [vmem:[#allocation1] ss:$9 sm:$0xff] %v2849
    %4003 = vst [vmem:[%s2898] ss:$9 sm:$0xff] %v2850
    %4004 = vst [vmem:[%s2900] ss:$9 sm:$0xff] %v2851
    %4005 = vst [vmem:[%s2902] ss:$9 sm:$0xff] %v2852
    %4006 = vst [vmem:[%s2904] ss:$9 sm:$0xff] %v2853
    %4007 = vst [vmem:[%s2906] ss:$9 sm:$0xff] %v2854
    %4008 = vst [vmem:[%s2908] ss:$9 sm:$0xff] %v2855
    %4009 = vst [vmem:[%s2910] ss:$9 sm:$0xff] %v2856
    %v4010 = vld [vmem:[#allocation1] sm:$0xff]
    %4011 = vst [vmem:[#allocation1] ss:$9 sm:$0xff] %v2857
    %4012 = vst [vmem:[%s2898] ss:$9 sm:$0xff] %v2858
    %4013 = vst [vmem:[%s2900] ss:$9 sm:$0xff] %v2859
    %4014 = vst [vmem:[%s2902] ss:$9 sm:$0xff] %v2860
    %4015 = vst [vmem:[%s2904] ss:$9 sm:$0xff] %v2861
    %4016 = vst [vmem:[%s2906] ss:$9 sm:$0xff] %v2862
    %4017 = vst [vmem:[%s2908] ss:$9 sm:$0xff] %v2863
    %4018 = vst [vmem:[%s2910] ss:$9 sm:$0xff] %v2864
    %v4019 = vld [vmem:[#allocation1] sm:$0xff]
    %4020 = vst [vmem:[#allocation1] ss:$9 sm:$0xff] %v2865
    %4021 = vst [vmem:[%s2898] ss:$9 sm:$0xff] %v2866
    %4022 = vst [vmem:[%s2900] ss:$9 sm:$0xff] %v2867
    %4023 = vst [vmem:[%s2902] ss:$9 sm:$0xff] %v2868
    %4024 = vst [vmem:[%s2904] ss:$9 sm:$0xff] %v2869
    %4025 = vst [vmem:[%s2906] ss:$9 sm:$0xff] %v2870
    %4026 = vst [vmem:[%s2908] ss:$9 sm:$0xff] %v2871
    %4027 = vst [vmem:[%s2910] ss:$9 sm:$0xff] %v2872
    %v4028 = vld [vmem:[#allocation1] sm:$0xff]
    %4029 = vst [vmem:[#allocation1] ss:$9 sm:$0xff] %v2873
    %4030 = vst [vmem:[%s2898] ss:$9 sm:$0xff] %v2874
    %4031 = vst [vmem:[%s2900] ss:$9 sm:$0xff] %v2875
    %4032 = vst [vmem:[%s2902] ss:$9 sm:$0xff] %v2876
    %4033 = vst [vmem:[%s2904] ss:$9 sm:$0xff] %v2877
    %4034 = vst [vmem:[%s2906] ss:$9 sm:$0xff] %v2878
    %4035 = vst [vmem:[%s2908] ss:$9 sm:$0xff] %v2879
    %4036 = vst [vmem:[%s2910] ss:$9 sm:$0xff] %v2880
    %v4037 = vld [vmem:[#allocation1] sm:$0xff]
    %4038 = vst [vmem:[#allocation1] ss:$9 sm:$0xff] %v2881
    %4039 = vst [vmem:[%s2898] ss:$9 sm:$0xff] %v2882
    %4040 = vst [vmem:[%s2900] ss:$9 sm:$0xff] %v2883
    %4041 = vst [vmem:[%s2902] ss:$9 sm:$0xff] %v2884
    %4042 = vst [vmem:[%s2904] ss:$9 sm:$0xff] %v2885
    %4043 = vst [vmem:[%s2906] ss:$9 sm:$0xff] %v2886
    %4044 = vst [vmem:[%s2908] ss:$9 sm:$0xff] %v2887
    %4045 = vst [vmem:[%s2910] ss:$9 sm:$0xff] %v2888
    %v4046 = vld [vmem:[#allocation1] sm:$0xff]
    %4047 = vst [vmem:[#allocation1] ss:$9 sm:$0xff] %v2889
    %4048 = vst [vmem:[%s2898] ss:$9 sm:$0xff] %v2890
    %4049 = vst [vmem:[%s2900] ss:$9 sm:$0xff] %v2891
    %4050 = vst [vmem:[%s2902] ss:$9 sm:$0xff] %v2892
    %4051 = vst [vmem:[%s2904] ss:$9 sm:$0xff] %v2893
    %4052 = vst [vmem:[%s2906] ss:$9 sm:$0xff] %v2894
    %4053 = vst [vmem:[%s2908] ss:$9 sm:$0xff] %v2895
    %4054 = vst [vmem:[%s2910] ss:$9 sm:$0xff] %v2896
    %v4055 = vld [vmem:[#allocation1] sm:$0xff]
    %4056 = vset.pattern.permute.xlu0 0
    %4057 = vperm.xlu0 %4056, %v2912
    %v4058 = vpop.permute.xlu0 %4057
    %4059 = vset.pattern.permute.xlu0 0
    %4060 = vperm.xlu0 %4059, %v2921
    %v4061 = vpop.permute.xlu0 %4060
    %4062 = vset.pattern.permute.xlu0 0
    %4063 = vperm.xlu0 %4062, %v2930
    %v4064 = vpop.permute.xlu0 %4063
    %4065 = vset.pattern.permute.xlu0 0
    %4066 = vperm.xlu0 %4065, %v2939
    %v4067 = vpop.permute.xlu0 %4066
    %4068 = vset.pattern.permute.xlu0 0
    %4069 = vperm.xlu0 %4068, %v2948
    %v4070 = vpop.permute.xlu0 %4069
    %4071 = vset.pattern.permute.xlu0 0
    %4072 = vperm.xlu0 %4071, %v2957
    %v4073 = vpop.permute.xlu0 %4072
    %4074 = vset.pattern.permute.xlu0 0
    %4075 = vperm.xlu0 %4074, %v2966
    %v4076 = vpop.permute.xlu0 %4075
    %4077 = vset.pattern.permute.xlu0 0
    %4078 = vperm.xlu0 %4077, %v2975
    %v4079 = vpop.permute.xlu0 %4078
    %4080 = vset.pattern.permute.xlu0 0
    %4081 = vperm.xlu0 %4080, %v2984
    %v4082 = vpop.permute.xlu0 %4081
    %4083 = vset.pattern.permute.xlu0 0
    %4084 = vperm.xlu0 %4083, %v2993
    %v4085 = vpop.permute.xlu0 %4084
    %4086 = vset.pattern.permute.xlu0 0
    %4087 = vperm.xlu0 %4086, %v3002
    %v4088 = vpop.permute.xlu0 %4087
    %4089 = vset.pattern.permute.xlu0 0
    %4090 = vperm.xlu0 %4089, %v3011
    %v4091 = vpop.permute.xlu0 %4090
    %4092 = vset.pattern.permute.xlu0 0
    %4093 = vperm.xlu0 %4092, %v3020
    %v4094 = vpop.permute.xlu0 %4093
    %4095 = vset.pattern.permute.xlu0 0
    %4096 = vperm.xlu0 %4095, %v3029
    %v4097 = vpop.permute.xlu0 %4096
    %4098 = vset.pattern.permute.xlu0 0
    %4099 = vperm.xlu0 %4098, %v3038
    %v4100 = vpop.permute.xlu0 %4099
    %4101 = vset.pattern.permute.xlu0 0
    %4102 = vperm.xlu0 %4101, %v3047
    %v4103 = vpop.permute.xlu0 %4102
    %4104 = vset.pattern.permute.xlu0 0
    %4105 = vperm.xlu0 %4104, %v3056
    %v4106 = vpop.permute.xlu0 %4105
    %4107 = vset.pattern.permute.xlu0 0
    %4108 = vperm.xlu0 %4107, %v3065
    %v4109 = vpop.permute.xlu0 %4108
    %4110 = vset.pattern.permute.xlu0 0
    %4111 = vperm.xlu0 %4110, %v3074
    %v4112 = vpop.permute.xlu0 %4111
    %4113 = vset.pattern.permute.xlu0 0
    %4114 = vperm.xlu0 %4113, %v3083
    %v4115 = vpop.permute.xlu0 %4114
    %4116 = vset.pattern.permute.xlu0 0
    %4117 = vperm.xlu0 %4116, %v3092
    %v4118 = vpop.permute.xlu0 %4117
    %4119 = vset.pattern.permute.xlu0 0
    %4120 = vperm.xlu0 %4119, %v3101
    %v4121 = vpop.permute.xlu0 %4120
    %4122 = vset.pattern.permute.xlu0 0
    %4123 = vperm.xlu0 %4122, %v3110
    %v4124 = vpop.permute.xlu0 %4123
    %4125 = vset.pattern.permute.xlu0 0
    %4126 = vperm.xlu0 %4125, %v3119
    %v4127 = vpop.permute.xlu0 %4126
    %4128 = vset.pattern.permute.xlu0 0
    %4129 = vperm.xlu0 %4128, %v3128
    %v4130 = vpop.permute.xlu0 %4129
    %4131 = vset.pattern.permute.xlu0 0
    %4132 = vperm.xlu0 %4131, %v3137
    %v4133 = vpop.permute.xlu0 %4132
    %4134 = vset.pattern.permute.xlu0 0
    %4135 = vperm.xlu0 %4134, %v3146
    %v4136 = vpop.permute.xlu0 %4135
    %4137 = vset.pattern.permute.xlu0 0
    %4138 = vperm.xlu0 %4137, %v3155
    %v4139 = vpop.permute.xlu0 %4138
    %4140 = vset.pattern.permute.xlu0 0
    %4141 = vperm.xlu0 %4140, %v3164
    %v4142 = vpop.permute.xlu0 %4141
    %4143 = vset.pattern.permute.xlu0 0
    %4144 = vperm.xlu0 %4143, %v3173
    %v4145 = vpop.permute.xlu0 %4144
    %4146 = vset.pattern.permute.xlu0 0
    %4147 = vperm.xlu0 %4146, %v3182
    %v4148 = vpop.permute.xlu0 %4147
    %4149 = vset.pattern.permute.xlu0 0
    %4150 = vperm.xlu0 %4149, %v3191
    %v4151 = vpop.permute.xlu0 %4150
    %4152 = vset.pattern.permute.xlu0 0
    %4153 = vperm.xlu0 %4152, %v3200
    %v4154 = vpop.permute.xlu0 %4153
    %4155 = vset.pattern.permute.xlu0 0
    %4156 = vperm.xlu0 %4155, %v3209
    %v4157 = vpop.permute.xlu0 %4156
    %4158 = vset.pattern.permute.xlu0 0
    %4159 = vperm.xlu0 %4158, %v3218
    %v4160 = vpop.permute.xlu0 %4159
    %4161 = vset.pattern.permute.xlu0 0
    %4162 = vperm.xlu0 %4161, %v3227
    %v4163 = vpop.permute.xlu0 %4162
    %4164 = vset.pattern.permute.xlu0 0
    %4165 = vperm.xlu0 %4164, %v3236
    %v4166 = vpop.permute.xlu0 %4165
    %4167 = vset.pattern.permute.xlu0 0
    %4168 = vperm.xlu0 %4167, %v3245
    %v4169 = vpop.permute.xlu0 %4168
    %4170 = vset.pattern.permute.xlu0 0
    %4171 = vperm.xlu0 %4170, %v3254
    %v4172 = vpop.permute.xlu0 %4171
    %4173 = vset.pattern.permute.xlu0 0
    %4174 = vperm.xlu0 %4173, %v3263
    %v4175 = vpop.permute.xlu0 %4174
    %4176 = vset.pattern.permute.xlu0 0
    %4177 = vperm.xlu0 %4176, %v3272
    %v4178 = vpop.permute.xlu0 %4177
    %4179 = vset.pattern.permute.xlu0 0
    %4180 = vperm.xlu0 %4179, %v3281
    %v4181 = vpop.permute.xlu0 %4180
    %4182 = vset.pattern.permute.xlu0 0
    %4183 = vperm.xlu0 %4182, %v3290
    %v4184 = vpop.permute.xlu0 %4183
    %4185 = vset.pattern.permute.xlu0 0
    %4186 = vperm.xlu0 %4185, %v3299
    %v4187 = vpop.permute.xlu0 %4186
    %4188 = vset.pattern.permute.xlu0 0
    %4189 = vperm.xlu0 %4188, %v3308
    %v4190 = vpop.permute.xlu0 %4189
    %4191 = vset.pattern.permute.xlu0 0
    %4192 = vperm.xlu0 %4191, %v3317
    %v4193 = vpop.permute.xlu0 %4192
    %4194 = vset.pattern.permute.xlu0 0
    %4195 = vperm.xlu0 %4194, %v3326
    %v4196 = vpop.permute.xlu0 %4195
    %4197 = vset.pattern.permute.xlu0 0
    %4198 = vperm.xlu0 %4197, %v3335
    %v4199 = vpop.permute.xlu0 %4198
    %4200 = vset.pattern.permute.xlu0 0
    %4201 = vperm.xlu0 %4200, %v3344
    %v4202 = vpop.permute.xlu0 %4201
    %4203 = vset.pattern.permute.xlu0 0
    %4204 = vperm.xlu0 %4203, %v3353
    %v4205 = vpop.permute.xlu0 %4204
    %4206 = vset.pattern.permute.xlu0 0
    %4207 = vperm.xlu0 %4206, %v3362
    %v4208 = vpop.permute.xlu0 %4207
    %4209 = vset.pattern.permute.xlu0 0
    %4210 = vperm.xlu0 %4209, %v3371
    %v4211 = vpop.permute.xlu0 %4210
    %4212 = vset.pattern.permute.xlu0 0
    %4213 = vperm.xlu0 %4212, %v3380
    %v4214 = vpop.permute.xlu0 %4213
    %4215 = vset.pattern.permute.xlu0 0
    %4216 = vperm.xlu0 %4215, %v3389
    %v4217 = vpop.permute.xlu0 %4216
    %4218 = vset.pattern.permute.xlu0 0
    %4219 = vperm.xlu0 %4218, %v3398
    %v4220 = vpop.permute.xlu0 %4219
    %4221 = vset.pattern.permute.xlu0 0
    %4222 = vperm.xlu0 %4221, %v3407
    %v4223 = vpop.permute.xlu0 %4222
    %4224 = vset.pattern.permute.xlu0 0
    %4225 = vperm.xlu0 %4224, %v3416
    %v4226 = vpop.permute.xlu0 %4225
    %4227 = vset.pattern.permute.xlu0 0
    %4228 = vperm.xlu0 %4227, %v3425
    %v4229 = vpop.permute.xlu0 %4228
    %4230 = vset.pattern.permute.xlu0 0
    %4231 = vperm.xlu0 %4230, %v3434
    %v4232 = vpop.permute.xlu0 %4231
    %4233 = vset.pattern.permute.xlu0 0
    %4234 = vperm.xlu0 %4233, %v3443
    %v4235 = vpop.permute.xlu0 %4234
    %4236 = vset.pattern.permute.xlu0 0
    %4237 = vperm.xlu0 %4236, %v3452
    %v4238 = vpop.permute.xlu0 %4237
    %4239 = vset.pattern.permute.xlu0 0
    %4240 = vperm.xlu0 %4239, %v3461
    %v4241 = vpop.permute.xlu0 %4240
    %4242 = vset.pattern.permute.xlu0 0
    %4243 = vperm.xlu0 %4242, %v3470
    %v4244 = vpop.permute.xlu0 %4243
    %4245 = vset.pattern.permute.xlu0 0
    %4246 = vperm.xlu0 %4245, %v3479
    %v4247 = vpop.permute.xlu0 %4246
    %4248 = vset.pattern.permute.xlu0 0
    %4249 = vperm.xlu0 %4248, %v3488
    %v4250 = vpop.permute.xlu0 %4249
    %4251 = vset.pattern.permute.xlu0 0
    %4252 = vperm.xlu0 %4251, %v3497
    %v4253 = vpop.permute.xlu0 %4252
    %4254 = vset.pattern.permute.xlu0 0
    %4255 = vperm.xlu0 %4254, %v3506
    %v4256 = vpop.permute.xlu0 %4255
    %4257 = vset.pattern.permute.xlu0 0
    %4258 = vperm.xlu0 %4257, %v3515
    %v4259 = vpop.permute.xlu0 %4258
    %4260 = vset.pattern.permute.xlu0 0
    %4261 = vperm.xlu0 %4260, %v3524
    %v4262 = vpop.permute.xlu0 %4261
    %4263 = vset.pattern.permute.xlu0 0
    %4264 = vperm.xlu0 %4263, %v3533
    %v4265 = vpop.permute.xlu0 %4264
    %4266 = vset.pattern.permute.xlu0 0
    %4267 = vperm.xlu0 %4266, %v3542
    %v4268 = vpop.permute.xlu0 %4267
    %4269 = vset.pattern.permute.xlu0 0
    %4270 = vperm.xlu0 %4269, %v3551
    %v4271 = vpop.permute.xlu0 %4270
    %4272 = vset.pattern.permute.xlu0 0
    %4273 = vperm.xlu0 %4272, %v3560
    %v4274 = vpop.permute.xlu0 %4273
    %4275 = vset.pattern.permute.xlu0 0
    %4276 = vperm.xlu0 %4275, %v3569
    %v4277 = vpop.permute.xlu0 %4276
    %4278 = vset.pattern.permute.xlu0 0
    %4279 = vperm.xlu0 %4278, %v3578
    %v4280 = vpop.permute.xlu0 %4279
    %4281 = vset.pattern.permute.xlu0 0
    %4282 = vperm.xlu0 %4281, %v3587
    %v4283 = vpop.permute.xlu0 %4282
    %4284 = vset.pattern.permute.xlu0 0
    %4285 = vperm.xlu0 %4284, %v3596
    %v4286 = vpop.permute.xlu0 %4285
    %4287 = vset.pattern.permute.xlu0 0
    %4288 = vperm.xlu0 %4287, %v3605
    %v4289 = vpop.permute.xlu0 %4288
    %4290 = vset.pattern.permute.xlu0 0
    %4291 = vperm.xlu0 %4290, %v3614
    %v4292 = vpop.permute.xlu0 %4291
    %4293 = vset.pattern.permute.xlu0 0
    %4294 = vperm.xlu0 %4293, %v3623
    %v4295 = vpop.permute.xlu0 %4294
    %4296 = vset.pattern.permute.xlu0 0
    %4297 = vperm.xlu0 %4296, %v3632
    %v4298 = vpop.permute.xlu0 %4297
    %4299 = vset.pattern.permute.xlu0 0
    %4300 = vperm.xlu0 %4299, %v3641
    %v4301 = vpop.permute.xlu0 %4300
    %4302 = vset.pattern.permute.xlu0 0
    %4303 = vperm.xlu0 %4302, %v3650
    %v4304 = vpop.permute.xlu0 %4303
    %4305 = vset.pattern.permute.xlu0 0
    %4306 = vperm.xlu0 %4305, %v3659
    %v4307 = vpop.permute.xlu0 %4306
    %4308 = vset.pattern.permute.xlu0 0
    %4309 = vperm.xlu0 %4308, %v3668
    %v4310 = vpop.permute.xlu0 %4309
    %4311 = vset.pattern.permute.xlu0 0
    %4312 = vperm.xlu0 %4311, %v3677
    %v4313 = vpop.permute.xlu0 %4312
    %4314 = vset.pattern.permute.xlu0 0
    %4315 = vperm.xlu0 %4314, %v3686
    %v4316 = vpop.permute.xlu0 %4315
    %4317 = vset.pattern.permute.xlu0 0
    %4318 = vperm.xlu0 %4317, %v3695
    %v4319 = vpop.permute.xlu0 %4318
    %4320 = vset.pattern.permute.xlu0 0
    %4321 = vperm.xlu0 %4320, %v3704
    %v4322 = vpop.permute.xlu0 %4321
    %4323 = vset.pattern.permute.xlu0 0
    %4324 = vperm.xlu0 %4323, %v3713
    %v4325 = vpop.permute.xlu0 %4324
    %4326 = vset.pattern.permute.xlu0 0
    %4327 = vperm.xlu0 %4326, %v3722
    %v4328 = vpop.permute.xlu0 %4327
    %4329 = vset.pattern.permute.xlu0 0
    %4330 = vperm.xlu0 %4329, %v3731
    %v4331 = vpop.permute.xlu0 %4330
    %4332 = vset.pattern.permute.xlu0 0
    %4333 = vperm.xlu0 %4332, %v3740
    %v4334 = vpop.permute.xlu0 %4333
    %4335 = vset.pattern.permute.xlu0 0
    %4336 = vperm.xlu0 %4335, %v3749
    %v4337 = vpop.permute.xlu0 %4336
    %4338 = vset.pattern.permute.xlu0 0
    %4339 = vperm.xlu0 %4338, %v3758
    %v4340 = vpop.permute.xlu0 %4339
    %4341 = vset.pattern.permute.xlu0 0
    %4342 = vperm.xlu0 %4341, %v3767
    %v4343 = vpop.permute.xlu0 %4342
    %4344 = vset.pattern.permute.xlu0 0
    %4345 = vperm.xlu0 %4344, %v3776
    %v4346 = vpop.permute.xlu0 %4345
    %4347 = vset.pattern.permute.xlu0 0
    %4348 = vperm.xlu0 %4347, %v3785
    %v4349 = vpop.permute.xlu0 %4348
    %4350 = vset.pattern.permute.xlu0 0
    %4351 = vperm.xlu0 %4350, %v3794
    %v4352 = vpop.permute.xlu0 %4351
    %4353 = vset.pattern.permute.xlu0 0
    %4354 = vperm.xlu0 %4353, %v3803
    %v4355 = vpop.permute.xlu0 %4354
    %4356 = vset.pattern.permute.xlu0 0
    %4357 = vperm.xlu0 %4356, %v3812
    %v4358 = vpop.permute.xlu0 %4357
    %4359 = vset.pattern.permute.xlu0 0
    %4360 = vperm.xlu0 %4359, %v3821
    %v4361 = vpop.permute.xlu0 %4360
    %4362 = vset.pattern.permute.xlu0 0
    %4363 = vperm.xlu0 %4362, %v3830
    %v4364 = vpop.permute.xlu0 %4363
    %4365 = vset.pattern.permute.xlu0 0
    %4366 = vperm.xlu0 %4365, %v3839
    %v4367 = vpop.permute.xlu0 %4366
    %4368 = vset.pattern.permute.xlu0 0
    %4369 = vperm.xlu0 %4368, %v3848
    %v4370 = vpop.permute.xlu0 %4369
    %4371 = vset.pattern.permute.xlu0 0
    %4372 = vperm.xlu0 %4371, %v3857
    %v4373 = vpop.permute.xlu0 %4372
    %4374 = vset.pattern.permute.xlu0 0
    %4375 = vperm.xlu0 %4374, %v3866
    %v4376 = vpop.permute.xlu0 %4375
    %4377 = vset.pattern.permute.xlu0 0
    %4378 = vperm.xlu0 %4377, %v3875
    %v4379 = vpop.permute.xlu0 %4378
    %4380 = vset.pattern.permute.xlu0 0
    %4381 = vperm.xlu0 %4380, %v3884
    %v4382 = vpop.permute.xlu0 %4381
    %4383 = vset.pattern.permute.xlu0 0
    %4384 = vperm.xlu0 %4383, %v3893
    %v4385 = vpop.permute.xlu0 %4384
    %4386 = vset.pattern.permute.xlu0 0
    %4387 = vperm.xlu0 %4386, %v3902
    %v4388 = vpop.permute.xlu0 %4387
    %4389 = vset.pattern.permute.xlu0 0
    %4390 = vperm.xlu0 %4389, %v3911
    %v4391 = vpop.permute.xlu0 %4390
    %4392 = vset.pattern.permute.xlu0 0
    %4393 = vperm.xlu0 %4392, %v3920
    %v4394 = vpop.permute.xlu0 %4393
    %4395 = vset.pattern.permute.xlu0 0
    %4396 = vperm.xlu0 %4395, %v3929
    %v4397 = vpop.permute.xlu0 %4396
    %4398 = vset.pattern.permute.xlu0 0
    %4399 = vperm.xlu0 %4398, %v3938
    %v4400 = vpop.permute.xlu0 %4399
    %4401 = vset.pattern.permute.xlu0 0
    %4402 = vperm.xlu0 %4401, %v3947
    %v4403 = vpop.permute.xlu0 %4402
    %4404 = vset.pattern.permute.xlu0 0
    %4405 = vperm.xlu0 %4404, %v3956
    %v4406 = vpop.permute.xlu0 %4405
    %4407 = vset.pattern.permute.xlu0 0
    %4408 = vperm.xlu0 %4407, %v3965
    %v4409 = vpop.permute.xlu0 %4408
    %4410 = vset.pattern.permute.xlu0 0
    %4411 = vperm.xlu0 %4410, %v3974
    %v4412 = vpop.permute.xlu0 %4411
    %4413 = vset.pattern.permute.xlu0 0
    %4414 = vperm.xlu0 %4413, %v3983
    %v4415 = vpop.permute.xlu0 %4414
    %4416 = vset.pattern.permute.xlu0 0
    %4417 = vperm.xlu0 %4416, %v3992
    %v4418 = vpop.permute.xlu0 %4417
    %4419 = vset.pattern.permute.xlu0 0
    %4420 = vperm.xlu0 %4419, %v4001
    %v4421 = vpop.permute.xlu0 %4420
    %4422 = vset.pattern.permute.xlu0 0
    %4423 = vperm.xlu0 %4422, %v4010
    %v4424 = vpop.permute.xlu0 %4423
    %4425 = vset.pattern.permute.xlu0 0
    %4426 = vperm.xlu0 %4425, %v4019
    %v4427 = vpop.permute.xlu0 %4426
    %4428 = vset.pattern.permute.xlu0 0
    %4429 = vperm.xlu0 %4428, %v4028
    %v4430 = vpop.permute.xlu0 %4429
    %4431 = vset.pattern.permute.xlu0 0
    %4432 = vperm.xlu0 %4431, %v4037
    %v4433 = vpop.permute.xlu0 %4432
    %4434 = vset.pattern.permute.xlu0 0
    %4435 = vperm.xlu0 %4434, %v4046
    %v4436 = vpop.permute.xlu0 %4435
    %4437 = vset.pattern.permute.xlu0 0
    %4438 = vperm.xlu0 %4437, %v4055
    %v4439 = vpop.permute.xlu0 %4438
    %v4440 = vlaneseq
    %v4441 = vand.u32 %v4440, 127
    %v4442 = vperm.slane %v4058, %v4441
    %v4443 = vadd.s32 %v4441, 4294967288
    %v4444 = vperm.slane %v4061, %v4443
    %vm4445 = vcmask 130112
    %v4446 = vsel %vm4445, %v4444, %v4442
    %v4447 = vadd.s32 %v4441, 4294967280
    %v4448 = vperm.slane %v4064, %v4447
    %vm4449 = vcmask 195712
    %v4450 = vsel %vm4449, %v4448, %v4446
    %v4451 = vadd.s32 %v4441, 4294967272
    %v4452 = vperm.slane %v4067, %v4451
    %vm4453 = vcmask 261312
    %v4454 = vsel %vm4453, %v4452, %v4450
    %v4455 = vadd.s32 %v4441, 4294967264
    %v4456 = vperm.slane %v4070, %v4455
    %vm4457 = vcmask 326912
    %v4458 = vsel %vm4457, %v4456, %v4454
    %v4459 = vadd.s32 %v4441, 4294967256
    %v4460 = vperm.slane %v4073, %v4459
    %vm4461 = vcmask 392512
    %v4462 = vsel %vm4461, %v4460, %v4458
    %v4463 = vadd.s32 %v4441, 4294967248
    %v4464 = vperm.slane %v4076, %v4463
    %vm4465 = vcmask 458112
    %v4466 = vsel %vm4465, %v4464, %v4462
    %v4467 = vadd.s32 %v4441, 4294967240
    %v4468 = vperm.slane %v4079, %v4467
    %vm4469 = vcmask 523712
    %v4470 = vsel %vm4469, %v4468, %v4466
    %v4471 = vadd.s32 %v4441, 4294967232
    %v4472 = vperm.slane %v4082, %v4471
    %vm4473 = vcmask 589312
    %v4474 = vsel %vm4473, %v4472, %v4470
    %v4475 = vadd.s32 %v4441, 4294967224
    %v4476 = vperm.slane %v4085, %v4475
    %vm4477 = vcmask 654912
    %v4478 = vsel %vm4477, %v4476, %v4474
    %v4479 = vadd.s32 %v4441, 4294967216
    %v4480 = vperm.slane %v4088, %v4479
    %vm4481 = vcmask 720512
    %v4482 = vsel %vm4481, %v4480, %v4478
    %v4483 = vadd.s32 %v4441, 4294967208
    %v4484 = vperm.slane %v4091, %v4483
    %vm4485 = vcmask 786112
    %v4486 = vsel %vm4485, %v4484, %v4482
    %v4487 = vadd.s32 %v4441, 4294967200
    %v4488 = vperm.slane %v4094, %v4487
    %vm4489 = vcmask 851712
    %v4490 = vsel %vm4489, %v4488, %v4486
    %v4491 = vadd.s32 %v4441, 4294967192
    %v4492 = vperm.slane %v4097, %v4491
    %vm4493 = vcmask 917312
    %v4494 = vsel %vm4493, %v4492, %v4490
    %v4495 = vadd.s32 %v4441, 4294967184
    %v4496 = vperm.slane %v4100, %v4495
    %vm4497 = vcmask 982912
    %v4498 = vsel %vm4497, %v4496, %v4494
    %v4499 = vadd.s32 %v4441, 4294967176
    %v4500 = vperm.slane %v4103, %v4499
    %vm4501 = vcmask 1048512
    %v4502 = vsel %vm4501, %v4500, %v4498
    %v4503 = vperm.slane %v4106, %v4441
    %v4504 = vperm.slane %v4109, %v4443
    %v4505 = vsel %vm4445, %v4504, %v4503
    %v4506 = vperm.slane %v4112, %v4447
    %v4507 = vsel %vm4449, %v4506, %v4505
    %v4508 = vperm.slane %v4115, %v4451
    %v4509 = vsel %vm4453, %v4508, %v4507
    %v4510 = vperm.slane %v4118, %v4455
    %v4511 = vsel %vm4457, %v4510, %v4509
    %v4512 = vperm.slane %v4121, %v4459
    %v4513 = vsel %vm4461, %v4512, %v4511
    %v4514 = vperm.slane %v4124, %v4463
    %v4515 = vsel %vm4465, %v4514, %v4513
    %v4516 = vperm.slane %v4127, %v4467
    %v4517 = vsel %vm4469, %v4516, %v4515
    %v4518 = vperm.slane %v4130, %v4471
    %v4519 = vsel %vm4473, %v4518, %v4517
    %v4520 = vperm.slane %v4133, %v4475
    %v4521 = vsel %vm4477, %v4520, %v4519
    %v4522 = vperm.slane %v4136, %v4479
    %v4523 = vsel %vm4481, %v4522, %v4521
    %v4524 = vperm.slane %v4139, %v4483
    %v4525 = vsel %vm4485, %v4524, %v4523
    %v4526 = vperm.slane %v4142, %v4487
    %v4527 = vsel %vm4489, %v4526, %v4525
    %v4528 = vperm.slane %v4145, %v4491
    %v4529 = vsel %vm4493, %v4528, %v4527
    %v4530 = vperm.slane %v4148, %v4495
    %v4531 = vsel %vm4497, %v4530, %v4529
    %v4532 = vperm.slane %v4151, %v4499
    %v4533 = vsel %vm4501, %v4532, %v4531
    %v4534 = vperm.slane %v4154, %v4441
    %v4535 = vperm.slane %v4157, %v4443
    %v4536 = vsel %vm4445, %v4535, %v4534
    %v4537 = vperm.slane %v4160, %v4447
    %v4538 = vsel %vm4449, %v4537, %v4536
    %v4539 = vperm.slane %v4163, %v4451
    %v4540 = vsel %vm4453, %v4539, %v4538
    %v4541 = vperm.slane %v4166, %v4455
    %v4542 = vsel %vm4457, %v4541, %v4540
    %v4543 = vperm.slane %v4169, %v4459
    %v4544 = vsel %vm4461, %v4543, %v4542
    %v4545 = vperm.slane %v4172, %v4463
    %v4546 = vsel %vm4465, %v4545, %v4544
    %v4547 = vperm.slane %v4175, %v4467
    %v4548 = vsel %vm4469, %v4547, %v4546
    %v4549 = vperm.slane %v4178, %v4471
    %v4550 = vsel %vm4473, %v4549, %v4548
    %v4551 = vperm.slane %v4181, %v4475
    %v4552 = vsel %vm4477, %v4551, %v4550
    %v4553 = vperm.slane %v4184, %v4479
    %v4554 = vsel %vm4481, %v4553, %v4552
    %v4555 = vperm.slane %v4187, %v4483
    %v4556 = vsel %vm4485, %v4555, %v4554
    %v4557 = vperm.slane %v4190, %v4487
    %v4558 = vsel %vm4489, %v4557, %v4556
    %v4559 = vperm.slane %v4193, %v4491
    %v4560 = vsel %vm4493, %v4559, %v4558
    %v4561 = vperm.slane %v4196, %v4495
    %v4562 = vsel %vm4497, %v4561, %v4560
    %v4563 = vperm.slane %v4199, %v4499
    %v4564 = vsel %vm4501, %v4563, %v4562
    %v4565 = vperm.slane %v4202, %v4441
    %v4566 = vperm.slane %v4205, %v4443
    %v4567 = vsel %vm4445, %v4566, %v4565
    %v4568 = vperm.slane %v4208, %v4447
    %v4569 = vsel %vm4449, %v4568, %v4567
    %v4570 = vperm.slane %v4211, %v4451
    %v4571 = vsel %vm4453, %v4570, %v4569
    %v4572 = vperm.slane %v4214, %v4455
    %v4573 = vsel %vm4457, %v4572, %v4571
    %v4574 = vperm.slane %v4217, %v4459
    %v4575 = vsel %vm4461, %v4574, %v4573
    %v4576 = vperm.slane %v4220, %v4463
    %v4577 = vsel %vm4465, %v4576, %v4575
    %v4578 = vperm.slane %v4223, %v4467
    %v4579 = vsel %vm4469, %v4578, %v4577
    %v4580 = vperm.slane %v4226, %v4471
    %v4581 = vsel %vm4473, %v4580, %v4579
    %v4582 = vperm.slane %v4229, %v4475
    %v4583 = vsel %vm4477, %v4582, %v4581
    %v4584 = vperm.slane %v4232, %v4479
    %v4585 = vsel %vm4481, %v4584, %v4583
    %v4586 = vperm.slane %v4235, %v4483
    %v4587 = vsel %vm4485, %v4586, %v4585
    %v4588 = vperm.slane %v4238, %v4487
    %v4589 = vsel %vm4489, %v4588, %v4587
    %v4590 = vperm.slane %v4241, %v4491
    %v4591 = vsel %vm4493, %v4590, %v4589
    %v4592 = vperm.slane %v4244, %v4495
    %v4593 = vsel %vm4497, %v4592, %v4591
    %v4594 = vperm.slane %v4247, %v4499
    %v4595 = vsel %vm4501, %v4594, %v4593
    %v4596 = vperm.slane %v4250, %v4441
    %v4597 = vperm.slane %v4253, %v4443
    %v4598 = vsel %vm4445, %v4597, %v4596
    %v4599 = vperm.slane %v4256, %v4447
    %v4600 = vsel %vm4449, %v4599, %v4598
    %v4601 = vperm.slane %v4259, %v4451
    %v4602 = vsel %vm4453, %v4601, %v4600
    %v4603 = vperm.slane %v4262, %v4455
    %v4604 = vsel %vm4457, %v4603, %v4602
    %v4605 = vperm.slane %v4265, %v4459
    %v4606 = vsel %vm4461, %v4605, %v4604
    %v4607 = vperm.slane %v4268, %v4463
    %v4608 = vsel %vm4465, %v4607, %v4606
    %v4609 = vperm.slane %v4271, %v4467
    %v4610 = vsel %vm4469, %v4609, %v4608
    %v4611 = vperm.slane %v4274, %v4471
    %v4612 = vsel %vm4473, %v4611, %v4610
    %v4613 = vperm.slane %v4277, %v4475
    %v4614 = vsel %vm4477, %v4613, %v4612
    %v4615 = vperm.slane %v4280, %v4479
    %v4616 = vsel %vm4481, %v4615, %v4614
    %v4617 = vperm.slane %v4283, %v4483
    %v4618 = vsel %vm4485, %v4617, %v4616
    %v4619 = vperm.slane %v4286, %v4487
    %v4620 = vsel %vm4489, %v4619, %v4618
    %v4621 = vperm.slane %v4289, %v4491
    %v4622 = vsel %vm4493, %v4621, %v4620
    %v4623 = vperm.slane %v4292, %v4495
    %v4624 = vsel %vm4497, %v4623, %v4622
    %v4625 = vperm.slane %v4295, %v4499
    %v4626 = vsel %vm4501, %v4625, %v4624
    %v4627 = vperm.slane %v4298, %v4441
    %v4628 = vperm.slane %v4301, %v4443
    %v4629 = vsel %vm4445, %v4628, %v4627
    %v4630 = vperm.slane %v4304, %v4447
    %v4631 = vsel %vm4449, %v4630, %v4629
    %v4632 = vperm.slane %v4307, %v4451
    %v4633 = vsel %vm4453, %v4632, %v4631
    %v4634 = vperm.slane %v4310, %v4455
    %v4635 = vsel %vm4457, %v4634, %v4633
    %v4636 = vperm.slane %v4313, %v4459
    %v4637 = vsel %vm4461, %v4636, %v4635
    %v4638 = vperm.slane %v4316, %v4463
    %v4639 = vsel %vm4465, %v4638, %v4637
    %v4640 = vperm.slane %v4319, %v4467
    %v4641 = vsel %vm4469, %v4640, %v4639
    %v4642 = vperm.slane %v4322, %v4471
    %v4643 = vsel %vm4473, %v4642, %v4641
    %v4644 = vperm.slane %v4325, %v4475
    %v4645 = vsel %vm4477, %v4644, %v4643
    %v4646 = vperm.slane %v4328, %v4479
    %v4647 = vsel %vm4481, %v4646, %v4645
    %v4648 = vperm.slane %v4331, %v4483
    %v4649 = vsel %vm4485, %v4648, %v4647
    %v4650 = vperm.slane %v4334, %v4487
    %v4651 = vsel %vm4489, %v4650, %v4649
    %v4652 = vperm.slane %v4337, %v4491
    %v4653 = vsel %vm4493, %v4652, %v4651
    %v4654 = vperm.slane %v4340, %v4495
    %v4655 = vsel %vm4497, %v4654, %v4653
    %v4656 = vperm.slane %v4343, %v4499
    %v4657 = vsel %vm4501, %v4656, %v4655
    %v4658 = vperm.slane %v4346, %v4441
    %v4659 = vperm.slane %v4349, %v4443
    %v4660 = vsel %vm4445, %v4659, %v4658
    %v4661 = vperm.slane %v4352, %v4447
    %v4662 = vsel %vm4449, %v4661, %v4660
    %v4663 = vperm.slane %v4355, %v4451
    %v4664 = vsel %vm4453, %v4663, %v4662
    %v4665 = vperm.slane %v4358, %v4455
    %v4666 = vsel %vm4457, %v4665, %v4664
    %v4667 = vperm.slane %v4361, %v4459
    %v4668 = vsel %vm4461, %v4667, %v4666
    %v4669 = vperm.slane %v4364, %v4463
    %v4670 = vsel %vm4465, %v4669, %v4668
    %v4671 = vperm.slane %v4367, %v4467
    %v4672 = vsel %vm4469, %v4671, %v4670
    %v4673 = vperm.slane %v4370, %v4471
    %v4674 = vsel %vm4473, %v4673, %v4672
    %v4675 = vperm.slane %v4373, %v4475
    %v4676 = vsel %vm4477, %v4675, %v4674
    %v4677 = vperm.slane %v4376, %v4479
    %v4678 = vsel %vm4481, %v4677, %v4676
    %v4679 = vperm.slane %v4379, %v4483
    %v4680 = vsel %vm4485, %v4679, %v4678
    %v4681 = vperm.slane %v4382, %v4487
    %v4682 = vsel %vm4489, %v4681, %v4680
    %v4683 = vperm.slane %v4385, %v4491
    %v4684 = vsel %vm4493, %v4683, %v4682
    %v4685 = vperm.slane %v4388, %v4495
    %v4686 = vsel %vm4497, %v4685, %v4684
    %v4687 = vperm.slane %v4391, %v4499
    %v4688 = vsel %vm4501, %v4687, %v4686
    %v4689 = vperm.slane %v4394, %v4441
    %v4690 = vperm.slane %v4397, %v4443
    %v4691 = vsel %vm4445, %v4690, %v4689
    %v4692 = vperm.slane %v4400, %v4447
    %v4693 = vsel %vm4449, %v4692, %v4691
    %v4694 = vperm.slane %v4403, %v4451
    %v4695 = vsel %vm4453, %v4694, %v4693
    %v4696 = vperm.slane %v4406, %v4455
    %v4697 = vsel %vm4457, %v4696, %v4695
    %v4698 = vperm.slane %v4409, %v4459
    %v4699 = vsel %vm4461, %v4698, %v4697
    %v4700 = vperm.slane %v4412, %v4463
    %v4701 = vsel %vm4465, %v4700, %v4699
    %v4702 = vperm.slane %v4415, %v4467
    %v4703 = vsel %vm4469, %v4702, %v4701
    %v4704 = vperm.slane %v4418, %v4471
    %v4705 = vsel %vm4473, %v4704, %v4703
    %v4706 = vperm.slane %v4421, %v4475
    %v4707 = vsel %vm4477, %v4706, %v4705
    %v4708 = vperm.slane %v4424, %v4479
    %v4709 = vsel %vm4481, %v4708, %v4707
    %v4710 = vperm.slane %v4427, %v4483
    %v4711 = vsel %vm4485, %v4710, %v4709
    %v4712 = vperm.slane %v4430, %v4487
    %v4713 = vsel %vm4489, %v4712, %v4711
    %v4714 = vperm.slane %v4433, %v4491
    %v4715 = vsel %vm4493, %v4714, %v4713
    %v4716 = vperm.slane %v4436, %v4495
    %v4717 = vsel %vm4497, %v4716, %v4715
    %v4718 = vperm.slane %v4439, %v4499
    %v4719 = vsel %vm4501, %v4718, %v4717
    %v4720 = vrot.slane %v4533, 7
    %v4721 = vrot.slane %v4564, 6
    %v4722 = vrot.slane %v4595, 5
    %v4723 = vrot.slane %v4626, 4
    %v4724 = vrot.slane %v4657, 3
    %v4725 = vrot.slane %v4688, 2
    %v4726 = vrot.slane %v4719, 1
    %vm4727 = vcmask 1040384
    %v4728 = vsel %vm4727, %v4502, %v4720
    %vm4729 = vcmask 1042434
    %v4730 = vsel %vm4729, %v4721, %v4722
    %vm4731 = vcmask 1041408
    %v4732 = vsel %vm4731, %v4728, %v4730
    %vm4733 = vcmask 1044484
    %v4734 = vsel %vm4733, %v4723, %v4724
    %vm4735 = vcmask 1046534
    %v4736 = vsel %vm4735, %v4725, %v4726
    %vm4737 = vcmask 1045508
    %v4738 = vsel %vm4737, %v4734, %v4736
    %vm4739 = vcmask 1043456
    %v4740 = vsel %vm4739, %v4732, %v4738
    %s4742 = sshra.s32 %s1098, 7
    %s4743 = sand.u32 %s1098, 127
    %s4744 = scalar_lea.vmem %s6, %s4742
    %4745 = vst [vmem:[%s4744] sm:$0xff] %v4740
    // Predicated region
    $region34: #{my_lin_lin_tanh_sinc.1} parent=1 // pred_check
      %p4746 = pneg %p37
    $region35: #{my_lin_lin_tanh_sinc.1} parent=1 // pred_check_branch
      %4748 = sbr.rel (%p4746) target = $region37
    $region36: #{my_lin_lin_tanh_sinc.1} parent=1 // pred_region
      %v4749 = vadd.s32 %v4441, 128
      %v4750 = vadd.s32 %v4441, 256
      %v4751 = vadd.s32 %v4441, 384
      %v4752 = vadd.s32 %v4441, 512
      %v4753 = vadd.s32 %v4441, 640
      %v4754 = vadd.s32 %v4441, 768
      %v4755 = vadd.s32 %v4441, 896
      %v4756 = vadd.s32 %v4441, 1024
      %v4757 = vadd.s32 %v4441, 1152
      %vm4758 = vcmp.lt.s32.totalorder %v4441, 1128
      %vm4759 = vcmp.lt.s32.totalorder %v4749, 1128
      %vm4760 = vcmp.lt.s32.totalorder %v4750, 1128
      %vm4761 = vcmp.lt.s32.totalorder %v4751, 1128
      %vm4762 = vcmp.lt.s32.totalorder %v4752, 1128
      %vm4763 = vcmp.lt.s32.totalorder %v4753, 1128
      %vm4764 = vcmp.lt.s32.totalorder %v4754, 1128
      %vm4765 = vcmp.lt.s32.totalorder %v4755, 1128
      %vm4766 = vcmp.lt.s32.totalorder %v4756, 1128
      %vm4767 = vcmp.lt.s32.totalorder %v4757, 1128
      %v4768 = vld [vmem:[%s6] sm:$0xff]
      %v4769 = vld [vmem:[%s6 + $0x8] sm:$0x3]
      %v4772 = vperm.slane %v4768, 0
      %v4773 = vperm.slane %v4768, 1
      %v4774 = vperm.slane %v4768, 2
      %v4775 = vperm.slane %v4768, 3
      %v4776 = vperm.slane %v4768, 4
      %v4777 = vperm.slane %v4768, 5
      %v4778 = vperm.slane %v4768, 6
      %v4779 = vperm.slane %v4768, 7
      %v4780 = vperm.slane %v4769, 0
      %v4781 = vperm.slane %v4769, 1
      %v4792 = vsel %vm4758, %v4772, 0.0
      %v4793 = vsel %vm4759, %v4773, 0.0
      %v4794 = vsel %vm4760, %v4774, 0.0
      %v4795 = vsel %vm4761, %v4775, 0.0
      %v4796 = vsel %vm4762, %v4776, 0.0
      %v4797 = vsel %vm4763, %v4777, 0.0
      %v4798 = vsel %vm4764, %v4778, 0.0
      %v4799 = vsel %vm4765, %v4779, 0.0
      %v4800 = vsel %vm4766, %v4780, 0.0
      %v4801 = vsel %vm4767, %v4781, 0.0
      %s4802 = sld [smem:[#allocation3]]
      %v4803 = vstv %s4802
      %v4804 = vmul.f32 %v4803, %v4792
      %v4805 = vmul.f32 %v4803, %v4793
      %v4806 = vmul.f32 %v4803, %v4794
      %v4807 = vmul.f32 %v4803, %v4795
      %v4808 = vmul.f32 %v4803, %v4796
      %v4809 = vmul.f32 %v4803, %v4797
      %v4810 = vmul.f32 %v4803, %v4798
      %v4811 = vmul.f32 %v4803, %v4799
      %v4812 = vmul.f32 %v4803, %v4800
      %s4813 = sld [smem:[#allocation3 + $0x1]]
      %v4814 = vstv %s4813
      %v4815 = vmul.f32 %v4814, %v4792
      %v4816 = vmul.f32 %v4814, %v4793
      %v4817 = vmul.f32 %v4814, %v4794
      %v4818 = vmul.f32 %v4814, %v4795
      %v4819 = vmul.f32 %v4814, %v4796
      %v4820 = vmul.f32 %v4814, %v4797
      %v4821 = vmul.f32 %v4814, %v4798
      %v4822 = vmul.f32 %v4814, %v4799
      %v4823 = vmul.f32 %v4814, %v4800
      %4833 = vrot.lane.b32.xlu0 %v4815, 127
      %v4834 = vpop.permute.xlu0 %4833
      %4835 = vrot.lane.b32.xlu0 %v4816, 127
      %v4836 = vpop.permute.xlu0 %4835
      %4837 = vrot.lane.b32.xlu0 %v4817, 127
      %v4838 = vpop.permute.xlu0 %4837
      %4839 = vrot.lane.b32.xlu0 %v4818, 127
      %v4840 = vpop.permute.xlu0 %4839
      %4841 = vrot.lane.b32.xlu0 %v4819, 127
      %v4842 = vpop.permute.xlu0 %4841
      %4843 = vrot.lane.b32.xlu0 %v4820, 127
      %v4844 = vpop.permute.xlu0 %4843
      %4845 = vrot.lane.b32.xlu0 %v4821, 127
      %v4846 = vpop.permute.xlu0 %4845
      %4847 = vrot.lane.b32.xlu0 %v4822, 127
      %v4848 = vpop.permute.xlu0 %4847
      %4849 = vrot.lane.b32.xlu0 %v4823, 127
      %v4850 = vpop.permute.xlu0 %4849
      %vm4851 = vcmask 1039360
      %v4852 = vsel %vm4851, %v4834, %v4836
      %v4853 = vsel %vm4851, %v4836, %v4838
      %v4854 = vsel %vm4851, %v4838, %v4840
      %v4855 = vsel %vm4851, %v4840, %v4842
      %v4856 = vsel %vm4851, %v4842, %v4844
      %v4857 = vsel %vm4851, %v4844, %v4846
      %v4858 = vsel %vm4851, %v4846, %v4848
      %v4859 = vsel %vm4851, %v4848, %v4850
      %v4869 = vadd.f32 %v4804, %v4852
      %v4870 = vadd.f32 %v4805, %v4853
      %v4871 = vadd.f32 %v4806, %v4854
      %v4872 = vadd.f32 %v4807, %v4855
      %v4873 = vadd.f32 %v4808, %v4856
      %v4874 = vadd.f32 %v4809, %v4857
      %v4875 = vadd.f32 %v4810, %v4858
      %v4876 = vadd.f32 %v4811, %v4859
      %v4877 = vadd.f32 %v4812, %v4850
      %s4878 = sld [smem:[#allocation3 + $0x2]]
      %v4879 = vstv %s4878
      %v4880 = vmul.f32 %v4879, %v4792
      %v4881 = vmul.f32 %v4879, %v4793
      %v4882 = vmul.f32 %v4879, %v4794
      %v4883 = vmul.f32 %v4879, %v4795
      %v4884 = vmul.f32 %v4879, %v4796
      %v4885 = vmul.f32 %v4879, %v4797
      %v4886 = vmul.f32 %v4879, %v4798
      %v4887 = vmul.f32 %v4879, %v4799
      %v4888 = vmul.f32 %v4879, %v4800
      %4898 = vrot.lane.b32.xlu0 %v4880, 126
      %v4899 = vpop.permute.xlu0 %4898
      %4900 = vrot.lane.b32.xlu0 %v4881, 126
      %v4901 = vpop.permute.xlu0 %4900
      %4902 = vrot.lane.b32.xlu0 %v4882, 126
      %v4903 = vpop.permute.xlu0 %4902
      %4904 = vrot.lane.b32.xlu0 %v4883, 126
      %v4905 = vpop.permute.xlu0 %4904
      %4906 = vrot.lane.b32.xlu0 %v4884, 126
      %v4907 = vpop.permute.xlu0 %4906
      %4908 = vrot.lane.b32.xlu0 %v4885, 126
      %v4909 = vpop.permute.xlu0 %4908
      %4910 = vrot.lane.b32.xlu0 %v4886, 126
      %v4911 = vpop.permute.xlu0 %4910
      %4912 = vrot.lane.b32.xlu0 %v4887, 126
      %v4913 = vpop.permute.xlu0 %4912
      %4914 = vrot.lane.b32.xlu0 %v4888, 126
      %v4915 = vpop.permute.xlu0 %4914
      %vm4916 = vcmask 1031168
      %v4917 = vsel %vm4916, %v4899, %v4901
      %v4918 = vsel %vm4916, %v4901, %v4903
      %v4919 = vsel %vm4916, %v4903, %v4905
      %v4920 = vsel %vm4916, %v4905, %v4907
      %v4921 = vsel %vm4916, %v4907, %v4909
      %v4922 = vsel %vm4916, %v4909, %v4911
      %v4923 = vsel %vm4916, %v4911, %v4913
      %v4924 = vsel %vm4916, %v4913, %v4915
      %v4934 = vadd.f32 %v4869, %v4917
      %v4935 = vadd.f32 %v4870, %v4918
      %v4936 = vadd.f32 %v4871, %v4919
      %v4937 = vadd.f32 %v4872, %v4920
      %v4938 = vadd.f32 %v4873, %v4921
      %v4939 = vadd.f32 %v4874, %v4922
      %v4940 = vadd.f32 %v4875, %v4923
      %v4941 = vadd.f32 %v4876, %v4924
      %v4942 = vadd.f32 %v4877, %v4915
      %s4943 = sld [smem:[#allocation3 + $0x3]]
      %v4944 = vstv %s4943
      %v4945 = vmul.f32 %v4944, %v4792
      %v4946 = vmul.f32 %v4944, %v4793
      %v4947 = vmul.f32 %v4944, %v4794
      %v4948 = vmul.f32 %v4944, %v4795
      %v4949 = vmul.f32 %v4944, %v4796
      %v4950 = vmul.f32 %v4944, %v4797
      %v4951 = vmul.f32 %v4944, %v4798
      %v4952 = vmul.f32 %v4944, %v4799
      %v4953 = vmul.f32 %v4944, %v4800
      %4963 = vrot.lane.b32.xlu0 %v4945, 125
      %v4964 = vpop.permute.xlu0 %4963
      %4965 = vrot.lane.b32.xlu0 %v4946, 125
      %v4966 = vpop.permute.xlu0 %4965
      %4967 = vrot.lane.b32.xlu0 %v4947, 125
      %v4968 = vpop.permute.xlu0 %4967
      %4969 = vrot.lane.b32.xlu0 %v4948, 125
      %v4970 = vpop.permute.xlu0 %4969
      %4971 = vrot.lane.b32.xlu0 %v4949, 125
      %v4972 = vpop.permute.xlu0 %4971
      %4973 = vrot.lane.b32.xlu0 %v4950, 125
      %v4974 = vpop.permute.xlu0 %4973
      %4975 = vrot.lane.b32.xlu0 %v4951, 125
      %v4976 = vpop.permute.xlu0 %4975
      %4977 = vrot.lane.b32.xlu0 %v4952, 125
      %v4978 = vpop.permute.xlu0 %4977
      %4979 = vrot.lane.b32.xlu0 %v4953, 125
      %v4980 = vpop.permute.xlu0 %4979
      %vm4981 = vcmask 1022976
      %v4982 = vsel %vm4981, %v4964, %v4966
      %v4983 = vsel %vm4981, %v4966, %v4968
      %v4984 = vsel %vm4981, %v4968, %v4970
      %v4985 = vsel %vm4981, %v4970, %v4972
      %v4986 = vsel %vm4981, %v4972, %v4974
      %v4987 = vsel %vm4981, %v4974, %v4976
      %v4988 = vsel %vm4981, %v4976, %v4978
      %v4989 = vsel %vm4981, %v4978, %v4980
      %v4999 = vadd.f32 %v4934, %v4982
      %v5000 = vadd.f32 %v4935, %v4983
      %v5001 = vadd.f32 %v4936, %v4984
      %v5002 = vadd.f32 %v4937, %v4985
      %v5003 = vadd.f32 %v4938, %v4986
      %v5004 = vadd.f32 %v4939, %v4987
      %v5005 = vadd.f32 %v4940, %v4988
      %v5006 = vadd.f32 %v4941, %v4989
      %v5007 = vadd.f32 %v4942, %v4980
      %s5008 = sld [smem:[#allocation3 + $0x4]]
      %v5009 = vstv %s5008
      %v5010 = vmul.f32 %v5009, %v4792
      %v5011 = vmul.f32 %v5009, %v4793
      %v5012 = vmul.f32 %v5009, %v4794
      %v5013 = vmul.f32 %v5009, %v4795
      %v5014 = vmul.f32 %v5009, %v4796
      %v5015 = vmul.f32 %v5009, %v4797
      %v5016 = vmul.f32 %v5009, %v4798
      %v5017 = vmul.f32 %v5009, %v4799
      %v5018 = vmul.f32 %v5009, %v4800
      %5028 = vrot.lane.b32.xlu0 %v5010, 124
      %v5029 = vpop.permute.xlu0 %5028
      %5030 = vrot.lane.b32.xlu0 %v5011, 124
      %v5031 = vpop.permute.xlu0 %5030
      %5032 = vrot.lane.b32.xlu0 %v5012, 124
      %v5033 = vpop.permute.xlu0 %5032
      %5034 = vrot.lane.b32.xlu0 %v5013, 124
      %v5035 = vpop.permute.xlu0 %5034
      %5036 = vrot.lane.b32.xlu0 %v5014, 124
      %v5037 = vpop.permute.xlu0 %5036
      %5038 = vrot.lane.b32.xlu0 %v5015, 124
      %v5039 = vpop.permute.xlu0 %5038
      %5040 = vrot.lane.b32.xlu0 %v5016, 124
      %v5041 = vpop.permute.xlu0 %5040
      %5042 = vrot.lane.b32.xlu0 %v5017, 124
      %v5043 = vpop.permute.xlu0 %5042
      %5044 = vrot.lane.b32.xlu0 %v5018, 124
      %v5045 = vpop.permute.xlu0 %5044
      %vm5046 = vcmask 1014784
      %v5047 = vsel %vm5046, %v5029, %v5031
      %v5048 = vsel %vm5046, %v5031, %v5033
      %v5049 = vsel %vm5046, %v5033, %v5035
      %v5050 = vsel %vm5046, %v5035, %v5037
      %v5051 = vsel %vm5046, %v5037, %v5039
      %v5052 = vsel %vm5046, %v5039, %v5041
      %v5053 = vsel %vm5046, %v5041, %v5043
      %v5054 = vsel %vm5046, %v5043, %v5045
      %v5064 = vadd.f32 %v4999, %v5047
      %v5065 = vadd.f32 %v5000, %v5048
      %v5066 = vadd.f32 %v5001, %v5049
      %v5067 = vadd.f32 %v5002, %v5050
      %v5068 = vadd.f32 %v5003, %v5051
      %v5069 = vadd.f32 %v5004, %v5052
      %v5070 = vadd.f32 %v5005, %v5053
      %v5071 = vadd.f32 %v5006, %v5054
      %v5072 = vadd.f32 %v5007, %v5045
      %s5073 = sld [smem:[#allocation3 + $0x5]]
      %v5074 = vstv %s5073
      %v5075 = vmul.f32 %v5074, %v4792
      %v5076 = vmul.f32 %v5074, %v4793
      %v5077 = vmul.f32 %v5074, %v4794
      %v5078 = vmul.f32 %v5074, %v4795
      %v5079 = vmul.f32 %v5074, %v4796
      %v5080 = vmul.f32 %v5074, %v4797
      %v5081 = vmul.f32 %v5074, %v4798
      %v5082 = vmul.f32 %v5074, %v4799
      %v5083 = vmul.f32 %v5074, %v4800
      %5093 = vrot.lane.b32.xlu0 %v5075, 123
      %v5094 = vpop.permute.xlu0 %5093
      %5095 = vrot.lane.b32.xlu0 %v5076, 123
      %v5096 = vpop.permute.xlu0 %5095
      %5097 = vrot.lane.b32.xlu0 %v5077, 123
      %v5098 = vpop.permute.xlu0 %5097
      %5099 = vrot.lane.b32.xlu0 %v5078, 123
      %v5100 = vpop.permute.xlu0 %5099
      %5101 = vrot.lane.b32.xlu0 %v5079, 123
      %v5102 = vpop.permute.xlu0 %5101
      %5103 = vrot.lane.b32.xlu0 %v5080, 123
      %v5104 = vpop.permute.xlu0 %5103
      %5105 = vrot.lane.b32.xlu0 %v5081, 123
      %v5106 = vpop.permute.xlu0 %5105
      %5107 = vrot.lane.b32.xlu0 %v5082, 123
      %v5108 = vpop.permute.xlu0 %5107
      %5109 = vrot.lane.b32.xlu0 %v5083, 123
      %v5110 = vpop.permute.xlu0 %5109
      %vm5111 = vcmask 1006592
      %v5112 = vsel %vm5111, %v5094, %v5096
      %v5113 = vsel %vm5111, %v5096, %v5098
      %v5114 = vsel %vm5111, %v5098, %v5100
      %v5115 = vsel %vm5111, %v5100, %v5102
      %v5116 = vsel %vm5111, %v5102, %v5104
      %v5117 = vsel %vm5111, %v5104, %v5106
      %v5118 = vsel %vm5111, %v5106, %v5108
      %v5119 = vsel %vm5111, %v5108, %v5110
      %v5129 = vadd.f32 %v5064, %v5112
      %v5130 = vadd.f32 %v5065, %v5113
      %v5131 = vadd.f32 %v5066, %v5114
      %v5132 = vadd.f32 %v5067, %v5115
      %v5133 = vadd.f32 %v5068, %v5116
      %v5134 = vadd.f32 %v5069, %v5117
      %v5135 = vadd.f32 %v5070, %v5118
      %v5136 = vadd.f32 %v5071, %v5119
      %v5137 = vadd.f32 %v5072, %v5110
      %s5138 = sld [smem:[#allocation3 + $0x6]]
      %v5139 = vstv %s5138
      %v5140 = vmul.f32 %v5139, %v4792
      %v5141 = vmul.f32 %v5139, %v4793
      %v5142 = vmul.f32 %v5139, %v4794
      %v5143 = vmul.f32 %v5139, %v4795
      %v5144 = vmul.f32 %v5139, %v4796
      %v5145 = vmul.f32 %v5139, %v4797
      %v5146 = vmul.f32 %v5139, %v4798
      %v5147 = vmul.f32 %v5139, %v4799
      %v5148 = vmul.f32 %v5139, %v4800
      %5158 = vrot.lane.b32.xlu0 %v5140, 122
      %v5159 = vpop.permute.xlu0 %5158
      %5160 = vrot.lane.b32.xlu0 %v5141, 122
      %v5161 = vpop.permute.xlu0 %5160
      %5162 = vrot.lane.b32.xlu0 %v5142, 122
      %v5163 = vpop.permute.xlu0 %5162
      %5164 = vrot.lane.b32.xlu0 %v5143, 122
      %v5165 = vpop.permute.xlu0 %5164
      %5166 = vrot.lane.b32.xlu0 %v5144, 122
      %v5167 = vpop.permute.xlu0 %5166
      %5168 = vrot.lane.b32.xlu0 %v5145, 122
      %v5169 = vpop.permute.xlu0 %5168
      %5170 = vrot.lane.b32.xlu0 %v5146, 122
      %v5171 = vpop.permute.xlu0 %5170
      %5172 = vrot.lane.b32.xlu0 %v5147, 122
      %v5173 = vpop.permute.xlu0 %5172
      %5174 = vrot.lane.b32.xlu0 %v5148, 122
      %v5175 = vpop.permute.xlu0 %5174
      %vm5176 = vcmask 998400
      %v5177 = vsel %vm5176, %v5159, %v5161
      %v5178 = vsel %vm5176, %v5161, %v5163
      %v5179 = vsel %vm5176, %v5163, %v5165
      %v5180 = vsel %vm5176, %v5165, %v5167
      %v5181 = vsel %vm5176, %v5167, %v5169
      %v5182 = vsel %vm5176, %v5169, %v5171
      %v5183 = vsel %vm5176, %v5171, %v5173
      %v5184 = vsel %vm5176, %v5173, %v5175
      %v5194 = vadd.f32 %v5129, %v5177
      %v5195 = vadd.f32 %v5130, %v5178
      %v5196 = vadd.f32 %v5131, %v5179
      %v5197 = vadd.f32 %v5132, %v5180
      %v5198 = vadd.f32 %v5133, %v5181
      %v5199 = vadd.f32 %v5134, %v5182
      %v5200 = vadd.f32 %v5135, %v5183
      %v5201 = vadd.f32 %v5136, %v5184
      %v5202 = vadd.f32 %v5137, %v5175
      %s5203 = sld [smem:[#allocation3 + $0x7]]
      %v5204 = vstv %s5203
      %v5205 = vmul.f32 %v5204, %v4792
      %v5206 = vmul.f32 %v5204, %v4793
      %v5207 = vmul.f32 %v5204, %v4794
      %v5208 = vmul.f32 %v5204, %v4795
      %v5209 = vmul.f32 %v5204, %v4796
      %v5210 = vmul.f32 %v5204, %v4797
      %v5211 = vmul.f32 %v5204, %v4798
      %v5212 = vmul.f32 %v5204, %v4799
      %v5213 = vmul.f32 %v5204, %v4800
      %5223 = vrot.lane.b32.xlu0 %v5205, 121
      %v5224 = vpop.permute.xlu0 %5223
      %5225 = vrot.lane.b32.xlu0 %v5206, 121
      %v5226 = vpop.permute.xlu0 %5225
      %5227 = vrot.lane.b32.xlu0 %v5207, 121
      %v5228 = vpop.permute.xlu0 %5227
      %5229 = vrot.lane.b32.xlu0 %v5208, 121
      %v5230 = vpop.permute.xlu0 %5229
      %5231 = vrot.lane.b32.xlu0 %v5209, 121
      %v5232 = vpop.permute.xlu0 %5231
      %5233 = vrot.lane.b32.xlu0 %v5210, 121
      %v5234 = vpop.permute.xlu0 %5233
      %5235 = vrot.lane.b32.xlu0 %v5211, 121
      %v5236 = vpop.permute.xlu0 %5235
      %5237 = vrot.lane.b32.xlu0 %v5212, 121
      %v5238 = vpop.permute.xlu0 %5237
      %5239 = vrot.lane.b32.xlu0 %v5213, 121
      %v5240 = vpop.permute.xlu0 %5239
      %vm5241 = vcmask 990208
      %v5242 = vsel %vm5241, %v5224, %v5226
      %v5243 = vsel %vm5241, %v5226, %v5228
      %v5244 = vsel %vm5241, %v5228, %v5230
      %v5245 = vsel %vm5241, %v5230, %v5232
      %v5246 = vsel %vm5241, %v5232, %v5234
      %v5247 = vsel %vm5241, %v5234, %v5236
      %v5248 = vsel %vm5241, %v5236, %v5238
      %v5249 = vsel %vm5241, %v5238, %v5240
      %v5259 = vadd.f32 %v5194, %v5242
      %v5260 = vadd.f32 %v5195, %v5243
      %v5261 = vadd.f32 %v5196, %v5244
      %v5262 = vadd.f32 %v5197, %v5245
      %v5263 = vadd.f32 %v5198, %v5246
      %v5264 = vadd.f32 %v5199, %v5247
      %v5265 = vadd.f32 %v5200, %v5248
      %v5266 = vadd.f32 %v5201, %v5249
      %v5267 = vadd.f32 %v5202, %v5240
      %s5268 = sld [smem:[#allocation3 + $0x8]]
      %v5269 = vstv %s5268
      %v5270 = vmul.f32 %v5269, %v4792
      %v5271 = vmul.f32 %v5269, %v4793
      %v5272 = vmul.f32 %v5269, %v4794
      %v5273 = vmul.f32 %v5269, %v4795
      %v5274 = vmul.f32 %v5269, %v4796
      %v5275 = vmul.f32 %v5269, %v4797
      %v5276 = vmul.f32 %v5269, %v4798
      %v5277 = vmul.f32 %v5269, %v4799
      %v5278 = vmul.f32 %v5269, %v4800
      %5288 = vrot.lane.b32.xlu0 %v5270, 120
      %v5289 = vpop.permute.xlu0 %5288
      %5290 = vrot.lane.b32.xlu0 %v5271, 120
      %v5291 = vpop.permute.xlu0 %5290
      %5292 = vrot.lane.b32.xlu0 %v5272, 120
      %v5293 = vpop.permute.xlu0 %5292
      %5294 = vrot.lane.b32.xlu0 %v5273, 120
      %v5295 = vpop.permute.xlu0 %5294
      %5296 = vrot.lane.b32.xlu0 %v5274, 120
      %v5297 = vpop.permute.xlu0 %5296
      %5298 = vrot.lane.b32.xlu0 %v5275, 120
      %v5299 = vpop.permute.xlu0 %5298
      %5300 = vrot.lane.b32.xlu0 %v5276, 120
      %v5301 = vpop.permute.xlu0 %5300
      %5302 = vrot.lane.b32.xlu0 %v5277, 120
      %v5303 = vpop.permute.xlu0 %5302
      %5304 = vrot.lane.b32.xlu0 %v5278, 120
      %v5305 = vpop.permute.xlu0 %5304
      %vm5306 = vcmask 982016
      %v5307 = vsel %vm5306, %v5289, %v5291
      %v5308 = vsel %vm5306, %v5291, %v5293
      %v5309 = vsel %vm5306, %v5293, %v5295
      %v5310 = vsel %vm5306, %v5295, %v5297
      %v5311 = vsel %vm5306, %v5297, %v5299
      %v5312 = vsel %vm5306, %v5299, %v5301
      %v5313 = vsel %vm5306, %v5301, %v5303
      %v5314 = vsel %vm5306, %v5303, %v5305
      %v5324 = vadd.f32 %v5259, %v5307
      %v5325 = vadd.f32 %v5260, %v5308
      %v5326 = vadd.f32 %v5261, %v5309
      %v5327 = vadd.f32 %v5262, %v5310
      %v5328 = vadd.f32 %v5263, %v5311
      %v5329 = vadd.f32 %v5264, %v5312
      %v5330 = vadd.f32 %v5265, %v5313
      %v5331 = vadd.f32 %v5266, %v5314
      %v5332 = vadd.f32 %v5267, %v5305
      %s5333 = sld [smem:[#allocation3 + $0x9]]
      %v5334 = vstv %s5333
      %v5335 = vmul.f32 %v5334, %v4792
      %v5336 = vmul.f32 %v5334, %v4793
      %v5337 = vmul.f32 %v5334, %v4794
      %v5338 = vmul.f32 %v5334, %v4795
      %v5339 = vmul.f32 %v5334, %v4796
      %v5340 = vmul.f32 %v5334, %v4797
      %v5341 = vmul.f32 %v5334, %v4798
      %v5342 = vmul.f32 %v5334, %v4799
      %v5343 = vmul.f32 %v5334, %v4800
      %5353 = vrot.lane.b32.xlu0 %v5335, 119
      %v5354 = vpop.permute.xlu0 %5353
      %5355 = vrot.lane.b32.xlu0 %v5336, 119
      %v5356 = vpop.permute.xlu0 %5355
      %5357 = vrot.lane.b32.xlu0 %v5337, 119
      %v5358 = vpop.permute.xlu0 %5357
      %5359 = vrot.lane.b32.xlu0 %v5338, 119
      %v5360 = vpop.permute.xlu0 %5359
      %5361 = vrot.lane.b32.xlu0 %v5339, 119
      %v5362 = vpop.permute.xlu0 %5361
      %5363 = vrot.lane.b32.xlu0 %v5340, 119
      %v5364 = vpop.permute.xlu0 %5363
      %5365 = vrot.lane.b32.xlu0 %v5341, 119
      %v5366 = vpop.permute.xlu0 %5365
      %5367 = vrot.lane.b32.xlu0 %v5342, 119
      %v5368 = vpop.permute.xlu0 %5367
      %5369 = vrot.lane.b32.xlu0 %v5343, 119
      %v5370 = vpop.permute.xlu0 %5369
      %vm5371 = vcmask 973824
      %v5372 = vsel %vm5371, %v5354, %v5356
      %v5373 = vsel %vm5371, %v5356, %v5358
      %v5374 = vsel %vm5371, %v5358, %v5360
      %v5375 = vsel %vm5371, %v5360, %v5362
      %v5376 = vsel %vm5371, %v5362, %v5364
      %v5377 = vsel %vm5371, %v5364, %v5366
      %v5378 = vsel %vm5371, %v5366, %v5368
      %v5379 = vsel %vm5371, %v5368, %v5370
      %v5389 = vadd.f32 %v5324, %v5372
      %v5390 = vadd.f32 %v5325, %v5373
      %v5391 = vadd.f32 %v5326, %v5374
      %v5392 = vadd.f32 %v5327, %v5375
      %v5393 = vadd.f32 %v5328, %v5376
      %v5394 = vadd.f32 %v5329, %v5377
      %v5395 = vadd.f32 %v5330, %v5378
      %v5396 = vadd.f32 %v5331, %v5379
      %v5397 = vadd.f32 %v5332, %v5370
      %s5398 = sld [smem:[#allocation3 + $0xa]]
      %v5399 = vstv %s5398
      %v5400 = vmul.f32 %v5399, %v4793
      %v5401 = vmul.f32 %v5399, %v4794
      %v5402 = vmul.f32 %v5399, %v4795
      %v5403 = vmul.f32 %v5399, %v4796
      %v5404 = vmul.f32 %v5399, %v4797
      %v5405 = vmul.f32 %v5399, %v4798
      %v5406 = vmul.f32 %v5399, %v4799
      %v5407 = vmul.f32 %v5399, %v4800
      %5416 = vrot.lane.b32.xlu0 %v5400, 118
      %v5417 = vpop.permute.xlu0 %5416
      %5418 = vrot.lane.b32.xlu0 %v5401, 118
      %v5419 = vpop.permute.xlu0 %5418
      %5420 = vrot.lane.b32.xlu0 %v5402, 118
      %v5421 = vpop.permute.xlu0 %5420
      %5422 = vrot.lane.b32.xlu0 %v5403, 118
      %v5423 = vpop.permute.xlu0 %5422
      %5424 = vrot.lane.b32.xlu0 %v5404, 118
      %v5425 = vpop.permute.xlu0 %5424
      %5426 = vrot.lane.b32.xlu0 %v5405, 118
      %v5427 = vpop.permute.xlu0 %5426
      %5428 = vrot.lane.b32.xlu0 %v5406, 118
      %v5429 = vpop.permute.xlu0 %5428
      %5430 = vrot.lane.b32.xlu0 %v5407, 118
      %v5431 = vpop.permute.xlu0 %5430
      %vm5432 = vcmask 965632
      %v5433 = vsel %vm5432, %v5417, %v5419
      %v5434 = vsel %vm5432, %v5419, %v5421
      %v5435 = vsel %vm5432, %v5421, %v5423
      %v5436 = vsel %vm5432, %v5423, %v5425
      %v5437 = vsel %vm5432, %v5425, %v5427
      %v5438 = vsel %vm5432, %v5427, %v5429
      %v5439 = vsel %vm5432, %v5429, %v5431
      %v5449 = vadd.f32 %v5389, %v5417
      %v5450 = vadd.f32 %v5390, %v5433
      %v5451 = vadd.f32 %v5391, %v5434
      %v5452 = vadd.f32 %v5392, %v5435
      %v5453 = vadd.f32 %v5393, %v5436
      %v5454 = vadd.f32 %v5394, %v5437
      %v5455 = vadd.f32 %v5395, %v5438
      %v5456 = vadd.f32 %v5396, %v5439
      %v5457 = vadd.f32 %v5397, %v5431
      %s5458 = sld [smem:[#allocation3 + $0xb]]
      %v5459 = vstv %s5458
      %v5460 = vmul.f32 %v5459, %v4793
      %v5461 = vmul.f32 %v5459, %v4794
      %v5462 = vmul.f32 %v5459, %v4795
      %v5463 = vmul.f32 %v5459, %v4796
      %v5464 = vmul.f32 %v5459, %v4797
      %v5465 = vmul.f32 %v5459, %v4798
      %v5466 = vmul.f32 %v5459, %v4799
      %v5467 = vmul.f32 %v5459, %v4800
      %v5468 = vmul.f32 %v5459, %v4801
      %5478 = vrot.lane.b32.xlu0 %v5460, 117
      %v5479 = vpop.permute.xlu0 %5478
      %5480 = vrot.lane.b32.xlu0 %v5461, 117
      %v5481 = vpop.permute.xlu0 %5480
      %5482 = vrot.lane.b32.xlu0 %v5462, 117
      %v5483 = vpop.permute.xlu0 %5482
      %5484 = vrot.lane.b32.xlu0 %v5463, 117
      %v5485 = vpop.permute.xlu0 %5484
      %5486 = vrot.lane.b32.xlu0 %v5464, 117
      %v5487 = vpop.permute.xlu0 %5486
      %5488 = vrot.lane.b32.xlu0 %v5465, 117
      %v5489 = vpop.permute.xlu0 %5488
      %5490 = vrot.lane.b32.xlu0 %v5466, 117
      %v5491 = vpop.permute.xlu0 %5490
      %5492 = vrot.lane.b32.xlu0 %v5467, 117
      %v5493 = vpop.permute.xlu0 %5492
      %5494 = vrot.lane.b32.xlu0 %v5468, 117
      %v5495 = vpop.permute.xlu0 %5494
      %vm5496 = vcmask 957440
      %v5497 = vsel %vm5496, %v5479, %v5481
      %v5498 = vsel %vm5496, %v5481, %v5483
      %v5499 = vsel %vm5496, %v5483, %v5485
      %v5500 = vsel %vm5496, %v5485, %v5487
      %v5501 = vsel %vm5496, %v5487, %v5489
      %v5502 = vsel %vm5496, %v5489, %v5491
      %v5503 = vsel %vm5496, %v5491, %v5493
      %v5504 = vsel %vm5496, %v5493, %v5495
      %v5514 = vadd.f32 %v5449, %v5479
      %v5515 = vadd.f32 %v5450, %v5497
      %v5516 = vadd.f32 %v5451, %v5498
      %v5517 = vadd.f32 %v5452, %v5499
      %v5518 = vadd.f32 %v5453, %v5500
      %v5519 = vadd.f32 %v5454, %v5501
      %v5520 = vadd.f32 %v5455, %v5502
      %v5521 = vadd.f32 %v5456, %v5503
      %v5522 = vadd.f32 %v5457, %v5504
      %s5523 = sld [smem:[#allocation3 + $0xc]]
      %v5524 = vstv %s5523
      %v5525 = vmul.f32 %v5524, %v4793
      %v5526 = vmul.f32 %v5524, %v4794
      %v5527 = vmul.f32 %v5524, %v4795
      %v5528 = vmul.f32 %v5524, %v4796
      %v5529 = vmul.f32 %v5524, %v4797
      %v5530 = vmul.f32 %v5524, %v4798
      %v5531 = vmul.f32 %v5524, %v4799
      %v5532 = vmul.f32 %v5524, %v4800
      %v5533 = vmul.f32 %v5524, %v4801
      %5543 = vrot.lane.b32.xlu0 %v5525, 116
      %v5544 = vpop.permute.xlu0 %5543
      %5545 = vrot.lane.b32.xlu0 %v5526, 116
      %v5546 = vpop.permute.xlu0 %5545
      %5547 = vrot.lane.b32.xlu0 %v5527, 116
      %v5548 = vpop.permute.xlu0 %5547
      %5549 = vrot.lane.b32.xlu0 %v5528, 116
      %v5550 = vpop.permute.xlu0 %5549
      %5551 = vrot.lane.b32.xlu0 %v5529, 116
      %v5552 = vpop.permute.xlu0 %5551
      %5553 = vrot.lane.b32.xlu0 %v5530, 116
      %v5554 = vpop.permute.xlu0 %5553
      %5555 = vrot.lane.b32.xlu0 %v5531, 116
      %v5556 = vpop.permute.xlu0 %5555
      %5557 = vrot.lane.b32.xlu0 %v5532, 116
      %v5558 = vpop.permute.xlu0 %5557
      %5559 = vrot.lane.b32.xlu0 %v5533, 116
      %v5560 = vpop.permute.xlu0 %5559
      %vm5561 = vcmask 949248
      %v5562 = vsel %vm5561, %v5544, %v5546
      %v5563 = vsel %vm5561, %v5546, %v5548
      %v5564 = vsel %vm5561, %v5548, %v5550
      %v5565 = vsel %vm5561, %v5550, %v5552
      %v5566 = vsel %vm5561, %v5552, %v5554
      %v5567 = vsel %vm5561, %v5554, %v5556
      %v5568 = vsel %vm5561, %v5556, %v5558
      %v5569 = vsel %vm5561, %v5558, %v5560
      %v5579 = vadd.f32 %v5514, %v5544
      %v5580 = vadd.f32 %v5515, %v5562
      %v5581 = vadd.f32 %v5516, %v5563
      %v5582 = vadd.f32 %v5517, %v5564
      %v5583 = vadd.f32 %v5518, %v5565
      %v5584 = vadd.f32 %v5519, %v5566
      %v5585 = vadd.f32 %v5520, %v5567
      %v5586 = vadd.f32 %v5521, %v5568
      %v5587 = vadd.f32 %v5522, %v5569
      %s5588 = sld [smem:[#allocation3 + $0xd]]
      %v5589 = vstv %s5588
      %v5590 = vmul.f32 %v5589, %v4793
      %v5591 = vmul.f32 %v5589, %v4794
      %v5592 = vmul.f32 %v5589, %v4795
      %v5593 = vmul.f32 %v5589, %v4796
      %v5594 = vmul.f32 %v5589, %v4797
      %v5595 = vmul.f32 %v5589, %v4798
      %v5596 = vmul.f32 %v5589, %v4799
      %v5597 = vmul.f32 %v5589, %v4800
      %v5598 = vmul.f32 %v5589, %v4801
      %5608 = vrot.lane.b32.xlu0 %v5590, 115
      %v5609 = vpop.permute.xlu0 %5608
      %5610 = vrot.lane.b32.xlu0 %v5591, 115
      %v5611 = vpop.permute.xlu0 %5610
      %5612 = vrot.lane.b32.xlu0 %v5592, 115
      %v5613 = vpop.permute.xlu0 %5612
      %5614 = vrot.lane.b32.xlu0 %v5593, 115
      %v5615 = vpop.permute.xlu0 %5614
      %5616 = vrot.lane.b32.xlu0 %v5594, 115
      %v5617 = vpop.permute.xlu0 %5616
      %5618 = vrot.lane.b32.xlu0 %v5595, 115
      %v5619 = vpop.permute.xlu0 %5618
      %5620 = vrot.lane.b32.xlu0 %v5596, 115
      %v5621 = vpop.permute.xlu0 %5620
      %5622 = vrot.lane.b32.xlu0 %v5597, 115
      %v5623 = vpop.permute.xlu0 %5622
      %5624 = vrot.lane.b32.xlu0 %v5598, 115
      %v5625 = vpop.permute.xlu0 %5624
      %vm5626 = vcmask 941056
      %v5627 = vsel %vm5626, %v5609, %v5611
      %v5628 = vsel %vm5626, %v5611, %v5613
      %v5629 = vsel %vm5626, %v5613, %v5615
      %v5630 = vsel %vm5626, %v5615, %v5617
      %v5631 = vsel %vm5626, %v5617, %v5619
      %v5632 = vsel %vm5626, %v5619, %v5621
      %v5633 = vsel %vm5626, %v5621, %v5623
      %v5634 = vsel %vm5626, %v5623, %v5625
      %v5644 = vadd.f32 %v5579, %v5609
      %v5645 = vadd.f32 %v5580, %v5627
      %v5646 = vadd.f32 %v5581, %v5628
      %v5647 = vadd.f32 %v5582, %v5629
      %v5648 = vadd.f32 %v5583, %v5630
      %v5649 = vadd.f32 %v5584, %v5631
      %v5650 = vadd.f32 %v5585, %v5632
      %v5651 = vadd.f32 %v5586, %v5633
      %v5652 = vadd.f32 %v5587, %v5634
      %s5653 = sld [smem:[#allocation3 + $0xe]]
      %v5654 = vstv %s5653
      %v5655 = vmul.f32 %v5654, %v4793
      %v5656 = vmul.f32 %v5654, %v4794
      %v5657 = vmul.f32 %v5654, %v4795
      %v5658 = vmul.f32 %v5654, %v4796
      %v5659 = vmul.f32 %v5654, %v4797
      %v5660 = vmul.f32 %v5654, %v4798
      %v5661 = vmul.f32 %v5654, %v4799
      %v5662 = vmul.f32 %v5654, %v4800
      %v5663 = vmul.f32 %v5654, %v4801
      %5673 = vrot.lane.b32.xlu0 %v5655, 114
      %v5674 = vpop.permute.xlu0 %5673
      %5675 = vrot.lane.b32.xlu0 %v5656, 114
      %v5676 = vpop.permute.xlu0 %5675
      %5677 = vrot.lane.b32.xlu0 %v5657, 114
      %v5678 = vpop.permute.xlu0 %5677
      %5679 = vrot.lane.b32.xlu0 %v5658, 114
      %v5680 = vpop.permute.xlu0 %5679
      %5681 = vrot.lane.b32.xlu0 %v5659, 114
      %v5682 = vpop.permute.xlu0 %5681
      %5683 = vrot.lane.b32.xlu0 %v5660, 114
      %v5684 = vpop.permute.xlu0 %5683
      %5685 = vrot.lane.b32.xlu0 %v5661, 114
      %v5686 = vpop.permute.xlu0 %5685
      %5687 = vrot.lane.b32.xlu0 %v5662, 114
      %v5688 = vpop.permute.xlu0 %5687
      %5689 = vrot.lane.b32.xlu0 %v5663, 114
      %v5690 = vpop.permute.xlu0 %5689
      %vm5691 = vcmask 932864
      %v5692 = vsel %vm5691, %v5674, %v5676
      %v5693 = vsel %vm5691, %v5676, %v5678
      %v5694 = vsel %vm5691, %v5678, %v5680
      %v5695 = vsel %vm5691, %v5680, %v5682
      %v5696 = vsel %vm5691, %v5682, %v5684
      %v5697 = vsel %vm5691, %v5684, %v5686
      %v5698 = vsel %vm5691, %v5686, %v5688
      %v5699 = vsel %vm5691, %v5688, %v5690
      %v5709 = vadd.f32 %v5644, %v5674
      %v5710 = vadd.f32 %v5645, %v5692
      %v5711 = vadd.f32 %v5646, %v5693
      %v5712 = vadd.f32 %v5647, %v5694
      %v5713 = vadd.f32 %v5648, %v5695
      %v5714 = vadd.f32 %v5649, %v5696
      %v5715 = vadd.f32 %v5650, %v5697
      %v5716 = vadd.f32 %v5651, %v5698
      %v5717 = vadd.f32 %v5652, %v5699
      %s5718 = sld [smem:[#allocation3 + $0xf]]
      %v5719 = vstv %s5718
      %v5720 = vmul.f32 %v5719, %v4793
      %v5721 = vmul.f32 %v5719, %v4794
      %v5722 = vmul.f32 %v5719, %v4795
      %v5723 = vmul.f32 %v5719, %v4796
      %v5724 = vmul.f32 %v5719, %v4797
      %v5725 = vmul.f32 %v5719, %v4798
      %v5726 = vmul.f32 %v5719, %v4799
      %v5727 = vmul.f32 %v5719, %v4800
      %v5728 = vmul.f32 %v5719, %v4801
      %5738 = vrot.lane.b32.xlu0 %v5720, 113
      %v5739 = vpop.permute.xlu0 %5738
      %5740 = vrot.lane.b32.xlu0 %v5721, 113
      %v5741 = vpop.permute.xlu0 %5740
      %5742 = vrot.lane.b32.xlu0 %v5722, 113
      %v5743 = vpop.permute.xlu0 %5742
      %5744 = vrot.lane.b32.xlu0 %v5723, 113
      %v5745 = vpop.permute.xlu0 %5744
      %5746 = vrot.lane.b32.xlu0 %v5724, 113
      %v5747 = vpop.permute.xlu0 %5746
      %5748 = vrot.lane.b32.xlu0 %v5725, 113
      %v5749 = vpop.permute.xlu0 %5748
      %5750 = vrot.lane.b32.xlu0 %v5726, 113
      %v5751 = vpop.permute.xlu0 %5750
      %5752 = vrot.lane.b32.xlu0 %v5727, 113
      %v5753 = vpop.permute.xlu0 %5752
      %5754 = vrot.lane.b32.xlu0 %v5728, 113
      %v5755 = vpop.permute.xlu0 %5754
      %vm5756 = vcmask 924672
      %v5757 = vsel %vm5756, %v5739, %v5741
      %v5758 = vsel %vm5756, %v5741, %v5743
      %v5759 = vsel %vm5756, %v5743, %v5745
      %v5760 = vsel %vm5756, %v5745, %v5747
      %v5761 = vsel %vm5756, %v5747, %v5749
      %v5762 = vsel %vm5756, %v5749, %v5751
      %v5763 = vsel %vm5756, %v5751, %v5753
      %v5764 = vsel %vm5756, %v5753, %v5755
      %v5774 = vadd.f32 %v5709, %v5739
      %v5775 = vadd.f32 %v5710, %v5757
      %v5776 = vadd.f32 %v5711, %v5758
      %v5777 = vadd.f32 %v5712, %v5759
      %v5778 = vadd.f32 %v5713, %v5760
      %v5779 = vadd.f32 %v5714, %v5761
      %v5780 = vadd.f32 %v5715, %v5762
      %v5781 = vadd.f32 %v5716, %v5763
      %v5782 = vadd.f32 %v5717, %v5764
      %s5783 = sld [smem:[#allocation3 + $0x10]]
      %v5784 = vstv %s5783
      %v5785 = vmul.f32 %v5784, %v4793
      %v5786 = vmul.f32 %v5784, %v4794
      %v5787 = vmul.f32 %v5784, %v4795
      %v5788 = vmul.f32 %v5784, %v4796
      %v5789 = vmul.f32 %v5784, %v4797
      %v5790 = vmul.f32 %v5784, %v4798
      %v5791 = vmul.f32 %v5784, %v4799
      %v5792 = vmul.f32 %v5784, %v4800
      %v5793 = vmul.f32 %v5784, %v4801
      %5803 = vrot.lane.b32.xlu0 %v5785, 112
      %v5804 = vpop.permute.xlu0 %5803
      %5805 = vrot.lane.b32.xlu0 %v5786, 112
      %v5806 = vpop.permute.xlu0 %5805
      %5807 = vrot.lane.b32.xlu0 %v5787, 112
      %v5808 = vpop.permute.xlu0 %5807
      %5809 = vrot.lane.b32.xlu0 %v5788, 112
      %v5810 = vpop.permute.xlu0 %5809
      %5811 = vrot.lane.b32.xlu0 %v5789, 112
      %v5812 = vpop.permute.xlu0 %5811
      %5813 = vrot.lane.b32.xlu0 %v5790, 112
      %v5814 = vpop.permute.xlu0 %5813
      %5815 = vrot.lane.b32.xlu0 %v5791, 112
      %v5816 = vpop.permute.xlu0 %5815
      %5817 = vrot.lane.b32.xlu0 %v5792, 112
      %v5818 = vpop.permute.xlu0 %5817
      %5819 = vrot.lane.b32.xlu0 %v5793, 112
      %v5820 = vpop.permute.xlu0 %5819
      %vm5821 = vcmask 916480
      %v5822 = vsel %vm5821, %v5804, %v5806
      %v5823 = vsel %vm5821, %v5806, %v5808
      %v5824 = vsel %vm5821, %v5808, %v5810
      %v5825 = vsel %vm5821, %v5810, %v5812
      %v5826 = vsel %vm5821, %v5812, %v5814
      %v5827 = vsel %vm5821, %v5814, %v5816
      %v5828 = vsel %vm5821, %v5816, %v5818
      %v5829 = vsel %vm5821, %v5818, %v5820
      %v5839 = vadd.f32 %v5774, %v5804
      %v5840 = vadd.f32 %v5775, %v5822
      %v5841 = vadd.f32 %v5776, %v5823
      %v5842 = vadd.f32 %v5777, %v5824
      %v5843 = vadd.f32 %v5778, %v5825
      %v5844 = vadd.f32 %v5779, %v5826
      %v5845 = vadd.f32 %v5780, %v5827
      %v5846 = vadd.f32 %v5781, %v5828
      %v5847 = vadd.f32 %v5782, %v5829
      %s5848 = sld [smem:[#allocation3 + $0x11]]
      %v5849 = vstv %s5848
      %v5850 = vmul.f32 %v5849, %v4793
      %v5851 = vmul.f32 %v5849, %v4794
      %v5852 = vmul.f32 %v5849, %v4795
      %v5853 = vmul.f32 %v5849, %v4796
      %v5854 = vmul.f32 %v5849, %v4797
      %v5855 = vmul.f32 %v5849, %v4798
      %v5856 = vmul.f32 %v5849, %v4799
      %v5857 = vmul.f32 %v5849, %v4800
      %v5858 = vmul.f32 %v5849, %v4801
      %5868 = vrot.lane.b32.xlu0 %v5850, 111
      %v5869 = vpop.permute.xlu0 %5868
      %5870 = vrot.lane.b32.xlu0 %v5851, 111
      %v5871 = vpop.permute.xlu0 %5870
      %5872 = vrot.lane.b32.xlu0 %v5852, 111
      %v5873 = vpop.permute.xlu0 %5872
      %5874 = vrot.lane.b32.xlu0 %v5853, 111
      %v5875 = vpop.permute.xlu0 %5874
      %5876 = vrot.lane.b32.xlu0 %v5854, 111
      %v5877 = vpop.permute.xlu0 %5876
      %5878 = vrot.lane.b32.xlu0 %v5855, 111
      %v5879 = vpop.permute.xlu0 %5878
      %5880 = vrot.lane.b32.xlu0 %v5856, 111
      %v5881 = vpop.permute.xlu0 %5880
      %5882 = vrot.lane.b32.xlu0 %v5857, 111
      %v5883 = vpop.permute.xlu0 %5882
      %5884 = vrot.lane.b32.xlu0 %v5858, 111
      %v5885 = vpop.permute.xlu0 %5884
      %vm5886 = vcmask 908288
      %v5887 = vsel %vm5886, %v5869, %v5871
      %v5888 = vsel %vm5886, %v5871, %v5873
      %v5889 = vsel %vm5886, %v5873, %v5875
      %v5890 = vsel %vm5886, %v5875, %v5877
      %v5891 = vsel %vm5886, %v5877, %v5879
      %v5892 = vsel %vm5886, %v5879, %v5881
      %v5893 = vsel %vm5886, %v5881, %v5883
      %v5894 = vsel %vm5886, %v5883, %v5885
      %v5904 = vadd.f32 %v5839, %v5869
      %v5905 = vadd.f32 %v5840, %v5887
      %v5906 = vadd.f32 %v5841, %v5888
      %v5907 = vadd.f32 %v5842, %v5889
      %v5908 = vadd.f32 %v5843, %v5890
      %v5909 = vadd.f32 %v5844, %v5891
      %v5910 = vadd.f32 %v5845, %v5892
      %v5911 = vadd.f32 %v5846, %v5893
      %v5912 = vadd.f32 %v5847, %v5894
      %s5913 = sld [smem:[#allocation3 + $0x12]]
      %v5914 = vstv %s5913
      %v5915 = vmul.f32 %v5914, %v4793
      %v5916 = vmul.f32 %v5914, %v4794
      %v5917 = vmul.f32 %v5914, %v4795
      %v5918 = vmul.f32 %v5914, %v4796
      %v5919 = vmul.f32 %v5914, %v4797
      %v5920 = vmul.f32 %v5914, %v4798
      %v5921 = vmul.f32 %v5914, %v4799
      %v5922 = vmul.f32 %v5914, %v4800
      %v5923 = vmul.f32 %v5914, %v4801
      %5933 = vrot.lane.b32.xlu0 %v5915, 110
      %v5934 = vpop.permute.xlu0 %5933
      %5935 = vrot.lane.b32.xlu0 %v5916, 110
      %v5936 = vpop.permute.xlu0 %5935
      %5937 = vrot.lane.b32.xlu0 %v5917, 110
      %v5938 = vpop.permute.xlu0 %5937
      %5939 = vrot.lane.b32.xlu0 %v5918, 110
      %v5940 = vpop.permute.xlu0 %5939
      %5941 = vrot.lane.b32.xlu0 %v5919, 110
      %v5942 = vpop.permute.xlu0 %5941
      %5943 = vrot.lane.b32.xlu0 %v5920, 110
      %v5944 = vpop.permute.xlu0 %5943
      %5945 = vrot.lane.b32.xlu0 %v5921, 110
      %v5946 = vpop.permute.xlu0 %5945
      %5947 = vrot.lane.b32.xlu0 %v5922, 110
      %v5948 = vpop.permute.xlu0 %5947
      %5949 = vrot.lane.b32.xlu0 %v5923, 110
      %v5950 = vpop.permute.xlu0 %5949
      %vm5951 = vcmask 900096
      %v5952 = vsel %vm5951, %v5934, %v5936
      %v5953 = vsel %vm5951, %v5936, %v5938
      %v5954 = vsel %vm5951, %v5938, %v5940
      %v5955 = vsel %vm5951, %v5940, %v5942
      %v5956 = vsel %vm5951, %v5942, %v5944
      %v5957 = vsel %vm5951, %v5944, %v5946
      %v5958 = vsel %vm5951, %v5946, %v5948
      %v5959 = vsel %vm5951, %v5948, %v5950
      %v5969 = vadd.f32 %v5904, %v5934
      %v5970 = vadd.f32 %v5905, %v5952
      %v5971 = vadd.f32 %v5906, %v5953
      %v5972 = vadd.f32 %v5907, %v5954
      %v5973 = vadd.f32 %v5908, %v5955
      %v5974 = vadd.f32 %v5909, %v5956
      %v5975 = vadd.f32 %v5910, %v5957
      %v5976 = vadd.f32 %v5911, %v5958
      %v5977 = vadd.f32 %v5912, %v5959
      %s5978 = sld [smem:[#allocation3 + $0x13]]
      %v5979 = vstv %s5978
      %v5980 = vmul.f32 %v5979, %v4793
      %v5981 = vmul.f32 %v5979, %v4794
      %v5982 = vmul.f32 %v5979, %v4795
      %v5983 = vmul.f32 %v5979, %v4796
      %v5984 = vmul.f32 %v5979, %v4797
      %v5985 = vmul.f32 %v5979, %v4798
      %v5986 = vmul.f32 %v5979, %v4799
      %v5987 = vmul.f32 %v5979, %v4800
      %v5988 = vmul.f32 %v5979, %v4801
      %5998 = vrot.lane.b32.xlu0 %v5980, 109
      %v5999 = vpop.permute.xlu0 %5998
      %6000 = vrot.lane.b32.xlu0 %v5981, 109
      %v6001 = vpop.permute.xlu0 %6000
      %6002 = vrot.lane.b32.xlu0 %v5982, 109
      %v6003 = vpop.permute.xlu0 %6002
      %6004 = vrot.lane.b32.xlu0 %v5983, 109
      %v6005 = vpop.permute.xlu0 %6004
      %6006 = vrot.lane.b32.xlu0 %v5984, 109
      %v6007 = vpop.permute.xlu0 %6006
      %6008 = vrot.lane.b32.xlu0 %v5985, 109
      %v6009 = vpop.permute.xlu0 %6008
      %6010 = vrot.lane.b32.xlu0 %v5986, 109
      %v6011 = vpop.permute.xlu0 %6010
      %6012 = vrot.lane.b32.xlu0 %v5987, 109
      %v6013 = vpop.permute.xlu0 %6012
      %6014 = vrot.lane.b32.xlu0 %v5988, 109
      %v6015 = vpop.permute.xlu0 %6014
      %vm6016 = vcmask 891904
      %v6017 = vsel %vm6016, %v5999, %v6001
      %v6018 = vsel %vm6016, %v6001, %v6003
      %v6019 = vsel %vm6016, %v6003, %v6005
      %v6020 = vsel %vm6016, %v6005, %v6007
      %v6021 = vsel %vm6016, %v6007, %v6009
      %v6022 = vsel %vm6016, %v6009, %v6011
      %v6023 = vsel %vm6016, %v6011, %v6013
      %v6024 = vsel %vm6016, %v6013, %v6015
      %v6034 = vadd.f32 %v5969, %v5999
      %v6035 = vadd.f32 %v5970, %v6017
      %v6036 = vadd.f32 %v5971, %v6018
      %v6037 = vadd.f32 %v5972, %v6019
      %v6038 = vadd.f32 %v5973, %v6020
      %v6039 = vadd.f32 %v5974, %v6021
      %v6040 = vadd.f32 %v5975, %v6022
      %v6041 = vadd.f32 %v5976, %v6023
      %v6042 = vadd.f32 %v5977, %v6024
      %s6043 = sld [smem:[#allocation3 + $0x14]]
      %v6044 = vstv %s6043
      %v6045 = vmul.f32 %v6044, %v4793
      %v6046 = vmul.f32 %v6044, %v4794
      %v6047 = vmul.f32 %v6044, %v4795
      %v6048 = vmul.f32 %v6044, %v4796
      %v6049 = vmul.f32 %v6044, %v4797
      %v6050 = vmul.f32 %v6044, %v4798
      %v6051 = vmul.f32 %v6044, %v4799
      %v6052 = vmul.f32 %v6044, %v4800
      %v6053 = vmul.f32 %v6044, %v4801
      %6063 = vrot.lane.b32.xlu0 %v6045, 108
      %v6064 = vpop.permute.xlu0 %6063
      %6065 = vrot.lane.b32.xlu0 %v6046, 108
      %v6066 = vpop.permute.xlu0 %6065
      %6067 = vrot.lane.b32.xlu0 %v6047, 108
      %v6068 = vpop.permute.xlu0 %6067
      %6069 = vrot.lane.b32.xlu0 %v6048, 108
      %v6070 = vpop.permute.xlu0 %6069
      %6071 = vrot.lane.b32.xlu0 %v6049, 108
      %v6072 = vpop.permute.xlu0 %6071
      %6073 = vrot.lane.b32.xlu0 %v6050, 108
      %v6074 = vpop.permute.xlu0 %6073
      %6075 = vrot.lane.b32.xlu0 %v6051, 108
      %v6076 = vpop.permute.xlu0 %6075
      %6077 = vrot.lane.b32.xlu0 %v6052, 108
      %v6078 = vpop.permute.xlu0 %6077
      %6079 = vrot.lane.b32.xlu0 %v6053, 108
      %v6080 = vpop.permute.xlu0 %6079
      %vm6081 = vcmask 883712
      %v6082 = vsel %vm6081, %v6064, %v6066
      %v6083 = vsel %vm6081, %v6066, %v6068
      %v6084 = vsel %vm6081, %v6068, %v6070
      %v6085 = vsel %vm6081, %v6070, %v6072
      %v6086 = vsel %vm6081, %v6072, %v6074
      %v6087 = vsel %vm6081, %v6074, %v6076
      %v6088 = vsel %vm6081, %v6076, %v6078
      %v6089 = vsel %vm6081, %v6078, %v6080
      %v6099 = vadd.f32 %v6034, %v6064
      %v6100 = vadd.f32 %v6035, %v6082
      %v6101 = vadd.f32 %v6036, %v6083
      %v6102 = vadd.f32 %v6037, %v6084
      %v6103 = vadd.f32 %v6038, %v6085
      %v6104 = vadd.f32 %v6039, %v6086
      %v6105 = vadd.f32 %v6040, %v6087
      %v6106 = vadd.f32 %v6041, %v6088
      %v6107 = vadd.f32 %v6042, %v6089
      %v6117 = vrot.slane %v6100, 7
      %v6118 = vrot.slane %v6101, 6
      %v6119 = vrot.slane %v6102, 5
      %v6120 = vrot.slane %v6103, 4
      %v6121 = vrot.slane %v6104, 3
      %v6122 = vrot.slane %v6105, 2
      %v6123 = vrot.slane %v6106, 1
      %v6124 = vsel %vm4727, %v6099, %v6117
      %v6125 = vsel %vm4729, %v6118, %v6119
      %v6126 = vsel %vm4731, %v6124, %v6125
      %v6127 = vsel %vm4733, %v6120, %v6121
      %v6128 = vsel %vm4735, %v6122, %v6123
      %v6129 = vsel %vm4737, %v6127, %v6128
      %v6130 = vsel %vm4739, %v6126, %v6129
      %6131 = vrot.lane.b32.xlu0 %v6130, 10
      %v6132 = vpop.permute.xlu0 %6131
      %6133 = vrot.lane.b32.xlu0 %v6107, 10
      %v6134 = vpop.permute.xlu0 %6133
      %v6135 = vrot.slane %v6132, 1
      %v6136 = vrot.slane %v6134, 1
      %vm6137 = vcmask 1046528
      %v6138 = vsel %vm6137, %v6135, %v6136
      %vm6139 = vcmask 80896
      %v6140 = vsel %vm6139, %v6132, %v6138
      %6142 = vst [vmem:[%s6 + $0x1] sm:$0xff] %v6140
    $region37: #{my_lin_lin_tanh_sinc.1} parent=1 // pred_fallthru
      _
    // Predicated region
    $region38: #{my_lin_lin_tanh_sinc.1} parent=1 // pred_check
      _
    $region39: #{my_lin_lin_tanh_sinc.1} parent=1 // pred_check_branch
      %6144 = sbr.rel (0) target = $region41
    $region40: #{my_lin_lin_tanh_sinc.1} parent=1 // pred_region
      _
    $region41: #{my_lin_lin_tanh_sinc.1} parent=1 // pred_fallthru
      _
    // Predicated region
    $region42: #{my_lin_lin_tanh_sinc.1} parent=1 // pred_check
      _
    $region43: #{my_lin_lin_tanh_sinc.1} parent=1 // pred_check_branch
      %6146 = sbr.rel (0) target = $region45
    $region44: #{my_lin_lin_tanh_sinc.1} parent=1 // pred_region
      _
    $region45: #{my_lin_lin_tanh_sinc.1} parent=1 // pred_fallthru
      _
    %6147 = vsyncpa [#allocation4], 1

</llo_original>
